<compile_context>
chip_gen: v5e
topology: v5e:2x2
jax: 0.10.0
libtpu: 0.0.40
codegen_flags: <defaults>
</compile_context>

<pallas_src>
import functools
import math

import jax
import jax.numpy as jnp
from jax import lax
from jax.experimental import pallas as pl
from jax.experimental.pallas import tpu as pltpu


# ----------------------------------------------------------------------------
# Kernel 1: fused low-resolution "center" stage (one grid step per batch elem)
# ----------------------------------------------------------------------------

def _center_stage_kernel(g2_ref, g1_ref, x_ref,
                         w0_ref, s0_ref, b0_ref,
                         w1_ref, s1_ref, b1_ref,
                         xc_ref, avg_ref, *, oc, norm):
    f32 = jnp.float32
    # Fused conv_cat + conv_center[0] over the (virtual) channel concat
    # [guide2_down, guide1_down, x]; weights split per input, no concat in HBM.
    y = (jnp.dot(w0_ref[0], g2_ref[0], preferred_element_type=f32)
         + jnp.dot(w0_ref[1], g1_ref[0], preferred_element_type=f32)
         + jnp.dot(w0_ref[2], x_ref[0], preferred_element_type=f32))
    y = jnp.maximum(y * s0_ref[...] + b0_ref[...], 0.0)          # (oc+cc, HW)
    f_cat = y[:oc]                                                # (oc, HW)
    t = y[oc:]                                                    # (cc, HW)
    # conv_center[1] (BN, no ReLU)
    f_center = (jnp.dot(w1_ref[...], t, preferred_element_type=f32)
                * s1_ref[...] + b1_ref[...])                      # (cc, HW)
    # Softmax over the spatial (lane) axis == torch Softmax(dim=2); exact recip.
    m = jnp.max(f_center, axis=-1, keepdims=True)
    e = jnp.exp(f_center - m)
    p = e / jnp.sum(e, axis=-1, keepdims=True)
    # x_center = f_cat @ p^T  (contraction over trailing HW axis of both), with
    # norm = cc**-0.5 folded in once per batch; stored bf16 for the tail matmul.
    xc = lax.dot_general(f_cat, p, (((1,), (1,)), ((), ())),
                         preferred_element_type=f32)
    xc_ref[0] = (xc * norm).astype(xc_ref.dtype)                  # (oc, cc)
    # Adaptive avg pool to 1x1 over spatial
    avg_ref[0] = jnp.mean(f_cat, axis=-1, keepdims=True)          # (oc, 1)


def center_stage(g2_cm, g1_cm, x_cm, w0, s0, b0, w1, s1, b1,
                 oc, cc, norm, vmem_limit):
    """Inputs channel-major (N, C, HW).  Returns x_center (N, oc, cc) bf16
       (norm folded) and f_cat_avg (N, oc, 1) f32."""
    n, C, HW = x_cm.shape
    kernel = functools.partial(_center_stage_kernel, oc=oc, norm=float(norm))

    def bcast(arr):
        zeros = (0,) * arr.ndim
        return pl.BlockSpec(arr.shape, lambda *_: zeros)

    flops = 2 * n * HW * (3 * C * (oc + cc) + cc * cc + oc * cc)
    bytes_acc = (4 * n * (3 * C * HW + oc)
                 + 2 * n * oc * cc
                 + 4 * (3 * C * (oc + cc) + cc * cc + 4 * (oc + cc) + 2 * cc))
    cost = pl.CostEstimate(flops=flops, transcendentals=n * cc * HW,
                           bytes_accessed=bytes_acc)

    return pl.pallas_call(
        kernel,
        out_shape=(jax.ShapeDtypeStruct((n, oc, cc), jnp.bfloat16),
                   jax.ShapeDtypeStruct((n, oc, 1), jnp.float32)),
        grid=(n,),
        in_specs=[
            pl.BlockSpec((1, C, HW), lambda b: (b, 0, 0)),
            pl.BlockSpec((1, C, HW), lambda b: (b, 0, 0)),
            pl.BlockSpec((1, C, HW), lambda b: (b, 0, 0)),
            bcast(w0), bcast(s0), bcast(b0),
            bcast(w1), bcast(s1), bcast(b1),
        ],
        out_specs=(pl.BlockSpec((1, oc, cc), lambda b: (b, 0, 0)),
                   pl.BlockSpec((1, oc, 1), lambda b: (b, 0, 0))),
        compiler_params=pltpu.CompilerParams(
            dimension_semantics=("parallel",),
            vmem_limit_bytes=vmem_limit),
        cost_estimate=cost,
    )(g2_cm, g1_cm, x_cm, w0, s0, b0, w1, s1, b1)


# ----------------------------------------------------------------------------
# Kernel 2: fused high-resolution tail, tiled over the h2*w2 (lane) axis
# ----------------------------------------------------------------------------

def _tail_kernel(g2_ref, xu1_ref, xu0_ref, xc_ref, avg_ref,
                 wa0_ref, sa0_ref, ba0_ref,
                 w10_ref, s10_ref, b10_ref,
                 w11_ref, s11_ref, b11_ref,
                 wupx_ref, wupg_ref, sup_ref, bup_ref,
                 out_d_ref, out_l_ref, *, oc):
    f32 = jnp.float32
    bf16 = jnp.bfloat16
    # Fused conv_affinity0 drivable+lane (shared input -> 2*oc rows), split-weight
    # partial dots over the virtual concat [guide2, x_up1, x_up0].
    g = (jnp.dot(wa0_ref[0], g2_ref[0], preferred_element_type=f32)
         + jnp.dot(wa0_ref[1], xu1_ref[0], preferred_element_type=f32)
         + jnp.dot(wa0_ref[2], xu0_ref[0], preferred_element_type=f32))
    g = jnp.maximum(g * sa0_ref[...] + ba0_ref[...], 0.0)        # (2*oc, TP) f32
    avg = avg_ref[0]                                              # (oc, 1)  f32
    xc = xc_ref[0]                                                # (oc, cc) bf16 (norm folded)

    def branch(g_b, i, out_ref):
        # + broadcast value_avg, then conv_affinity1 chain (all in VMEM/regs)
        gv = (g_b + avg).astype(bf16)                             # (oc, TP)
        t = jnp.dot(w10_ref[i], gv, preferred_element_type=f32)
        t = jnp.maximum(t * s10_ref[i] + b10_ref[i], 0.0).astype(bf16)
        fa = jnp.dot(w11_ref[i], t, preferred_element_type=f32)
        fa = jnp.maximum(fa * s11_ref[i] + b11_ref[i], 0.0).astype(bf16)   # (cc, TP)
        # x_up = (norm * x_center) @ f_affinity  -> (oc, TP)
        x_up = jnp.dot(xc, fa, preferred_element_type=f32)
        # conv_up over the virtual concat [x_up, g_conv]
        o = (jnp.dot(wupx_ref[i], x_up.astype(bf16), preferred_element_type=f32)
             + jnp.dot(wupg_ref[i], g_b.astype(bf16), preferred_element_type=f32))
        out_ref[0] = jnp.maximum(o * sup_ref[i] + bup_ref[i], 0.0)  # lane-dense

    branch(g[:oc], 0, out_d_ref)   # sublane-aligned split (oc is a multiple of 8)
    branch(g[oc:], 1, out_l_ref)


def tail_stage(g2_cm, xu1_cm, xu0_cm, x_center, f_cat_avg, packed,
               oc, cc, tile, vmem_limit):
    n, C, HW2p = g2_cm.shape
    nt = HW2p // tile
    wa0, sa0, ba0 = packed['aff0']
    w10, s10, b10 = packed['aff1_0']
    w11, s11, b11 = packed['aff1_1']
    wupx, wupg, sup, bup = packed['up']

    kernel = functools.partial(_tail_kernel, oc=oc)
    act_spec = pl.BlockSpec((1, C, tile), lambda b, t: (b, 0, t))
    out_spec = pl.BlockSpec((1, oc, tile), lambda b, t: (b, 0, t))

    def bcast(arr):
        zeros = (0,) * arr.ndim
        return pl.BlockSpec(arr.shape, lambda *_: zeros)

    flops = 2 * n * HW2p * (3 * C * 2 * oc
                            + 2 * (cc * oc + cc * cc + oc * cc + 2 * oc * oc))
    bytes_acc = (n * (3 * C * HW2p * 2 + 2 * oc * HW2p * 4 + oc * cc * 2 + oc * 4)
                 + 2 * (3 * C * 2 * oc + 2 * (cc * oc + cc * cc + 2 * oc * oc)))
    cost = pl.CostEstimate(flops=flops, transcendentals=0,
                           bytes_accessed=bytes_acc)

    return pl.pallas_call(
        kernel,
        out_shape=(jax.ShapeDtypeStruct((n, oc, HW2p), jnp.float32),
                   jax.ShapeDtypeStruct((n, oc, HW2p), jnp.float32)),
        grid=(n, nt),
        in_specs=[
            act_spec, act_spec, act_spec,
            pl.BlockSpec((1, oc, cc), lambda b, t: (b, 0, 0)),
            pl.BlockSpec((1, oc, 1), lambda b, t: (b, 0, 0)),
            bcast(wa0), bcast(sa0), bcast(ba0),
            bcast(w10), bcast(s10), bcast(b10),
            bcast(w11), bcast(s11), bcast(b11),
            bcast(wupx), bcast(wupg), bcast(sup), bcast(bup),
        ],
        out_specs=(out_spec, out_spec),
        compiler_params=pltpu.CompilerParams(
            dimension_semantics=("parallel", "parallel"),
            vmem_limit_bytes=vmem_limit),
        cost_estimate=cost,
    )(g2_cm, xu1_cm, xu0_cm, x_center, f_cat_avg,
      wa0, sa0, ba0, w10, s10, b10, w11, s11, b11, wupx, wupg, sup, bup)


# ----------------------------------------------------------------------------
# Per-generation sizing helpers
# ----------------------------------------------------------------------------

def _vmem_capacity_bytes():
    try:
        return int(pltpu.get_tpu_info().vmem_capacity_bytes)
    except Exception:
        return 64 << 20      # conservative (v7x-sized) fallback


def _pick_tile(hw_padded, target):
    """Largest multiple of 128 <= target that divides hw_padded.
       hw_padded is already a multiple of 128, so 128 always works."""
    t = min(target, hw_padded)
    t -= t % 128
    t = max(t, 128)
    while hw_padded % t:
        t -= 128
    return t


# ----------------------------------------------------------------------------
# JAX glue: bilinear resize (align_corners=True), parameter packing
# ----------------------------------------------------------------------------
# TODO(synk): bilinear align_corners resize and zero-padding of the pixel axis
#             stay in XLA (cheap einsum/pad), not Pallas.

def _interp_mat(out_size, in_size):
    if out_size == 1:
        return jnp.zeros((1, in_size), jnp.float32).at[0, 0].set(1.0)
    coords = jnp.arange(out_size, dtype=jnp.float32) * (in_size - 1) / (out_size - 1)
    lo = jnp.clip(jnp.floor(coords).astype(jnp.int32), 0, in_size - 1)
    hi = jnp.clip(lo + 1, 0, in_size - 1)
    frac = coords - lo.astype(jnp.float32)
    return (jax.nn.one_hot(lo, in_size, dtype=jnp.float32) * (1.0 - frac)[:, None]
            + jax.nn.one_hot(hi, in_size, dtype=jnp.float32) * frac[:, None])


def bilinear_resize(x_nchw, out_h, out_w):
    # matches F.interpolate(mode='bilinear', align_corners=True)
    Mh = _interp_mat(out_h, x_nchw.shape[2])
    Mw = _interp_mat(out_w, x_nchw.shape[3])
    return jnp.einsum('nchw,Hh,Ww->ncHW', x_nchw, Mh, Mw)


def make_conv_bn(key, cin, cout):
    """Conv2d(cin, cout, 1, bias=False) + BatchNorm(cout) (eval mode),
       folded to (W[cout,cin], scale[cout], bias[cout])."""
    k1, k2, k3, k4, k5 = jax.random.split(key, 5)
    w = jax.random.normal(k1, (cout, cin), jnp.float32) / math.sqrt(cin)
    gamma = jax.random.uniform(k2, (cout,), jnp.float32, 0.5, 1.5)
    beta = jax.random.normal(k3, (cout,), jnp.float32) * 0.1
    mean = jax.random.normal(k4, (cout,), jnp.float32) * 0.1
    var = jax.random.uniform(k5, (cout,), jnp.float32, 0.5, 1.5)
    eps = 1e-5
    s = gamma / jnp.sqrt(var + eps)
    b = beta - mean * s
    return w, s, b


def init_params(key, in_channels, center_channels, out_channels):
    ks = jax.random.split(key, 11)
    C3 = in_channels * 3
    return {
        'conv_cat':     make_conv_bn(ks[0], C3, out_channels),
        'conv_center0': make_conv_bn(ks[1], C3, center_channels),
        'conv_center1': make_conv_bn(ks[2], center_channels, center_channels),
        'aff0_d':       make_conv_bn(ks[3], C3, out_channels),
        'aff0_l':       make_conv_bn(ks[4], C3, out_channels),
        'aff1_d0':      make_conv_bn(ks[5], out_channels, center_channels),
        'aff1_d1':      make_conv_bn(ks[6], center_channels, center_channels),
        'aff1_l0':      make_conv_bn(ks[7], out_channels, center_channels),
        'aff1_l1':      make_conv_bn(ks[8], center_channels, center_channels),
        'up_d':         make_conv_bn(ks[9], 2 * out_channels, out_channels),
        'up_l':         make_conv_bn(ks[10], 2 * out_channels, out_channels),
    }


def pack_params(p, in_channels, center_channels, out_channels):
    """Fuse/stack per-conv params into the channel-major kernel layout."""
    C, cc, oc = in_channels, center_channels, out_channels
    bf16 = jnp.bfloat16

    def split3(w):            # (cout, 3C) -> (3, cout, C), concat order preserved
        return jnp.stack([w[:, 0:C], w[:, C:2 * C], w[:, 2 * C:3 * C]], axis=0)

    def col(v):               # (cout,) -> (cout, 1) column for lane broadcast
        return v.reshape(-1, 1)

    st = lambda a, b: jnp.stack([a, b], axis=0)

    # conv_cat + conv_center[0] fused along Cout (shared input x_cat), f32.
    w_cat, s_cat, b_cat = p['conv_cat']
    w_c0, s_c0, b_c0 = p['conv_center0']
    w0 = split3(jnp.concatenate([w_cat, w_c0], axis=0))            # (3, oc+cc, C)
    s0 = col(jnp.concatenate([s_cat, s_c0]))
    b0 = col(jnp.concatenate([b_cat, b_c0]))

    w_c1, s_c1, b_c1 = p['conv_center1']                           # (cc, cc)

    # conv_affinity0 drivable+lane fused along Cout (shared input guide_cat), bf16.
    w_a0d, s_a0d, b_a0d = p['aff0_d']
    w_a0l, s_a0l, b_a0l = p['aff0_l']
    wa0 = split3(jnp.concatenate([w_a0d, w_a0l], axis=0)).astype(bf16)  # (3, 2oc, C)
    sa0 = col(jnp.concatenate([s_a0d, s_a0l]))
    ba0 = col(jnp.concatenate([b_a0d, b_a0l]))

    w10 = st(p['aff1_d0'][0], p['aff1_l0'][0]).astype(bf16)        # (2, cc, oc)
    s10 = st(col(p['aff1_d0'][1]), col(p['aff1_l0'][1]))           # (2, cc, 1)
    b10 = st(col(p['aff1_d0'][2]), col(p['aff1_l0'][2]))
    w11 = st(p['aff1_d1'][0], p['aff1_l1'][0]).astype(bf16)        # (2, cc, cc)
    s11 = st(col(p['aff1_d1'][1]), col(p['aff1_l1'][1]))
    b11 = st(col(p['aff1_d1'][2]), col(p['aff1_l1'][2]))

    # conv_up: Cin split into the [x_up, g_conv] halves of the concat, bf16.
    wupx = st(p['up_d'][0][:, :oc], p['up_l'][0][:, :oc]).astype(bf16)   # (2, oc, oc)
    wupg = st(p['up_d'][0][:, oc:], p['up_l'][0][:, oc:]).astype(bf16)   # (2, oc, oc)
    sup = st(col(p['up_d'][1]), col(p['up_l'][1]))                       # (2, oc, 1)
    bup = st(col(p['up_d'][2]), col(p['up_l'][2]))

    return {
        'cat_cen0': (w0, s0, b0),
        'cen1': (w_c1, col(s_c1), col(b_c1)),
        'aff0': (wa0, sa0, ba0),
        'aff1_0': (w10, s10, b10),
        'aff1_1': (w11, s11, b11),
        'up': (wupx, wupg, sup, bup),
    }


def multi_hgd_forward(packed, x, guide1, guide2, center_channels, out_channels):
    n, c, h, w = x.shape
    h2, w2 = guide2.shape[2], guide2.shape[3]
    HW2 = h2 * w2
    oc, cc = out_channels, center_channels
    bf16 = jnp.bfloat16

    cap = _vmem_capacity_bytes()
    vmem_limit = int(min(cap * 3 // 4, 96 << 20))
    tile_target = 2048 if cap >= (100 << 20) else 512   # v5e/v6e vs v7x

    # ---- low-res center stage (channel-major = NCHW reshaped, f32) ----
    g1_down = bilinear_resize(guide1, h, w)
    g2_down = bilinear_resize(guide2, h, w)
    x_cm = x.reshape(n, c, h * w)
    g1_cm = g1_down.reshape(n, c, h * w)
    g2_cm = g2_down.reshape(n, c, h * w)

    w0, s0, b0 = packed['cat_cen0']
    w1, s1, b1 = packed['cen1']
    norm_aff = center_channels ** (-0.5)
    x_center, f_cat_avg = center_stage(
        g2_cm, g1_cm, x_cm, w0, s0, b0, w1, s1, b1, oc, cc, norm_aff, vmem_limit)

    # ---- high-res feeds: channel-major, written to HBM once as bf16 ----
    x_up0 = bilinear_resize(x, h2, w2).astype(bf16).reshape(n, c, HW2)
    x_up1 = bilinear_resize(guide1, h2, w2).astype(bf16).reshape(n, c, HW2)
    g2_hi = guide2.astype(bf16).reshape(n, c, HW2)

    # pad the pixel axis to a multiple of 128 so a lane-aligned tile divisor
    # always exists (padded columns are discarded after the kernel)
    HW2p = ((HW2 + 127) // 128) * 128
    if HW2p != HW2:
        pad = ((0, 0), (0, 0), (0, HW2p - HW2))
        x_up0 = jnp.pad(x_up0, pad)
        x_up1 = jnp.pad(x_up1, pad)
        g2_hi = jnp.pad(g2_hi, pad)
    tile = _pick_tile(HW2p, tile_target)

    out_d_cm, out_l_cm = tail_stage(g2_hi, x_up1, x_up0, x_center, f_cat_avg,
                                    packed, oc, cc, tile, vmem_limit)

    # channel-major (N, oc, HW2) -> NCHW is a free reshape (no transpose)
    out_d = out_d_cm[:, :, :HW2].reshape(n, oc, h2, w2)
    out_l = out_l_cm[:, :, :HW2].reshape(n, oc, h2, w2)
    return out_d, out_l


# ----------------------------------------------------------------------------
# main
# ----------------------------------------------------------------------------

if __name__ == "__main__":
    IN_CHANNELS = 4
    CENTER_CHANNELS = 16
    OUT_CHANNELS = 8
    N = 2
    H = W = 4        # x spatial
    H1 = W1 = 8      # guide1 spatial
    H2 = W2 = 16     # guide2 spatial

    root = jax.random.PRNGKey(0)
    k_params, k_x, k_g1, k_g2 = jax.random.split(root, 4)

    raw_params = init_params(k_params, IN_CHANNELS, CENTER_CHANNELS, OUT_CHANNELS)
    packed = pack_params(raw_params, IN_CHANNELS, CENTER_CHANNELS, OUT_CHANNELS)

    x = jax.random.normal(k_x, (N, IN_CHANNELS, H, W), jnp.float32)
    guide1 = jax.random.normal(k_g1, (N, IN_CHANNELS, H1, W1), jnp.float32)
    guide2 = jax.random.normal(k_g2, (N, IN_CHANNELS, H2, W2), jnp.float32)

    fwd = jax.jit(functools.partial(multi_hgd_forward,
                                    center_channels=CENTER_CHANNELS,
                                    out_channels=OUT_CHANNELS))
    out_drivable, out_lane = fwd(packed, x, guide1, guide2)
    jax.block_until_ready((out_drivable, out_lane))

    assert out_drivable.shape == (N, OUT_CHANNELS, H2, W2)
    assert out_lane.shape == (N, OUT_CHANNELS, H2, W2)
    assert bool(jnp.all(jnp.isfinite(out_drivable)))
    assert bool(jnp.all(jnp.isfinite(out_lane)))
    print("KERNEL_OK")
</pallas_src>

<mosaic_0001>
module attributes {stable_mosaic.version = 11 : i64} {
  func.func @_center_stage_kernel(%arg0: i32, %arg1: memref<1x4x16xf32, #tpu.memory_space<vmem>>, %arg2: memref<1x4x16xf32, #tpu.memory_space<vmem>>, %arg3: memref<1x4x16xf32, #tpu.memory_space<vmem>>, %arg4: memref<3x24x4xf32, #tpu.memory_space<vmem>>, %arg5: memref<24x1xf32, #tpu.memory_space<vmem>>, %arg6: memref<24x1xf32, #tpu.memory_space<vmem>>, %arg7: memref<16x16xf32, #tpu.memory_space<vmem>>, %arg8: memref<16x1xf32, #tpu.memory_space<vmem>>, %arg9: memref<16x1xf32, #tpu.memory_space<vmem>>, %arg10: memref<1x8x16xbf16, #tpu.memory_space<vmem>>, %arg11: memref<1x8x1xf32, #tpu.memory_space<vmem>>) attributes {dimension_semantics = [#tpu.dimension_semantics<parallel>], iteration_bounds = array<i64: 2>, scalar_prefetch = 0 : i64, scratch_operands = 0 : i64, tpu.core_type = #tpu.core_type<tc>, window_params = [{transform_indices = @transform_0, window_bounds = array<i64: 1, 4, 16>}, {transform_indices = @transform_1, window_bounds = array<i64: 1, 4, 16>}, {transform_indices = @transform_2, window_bounds = array<i64: 1, 4, 16>}, {pipeline_mode = #tpu.pipeline_mode<synchronous>, transform_indices = @transform_3, window_bounds = array<i64: 3, 24, 4>}, {pipeline_mode = #tpu.pipeline_mode<synchronous>, transform_indices = @transform_4, window_bounds = array<i64: 24, 1>}, {pipeline_mode = #tpu.pipeline_mode<synchronous>, transform_indices = @transform_5, window_bounds = array<i64: 24, 1>}, {pipeline_mode = #tpu.pipeline_mode<synchronous>, transform_indices = @transform_6, window_bounds = array<i64: 16, 16>}, {pipeline_mode = #tpu.pipeline_mode<synchronous>, transform_indices = @transform_7, window_bounds = array<i64: 16, 1>}, {pipeline_mode = #tpu.pipeline_mode<synchronous>, transform_indices = @transform_8, window_bounds = array<i64: 16, 1>}, {transform_indices = @transform_9, window_bounds = array<i64: 1, 8, 16>}, {transform_indices = @transform_10, window_bounds = array<i64: 1, 8, 1>}]} {
    %c0 = arith.constant 0 : index
    %c0_0 = arith.constant 0 : index
    %c0_1 = arith.constant 0 : index
    %0 = vector.load %arg4[%c0, %c0_0, %c0_1] : memref<3x24x4xf32, #tpu.memory_space<vmem>>, vector<1x24x4xf32>
    %1 = vector.shape_cast %0 : vector<1x24x4xf32> to vector<24x4xf32>
    %c0_2 = arith.constant 0 : index
    %c0_3 = arith.constant 0 : index
    %c0_4 = arith.constant 0 : index
    %2 = vector.load %arg1[%c0_2, %c0_3, %c0_4] : memref<1x4x16xf32, #tpu.memory_space<vmem>>, vector<1x4x16xf32>
    %3 = vector.shape_cast %2 : vector<1x4x16xf32> to vector<4x16xf32>
    %cst = arith.constant dense<0.000000e+00> : vector<24x16xf32>
    %4 = tpu.matmul %1, %3, %cst {dimension_numbers = #tpu.dot_dimension_numbers<[1], [0], [0], [1], [0, 0, 1, 1], [], []>} : vector<24x4xf32>, vector<4x16xf32>, vector<24x16xf32> -> vector<24x16xf32>
    %c1 = arith.constant 1 : index
    %c0_5 = arith.constant 0 : index
    %c0_6 = arith.constant 0 : index
    %5 = vector.load %arg4[%c1, %c0_5, %c0_6] : memref<3x24x4xf32, #tpu.memory_space<vmem>>, vector<1x24x4xf32>
    %6 = vector.shape_cast %5 : vector<1x24x4xf32> to vector<24x4xf32>
    %c0_7 = arith.constant 0 : index
    %c0_8 = arith.constant 0 : index
    %c0_9 = arith.constant 0 : index
    %7 = vector.load %arg2[%c0_7, %c0_8, %c0_9] : memref<1x4x16xf32, #tpu.memory_space<vmem>>, vector<1x4x16xf32>
    %8 = vector.shape_cast %7 : vector<1x4x16xf32> to vector<4x16xf32>
    %cst_10 = arith.constant dense<0.000000e+00> : vector<24x16xf32>
    %9 = tpu.matmul %6, %8, %cst_10 {dimension_numbers = #tpu.dot_dimension_numbers<[1], [0], [0], [1], [0, 0, 1, 1], [], []>} : vector<24x4xf32>, vector<4x16xf32>, vector<24x16xf32> -> vector<24x16xf32>
    %10 = arith.addf %4, %9 : vector<24x16xf32>
    %c2 = arith.constant 2 : index
    %c0_11 = arith.constant 0 : index
    %c0_12 = arith.constant 0 : index
    %11 = vector.load %arg4[%c2, %c0_11, %c0_12] : memref<3x24x4xf32, #tpu.memory_space<vmem>>, vector<1x24x4xf32>
    %12 = vector.shape_cast %11 : vector<1x24x4xf32> to vector<24x4xf32>
    %c0_13 = arith.constant 0 : index
    %c0_14 = arith.constant 0 : index
    %c0_15 = arith.constant 0 : index
    %13 = vector.load %arg3[%c0_13, %c0_14, %c0_15] : memref<1x4x16xf32, #tpu.memory_space<vmem>>, vector<1x4x16xf32>
    %14 = vector.shape_cast %13 : vector<1x4x16xf32> to vector<4x16xf32>
    %cst_16 = arith.constant dense<0.000000e+00> : vector<24x16xf32>
    %15 = tpu.matmul %12, %14, %cst_16 {dimension_numbers = #tpu.dot_dimension_numbers<[1], [0], [0], [1], [0, 0, 1, 1], [], []>} : vector<24x4xf32>, vector<4x16xf32>, vector<24x16xf32> -> vector<24x16xf32>
    %16 = arith.addf %10, %15 : vector<24x16xf32>
    %c0_17 = arith.constant 0 : index
    %c0_18 = arith.constant 0 : index
    %17 = vector.load %arg5[%c0_17, %c0_18] : memref<24x1xf32, #tpu.memory_space<vmem>>, vector<24x1xf32>
    %18 = vector.broadcast %17 : vector<24x1xf32> to vector<24x16xf32>
    %19 = arith.mulf %16, %18 : vector<24x16xf32>
    %c0_19 = arith.constant 0 : index
    %c0_20 = arith.constant 0 : index
    %20 = vector.load %arg6[%c0_19, %c0_20] : memref<24x1xf32, #tpu.memory_space<vmem>>, vector<24x1xf32>
    %21 = vector.broadcast %20 : vector<24x1xf32> to vector<24x16xf32>
    %22 = arith.addf %19, %21 : vector<24x16xf32>
    %cst_21 = arith.constant 0.000000e+00 : f32
    %23 = vector.broadcast %cst_21 : f32 to vector<24x16xf32>
    %24 = arith.maximumf %22, %23 : vector<24x16xf32>
    %25 = vector.extract_strided_slice %24 {offsets = [0, 0], sizes = [8, 16], strides = [1, 1]} : vector<24x16xf32> to vector<8x16xf32>
    %26 = vector.extract_strided_slice %24 {offsets = [8, 0], sizes = [16, 16], strides = [1, 1]} : vector<24x16xf32> to vector<16x16xf32>
    %c0_22 = arith.constant 0 : index
    %c0_23 = arith.constant 0 : index
    %27 = vector.load %arg7[%c0_22, %c0_23] : memref<16x16xf32, #tpu.memory_space<vmem>>, vector<16x16xf32>
    %cst_24 = arith.constant dense<0.000000e+00> : vector<16x16xf32>
    %28 = tpu.matmul %27, %26, %cst_24 {dimension_numbers = #tpu.dot_dimension_numbers<[1], [0], [0], [1], [0, 0, 1, 1], [], []>} : vector<16x16xf32>, vector<16x16xf32>, vector<16x16xf32> -> vector<16x16xf32>
    %c0_25 = arith.constant 0 : index
    %c0_26 = arith.constant 0 : index
    %29 = vector.load %arg8[%c0_25, %c0_26] : memref<16x1xf32, #tpu.memory_space<vmem>>, vector<16x1xf32>
    %30 = vector.broadcast %29 : vector<16x1xf32> to vector<16x16xf32>
    %31 = arith.mulf %28, %30 : vector<16x16xf32>
    %c0_27 = arith.constant 0 : index
    %c0_28 = arith.constant 0 : index
    %32 = vector.load %arg9[%c0_27, %c0_28] : memref<16x1xf32, #tpu.memory_space<vmem>>, vector<16x1xf32>
    %33 = vector.broadcast %32 : vector<16x1xf32> to vector<16x16xf32>
    %34 = arith.addf %31, %33 : vector<16x16xf32>
    %cst_29 = arith.constant dense<0xFF800000> : vector<16xf32>
    %35 = vector.multi_reduction <maximumf>, %34, %cst_29 [1] : vector<16x16xf32> to vector<16xf32>
    %36 = vector.shape_cast %35 : vector<16xf32> to vector<16x1xf32>
    %37 = vector.broadcast %36 : vector<16x1xf32> to vector<16x16xf32>
    %38 = arith.subf %34, %37 : vector<16x16xf32>
    %39 = math.exp %38 : vector<16x16xf32>
    %cst_30 = arith.constant dense<0.000000e+00> : vector<16xf32>
    %40 = vector.multi_reduction <add>, %39, %cst_30 [1] : vector<16x16xf32> to vector<16xf32>
    %41 = vector.shape_cast %40 : vector<16xf32> to vector<16x1xf32>
    %42 = vector.broadcast %41 : vector<16x1xf32> to vector<16x16xf32>
    %43 = arith.divf %39, %42 : vector<16x16xf32>
    %cst_31 = arith.constant dense<0.000000e+00> : vector<8x16xf32>
    %44 = tpu.matmul %25, %43, %cst_31 {dimension_numbers = #tpu.dot_dimension_numbers<[1], [1], [0], [0], [0, 0, 1, 0], [], []>} : vector<8x16xf32>, vector<16x16xf32>, vector<8x16xf32> -> vector<8x16xf32>
    %cst_32 = arith.constant 2.500000e-01 : f32
    %45 = vector.broadcast %cst_32 : f32 to vector<8x16xf32>
    %46 = arith.mulf %44, %45 : vector<8x16xf32>
    %47 = arith.truncf %46 : vector<8x16xf32> to vector<8x16xbf16>
    %c0_33 = arith.constant 0 : index
    %c0_34 = arith.constant 0 : index
    %c0_35 = arith.constant 0 : index
    %48 = vector.load %arg10[%c0_33, %c0_34, %c0_35] : memref<1x8x16xbf16, #tpu.memory_space<vmem>>, vector<1x8x16xbf16>
    %49 = vector.shape_cast %48 : vector<1x8x16xbf16> to vector<8x16xbf16>
    %50 = vector.shape_cast %47 : vector<8x16xbf16> to vector<1x8x16xbf16>
    tpu.vector_store %arg10[%c0_33, %c0_34, %c0_35], %50 {strides = array<i32>} : memref<1x8x16xbf16, #tpu.memory_space<vmem>>, vector<1x8x16xbf16>,
    %cst_36 = arith.constant dense<0.000000e+00> : vector<8xf32>
    %51 = vector.multi_reduction <add>, %25, %cst_36 [1] : vector<8x16xf32> to vector<8xf32>
    %52 = vector.shape_cast %51 : vector<8xf32> to vector<8x1xf32>
    %cst_37 = arith.constant 1.600000e+01 : f32
    %53 = vector.broadcast %cst_37 : f32 to vector<8x1xf32>
    %54 = arith.divf %52, %53 : vector<8x1xf32>
    %c0_38 = arith.constant 0 : index
    %c0_39 = arith.constant 0 : index
    %c0_40 = arith.constant 0 : index
    %55 = vector.load %arg11[%c0_38, %c0_39, %c0_40] : memref<1x8x1xf32, #tpu.memory_space<vmem>>, vector<1x8x1xf32>
    %56 = vector.shape_cast %55 : vector<1x8x1xf32> to vector<8x1xf32>
    %57 = vector.shape_cast %54 : vector<8x1xf32> to vector<1x8x1xf32>
    tpu.vector_store %arg11[%c0_38, %c0_39, %c0_40], %57 {strides = array<i32>} : memref<1x8x1xf32, #tpu.memory_space<vmem>>, vector<1x8x1xf32>,
    return
  }
  func.func @transform_0(%arg0: i32) -> (i32, i32, i32) {
    %c0_i32 = arith.constant 0 : i32
    %c0_i32_0 = arith.constant 0 : i32
    %c0_i32_1 = arith.constant 0 : i32
    return %arg0, %c0_i32, %c0_i32_0 : i32, i32, i32
  }
  func.func @transform_1(%arg0: i32) -> (i32, i32, i32) {
    %c0_i32 = arith.constant 0 : i32
    %c0_i32_0 = arith.constant 0 : i32
    %c0_i32_1 = arith.constant 0 : i32
    return %arg0, %c0_i32, %c0_i32_0 : i32, i32, i32
  }
  func.func @transform_2(%arg0: i32) -> (i32, i32, i32) {
    %c0_i32 = arith.constant 0 : i32
    %c0_i32_0 = arith.constant 0 : i32
    %c0_i32_1 = arith.constant 0 : i32
    return %arg0, %c0_i32, %c0_i32_0 : i32, i32, i32
  }
  func.func @transform_3(%arg0: i32) -> (i32, i32, i32) {
    %c0_i32 = arith.constant 0 : i32
    %c0_i32_0 = arith.constant 0 : i32
    %c0_i32_1 = arith.constant 0 : i32
    %c0_i32_2 = arith.constant 0 : i32
    return %c0_i32, %c0_i32_0, %c0_i32_1 : i32, i32, i32
  }
  func.func @transform_4(%arg0: i32) -> (i32, i32) {
    %c0_i32 = arith.constant 0 : i32
    %c0_i32_0 = arith.constant 0 : i32
    %c0_i32_1 = arith.constant 0 : i32
    return %c0_i32, %c0_i32_0 : i32, i32
  }
  func.func @transform_5(%arg0: i32) -> (i32, i32) {
    %c0_i32 = arith.constant 0 : i32
    %c0_i32_0 = arith.constant 0 : i32
    %c0_i32_1 = arith.constant 0 : i32
    return %c0_i32, %c0_i32_0 : i32, i32
  }
  func.func @transform_6(%arg0: i32) -> (i32, i32) {
    %c0_i32 = arith.constant 0 : i32
    %c0_i32_0 = arith.constant 0 : i32
    %c0_i32_1 = arith.constant 0 : i32
    return %c0_i32, %c0_i32_0 : i32, i32
  }
  func.func @transform_7(%arg0: i32) -> (i32, i32) {
    %c0_i32 = arith.constant 0 : i32
    %c0_i32_0 = arith.constant 0 : i32
    %c0_i32_1 = arith.constant 0 : i32
    return %c0_i32, %c0_i32_0 : i32, i32
  }
  func.func @transform_8(%arg0: i32) -> (i32, i32) {
    %c0_i32 = arith.constant 0 : i32
    %c0_i32_0 = arith.constant 0 : i32
    %c0_i32_1 = arith.constant 0 : i32
    return %c0_i32, %c0_i32_0 : i32, i32
  }
  func.func @transform_9(%arg0: i32) -> (i32, i32, i32) {
    %c0_i32 = arith.constant 0 : i32
    %c0_i32_0 = arith.constant 0 : i32
    %c0_i32_1 = arith.constant 0 : i32
    return %arg0, %c0_i32, %c0_i32_0 : i32, i32, i32
  }
  func.func @transform_10(%arg0: i32) -> (i32, i32, i32) {
    %c0_i32 = arith.constant 0 : i32
    %c0_i32_0 = arith.constant 0 : i32
    %c0_i32_1 = arith.constant 0 : i32
    return %arg0, %c0_i32, %c0_i32_0 : i32, i32, i32
  }
}

module attributes {stable_mosaic.version = 11 : i64} {
  func.func @_tail_kernel(%arg0: i32, %arg1: i32, %arg2: memref<1x4x256xbf16, #tpu.memory_space<vmem>>, %arg3: memref<1x4x256xbf16, #tpu.memory_space<vmem>>, %arg4: memref<1x4x256xbf16, #tpu.memory_space<vmem>>, %arg5: memref<1x8x16xbf16, #tpu.memory_space<vmem>>, %arg6: memref<1x8x1xf32, #tpu.memory_space<vmem>>, %arg7: memref<3x16x4xbf16, #tpu.memory_space<vmem>>, %arg8: memref<16x1xf32, #tpu.memory_space<vmem>>, %arg9: memref<16x1xf32, #tpu.memory_space<vmem>>, %arg10: memref<2x16x8xbf16, #tpu.memory_space<vmem>>, %arg11: memref<2x16x1xf32, #tpu.memory_space<vmem>>, %arg12: memref<2x16x1xf32, #tpu.memory_space<vmem>>, %arg13: memref<2x16x16xbf16, #tpu.memory_space<vmem>>, %arg14: memref<2x16x1xf32, #tpu.memory_space<vmem>>, %arg15: memref<2x16x1xf32, #tpu.memory_space<vmem>>, %arg16: memref<2x8x8xbf16, #tpu.memory_space<vmem>>, %arg17: memref<2x8x8xbf16, #tpu.memory_space<vmem>>, %arg18: memref<2x8x1xf32, #tpu.memory_space<vmem>>, %arg19: memref<2x8x1xf32, #tpu.memory_space<vmem>>, %arg20: memref<1x8x256xf32, #tpu.memory_space<vmem>>, %arg21: memref<1x8x256xf32, #tpu.memory_space<vmem>>) attributes {dimension_semantics = [#tpu.dimension_semantics<parallel>, #tpu.dimension_semantics<parallel>], iteration_bounds = array<i64: 2, 1>, scalar_prefetch = 0 : i64, scratch_operands = 0 : i64, tpu.core_type = #tpu.core_type<tc>, window_params = [{transform_indices = @transform_0, window_bounds = array<i64: 1, 4, 256>}, {transform_indices = @transform_1, window_bounds = array<i64: 1, 4, 256>}, {transform_indices = @transform_2, window_bounds = array<i64: 1, 4, 256>}, {transform_indices = @transform_3, window_bounds = array<i64: 1, 8, 16>}, {transform_indices = @transform_4, window_bounds = array<i64: 1, 8, 1>}, {pipeline_mode = #tpu.pipeline_mode<synchronous>, transform_indices = @transform_5, window_bounds = array<i64: 3, 16, 4>}, {pipeline_mode = #tpu.pipeline_mode<synchronous>, transform_indices = @transform_6, window_bounds = array<i64: 16, 1>}, {pipeline_mode = #tpu.pipeline_mode<synchronous>, transform_indices = @transform_7, window_bounds = array<i64: 16, 1>}, {pipeline_mode = #tpu.pipeline_mode<synchronous>, transform_indices = @transform_8, window_bounds = array<i64: 2, 16, 8>}, {pipeline_mode = #tpu.pipeline_mode<synchronous>, transform_indices = @transform_9, window_bounds = array<i64: 2, 16, 1>}, {pipeline_mode = #tpu.pipeline_mode<synchronous>, transform_indices = @transform_10, window_bounds = array<i64: 2, 16, 1>}, {pipeline_mode = #tpu.pipeline_mode<synchronous>, transform_indices = @transform_11, window_bounds = array<i64: 2, 16, 16>}, {pipeline_mode = #tpu.pipeline_mode<synchronous>, transform_indices = @transform_12, window_bounds = array<i64: 2, 16, 1>}, {pipeline_mode = #tpu.pipeline_mode<synchronous>, transform_indices = @transform_13, window_bounds = array<i64: 2, 16, 1>}, {pipeline_mode = #tpu.pipeline_mode<synchronous>, transform_indices = @transform_14, window_bounds = array<i64: 2, 8, 8>}, {pipeline_mode = #tpu.pipeline_mode<synchronous>, transform_indices = @transform_15, window_bounds = array<i64: 2, 8, 8>}, {pipeline_mode = #tpu.pipeline_mode<synchronous>, transform_indices = @transform_16, window_bounds = array<i64: 2, 8, 1>}, {pipeline_mode = #tpu.pipeline_mode<synchronous>, transform_indices = @transform_17, window_bounds = array<i64: 2, 8, 1>}, {transform_indices = @transform_18, window_bounds = array<i64: 1, 8, 256>}, {transform_indices = @transform_19, window_bounds = array<i64: 1, 8, 256>}]} {
    %c0 = arith.constant 0 : index
    %c0_0 = arith.constant 0 : index
    %c0_1 = arith.constant 0 : index
    %0 = vector.load %arg7[%c0, %c0_0, %c0_1] : memref<3x16x4xbf16, #tpu.memory_space<vmem>>, vector<1x16x4xbf16>
    %1 = vector.shape_cast %0 : vector<1x16x4xbf16> to vector<16x4xbf16>
    %c0_2 = arith.constant 0 : index
    %c0_3 = arith.constant 0 : index
    %c0_4 = arith.constant 0 : index
    %2 = vector.load %arg2[%c0_2, %c0_3, %c0_4] : memref<1x4x256xbf16, #tpu.memory_space<vmem>>, vector<1x4x256xbf16>
    %3 = vector.shape_cast %2 : vector<1x4x256xbf16> to vector<4x256xbf16>
    %cst = arith.constant dense<0.000000e+00> : vector<16x256xf32>
    %4 = tpu.matmul %1, %3, %cst {dimension_numbers = #tpu.dot_dimension_numbers<[1], [0], [0], [1], [0, 0, 1, 1], [], []>} : vector<16x4xbf16>, vector<4x256xbf16>, vector<16x256xf32> -> vector<16x256xf32>
    %c1 = arith.constant 1 : index
    %c0_5 = arith.constant 0 : index
    %c0_6 = arith.constant 0 : index
    %5 = vector.load %arg7[%c1, %c0_5, %c0_6] : memref<3x16x4xbf16, #tpu.memory_space<vmem>>, vector<1x16x4xbf16>
    %6 = vector.shape_cast %5 : vector<1x16x4xbf16> to vector<16x4xbf16>
    %c0_7 = arith.constant 0 : index
    %c0_8 = arith.constant 0 : index
    %c0_9 = arith.constant 0 : index
    %7 = vector.load %arg3[%c0_7, %c0_8, %c0_9] : memref<1x4x256xbf16, #tpu.memory_space<vmem>>, vector<1x4x256xbf16>
    %8 = vector.shape_cast %7 : vector<1x4x256xbf16> to vector<4x256xbf16>
    %cst_10 = arith.constant dense<0.000000e+00> : vector<16x256xf32>
    %9 = tpu.matmul %6, %8, %cst_10 {dimension_numbers = #tpu.dot_dimension_numbers<[1], [0], [0], [1], [0, 0, 1, 1], [], []>} : vector<16x4xbf16>, vector<4x256xbf16>, vector<16x256xf32> -> vector<16x256xf32>
    %10 = arith.addf %4, %9 : vector<16x256xf32>
    %c2 = arith.constant 2 : index
    %c0_11 = arith.constant 0 : index
    %c0_12 = arith.constant 0 : index
    %11 = vector.load %arg7[%c2, %c0_11, %c0_12] : memref<3x16x4xbf16, #tpu.memory_space<vmem>>, vector<1x16x4xbf16>
    %12 = vector.shape_cast %11 : vector<1x16x4xbf16> to vector<16x4xbf16>
    %c0_13 = arith.constant 0 : index
    %c0_14 = arith.constant 0 : index
    %c0_15 = arith.constant 0 : index
    %13 = vector.load %arg4[%c0_13, %c0_14, %c0_15] : memref<1x4x256xbf16, #tpu.memory_space<vmem>>, vector<1x4x256xbf16>
    %14 = vector.shape_cast %13 : vector<1x4x256xbf16> to vector<4x256xbf16>
    %cst_16 = arith.constant dense<0.000000e+00> : vector<16x256xf32>
    %15 = tpu.matmul %12, %14, %cst_16 {dimension_numbers = #tpu.dot_dimension_numbers<[1], [0], [0], [1], [0, 0, 1, 1], [], []>} : vector<16x4xbf16>, vector<4x256xbf16>, vector<16x256xf32> -> vector<16x256xf32>
    %16 = arith.addf %10, %15 : vector<16x256xf32>
    %c0_17 = arith.constant 0 : index
    %c0_18 = arith.constant 0 : index
    %17 = vector.load %arg8[%c0_17, %c0_18] : memref<16x1xf32, #tpu.memory_space<vmem>>, vector<16x1xf32>
    %18 = vector.broadcast %17 : vector<16x1xf32> to vector<16x256xf32>
    %19 = arith.mulf %16, %18 : vector<16x256xf32>
    %c0_19 = arith.constant 0 : index
    %c0_20 = arith.constant 0 : index
    %20 = vector.load %arg9[%c0_19, %c0_20] : memref<16x1xf32, #tpu.memory_space<vmem>>, vector<16x1xf32>
    %21 = vector.broadcast %20 : vector<16x1xf32> to vector<16x256xf32>
    %22 = arith.addf %19, %21 : vector<16x256xf32>
    %cst_21 = arith.constant 0.000000e+00 : f32
    %23 = vector.broadcast %cst_21 : f32 to vector<16x256xf32>
    %24 = arith.maximumf %22, %23 : vector<16x256xf32>
    %c0_22 = arith.constant 0 : index
    %c0_23 = arith.constant 0 : index
    %c0_24 = arith.constant 0 : index
    %25 = vector.load %arg6[%c0_22, %c0_23, %c0_24] : memref<1x8x1xf32, #tpu.memory_space<vmem>>, vector<1x8x1xf32>
    %26 = vector.shape_cast %25 : vector<1x8x1xf32> to vector<8x1xf32>
    %c0_25 = arith.constant 0 : index
    %c0_26 = arith.constant 0 : index
    %c0_27 = arith.constant 0 : index
    %27 = vector.load %arg5[%c0_25, %c0_26, %c0_27] : memref<1x8x16xbf16, #tpu.memory_space<vmem>>, vector<1x8x16xbf16>
    %28 = vector.shape_cast %27 : vector<1x8x16xbf16> to vector<8x16xbf16>
    %29 = vector.extract_strided_slice %24 {offsets = [0, 0], sizes = [8, 256], strides = [1, 1]} : vector<16x256xf32> to vector<8x256xf32>
    %30 = vector.broadcast %26 : vector<8x1xf32> to vector<8x256xf32>
    %31 = arith.addf %29, %30 : vector<8x256xf32>
    %32 = arith.truncf %31 : vector<8x256xf32> to vector<8x256xbf16>
    %c0_28 = arith.constant 0 : index
    %c0_29 = arith.constant 0 : index
    %c0_30 = arith.constant 0 : index
    %33 = vector.load %arg10[%c0_28, %c0_29, %c0_30] : memref<2x16x8xbf16, #tpu.memory_space<vmem>>, vector<1x16x8xbf16>
    %34 = vector.shape_cast %33 : vector<1x16x8xbf16> to vector<16x8xbf16>
    %cst_31 = arith.constant dense<0.000000e+00> : vector<16x256xf32>
    %35 = tpu.matmul %34, %32, %cst_31 {dimension_numbers = #tpu.dot_dimension_numbers<[1], [0], [0], [1], [0, 0, 1, 1], [], []>} : vector<16x8xbf16>, vector<8x256xbf16>, vector<16x256xf32> -> vector<16x256xf32>
    %c0_32 = arith.constant 0 : index
    %c0_33 = arith.constant 0 : index
    %c0_34 = arith.constant 0 : index
    %36 = vector.load %arg11[%c0_32, %c0_33, %c0_34] : memref<2x16x1xf32, #tpu.memory_space<vmem>>, vector<1x16x1xf32>
    %37 = vector.shape_cast %36 : vector<1x16x1xf32> to vector<16x1xf32>
    %38 = vector.broadcast %37 : vector<16x1xf32> to vector<16x256xf32>
    %39 = arith.mulf %35, %38 : vector<16x256xf32>
    %c0_35 = arith.constant 0 : index
    %c0_36 = arith.constant 0 : index
    %c0_37 = arith.constant 0 : index
    %40 = vector.load %arg12[%c0_35, %c0_36, %c0_37] : memref<2x16x1xf32, #tpu.memory_space<vmem>>, vector<1x16x1xf32>
    %41 = vector.shape_cast %40 : vector<1x16x1xf32> to vector<16x1xf32>
    %42 = vector.broadcast %41 : vector<16x1xf32> to vector<16x256xf32>
    %43 = arith.addf %39, %42 : vector<16x256xf32>
    %cst_38 = arith.constant 0.000000e+00 : f32
    %44 = vector.broadcast %cst_38 : f32 to vector<16x256xf32>
    %45 = arith.maximumf %43, %44 : vector<16x256xf32>
    %46 = arith.truncf %45 : vector<16x256xf32> to vector<16x256xbf16>
    %c0_39 = arith.constant 0 : index
    %c0_40 = arith.constant 0 : index
    %c0_41 = arith.constant 0 : index
    %47 = vector.load %arg13[%c0_39, %c0_40, %c0_41] : memref<2x16x16xbf16, #tpu.memory_space<vmem>>, vector<1x16x16xbf16>
    %48 = vector.shape_cast %47 : vector<1x16x16xbf16> to vector<16x16xbf16>
    %cst_42 = arith.constant dense<0.000000e+00> : vector<16x256xf32>
    %49 = tpu.matmul %48, %46, %cst_42 {dimension_numbers = #tpu.dot_dimension_numbers<[1], [0], [0], [1], [0, 0, 1, 1], [], []>} : vector<16x16xbf16>, vector<16x256xbf16>, vector<16x256xf32> -> vector<16x256xf32>
    %c0_43 = arith.constant 0 : index
    %c0_44 = arith.constant 0 : index
    %c0_45 = arith.constant 0 : index
    %50 = vector.load %arg14[%c0_43, %c0_44, %c0_45] : memref<2x16x1xf32, #tpu.memory_space<vmem>>, vector<1x16x1xf32>
    %51 = vector.shape_cast %50 : vector<1x16x1xf32> to vector<16x1xf32>
    %52 = vector.broadcast %51 : vector<16x1xf32> to vector<16x256xf32>
    %53 = arith.mulf %49, %52 : vector<16x256xf32>
    %c0_46 = arith.constant 0 : index
    %c0_47 = arith.constant 0 : index
    %c0_48 = arith.constant 0 : index
    %54 = vector.load %arg15[%c0_46, %c0_47, %c0_48] : memref<2x16x1xf32, #tpu.memory_space<vmem>>, vector<1x16x1xf32>
    %55 = vector.shape_cast %54 : vector<1x16x1xf32> to vector<16x1xf32>
    %56 = vector.broadcast %55 : vector<16x1xf32> to vector<16x256xf32>
    %57 = arith.addf %53, %56 : vector<16x256xf32>
    %cst_49 = arith.constant 0.000000e+00 : f32
    %58 = vector.broadcast %cst_49 : f32 to vector<16x256xf32>
    %59 = arith.maximumf %57, %58 : vector<16x256xf32>
    %60 = arith.truncf %59 : vector<16x256xf32> to vector<16x256xbf16>
    %cst_50 = arith.constant dense<0.000000e+00> : vector<8x256xf32>
    %61 = tpu.matmul %28, %60, %cst_50 {dimension_numbers = #tpu.dot_dimension_numbers<[1], [0], [0], [1], [0, 0, 1, 1], [], []>} : vector<8x16xbf16>, vector<16x256xbf16>, vector<8x256xf32> -> vector<8x256xf32>
    %c0_51 = arith.constant 0 : index
    %c0_52 = arith.constant 0 : index
    %c0_53 = arith.constant 0 : index
    %62 = vector.load %arg16[%c0_51, %c0_52, %c0_53] : memref<2x8x8xbf16, #tpu.memory_space<vmem>>, vector<1x8x8xbf16>
    %63 = vector.shape_cast %62 : vector<1x8x8xbf16> to vector<8x8xbf16>
    %64 = arith.truncf %61 : vector<8x256xf32> to vector<8x256xbf16>
    %cst_54 = arith.constant dense<0.000000e+00> : vector<8x256xf32>
    %65 = tpu.matmul %63, %64, %cst_54 {dimension_numbers = #tpu.dot_dimension_numbers<[1], [0], [0], [1], [0, 0, 1, 1], [], []>} : vector<8x8xbf16>, vector<8x256xbf16>, vector<8x256xf32> -> vector<8x256xf32>
    %c0_55 = arith.constant 0 : index
    %c0_56 = arith.constant 0 : index
    %c0_57 = arith.constant 0 : index
    %66 = vector.load %arg17[%c0_55, %c0_56, %c0_57] : memref<2x8x8xbf16, #tpu.memory_space<vmem>>, vector<1x8x8xbf16>
    %67 = vector.shape_cast %66 : vector<1x8x8xbf16> to vector<8x8xbf16>
    %68 = arith.truncf %29 : vector<8x256xf32> to vector<8x256xbf16>
    %cst_58 = arith.constant dense<0.000000e+00> : vector<8x256xf32>
    %69 = tpu.matmul %67, %68, %cst_58 {dimension_numbers = #tpu.dot_dimension_numbers<[1], [0], [0], [1], [0, 0, 1, 1], [], []>} : vector<8x8xbf16>, vector<8x256xbf16>, vector<8x256xf32> -> vector<8x256xf32>
    %70 = arith.addf %65, %69 : vector<8x256xf32>
    %c0_59 = arith.constant 0 : index
    %c0_60 = arith.constant 0 : index
    %c0_61 = arith.constant 0 : index
    %71 = vector.load %arg18[%c0_59, %c0_60, %c0_61] : memref<2x8x1xf32, #tpu.memory_space<vmem>>, vector<1x8x1xf32>
    %72 = vector.shape_cast %71 : vector<1x8x1xf32> to vector<8x1xf32>
    %73 = vector.broadcast %72 : vector<8x1xf32> to vector<8x256xf32>
    %74 = arith.mulf %70, %73 : vector<8x256xf32>
    %c0_62 = arith.constant 0 : index
    %c0_63 = arith.constant 0 : index
    %c0_64 = arith.constant 0 : index
    %75 = vector.load %arg19[%c0_62, %c0_63, %c0_64] : memref<2x8x1xf32, #tpu.memory_space<vmem>>, vector<1x8x1xf32>
    %76 = vector.shape_cast %75 : vector<1x8x1xf32> to vector<8x1xf32>
    %77 = vector.broadcast %76 : vector<8x1xf32> to vector<8x256xf32>
    %78 = arith.addf %74, %77 : vector<8x256xf32>
    %cst_65 = arith.constant 0.000000e+00 : f32
    %79 = vector.broadcast %cst_65 : f32 to vector<8x256xf32>
    %80 = arith.maximumf %78, %79 : vector<8x256xf32>
    %c0_66 = arith.constant 0 : index
    %c0_67 = arith.constant 0 : index
    %c0_68 = arith.constant 0 : index
    %81 = vector.load %arg20[%c0_66, %c0_67, %c0_68] : memref<1x8x256xf32, #tpu.memory_space<vmem>>, vector<1x8x256xf32>
    %82 = vector.shape_cast %81 : vector<1x8x256xf32> to vector<8x256xf32>
    %83 = vector.shape_cast %80 : vector<8x256xf32> to vector<1x8x256xf32>
    tpu.vector_store %arg20[%c0_66, %c0_67, %c0_68], %83 {strides = array<i32>} : memref<1x8x256xf32, #tpu.memory_space<vmem>>, vector<1x8x256xf32>,
    %84 = vector.extract_strided_slice %24 {offsets = [8, 0], sizes = [8, 256], strides = [1, 1]} : vector<16x256xf32> to vector<8x256xf32>
    %85 = vector.broadcast %26 : vector<8x1xf32> to vector<8x256xf32>
    %86 = arith.addf %84, %85 : vector<8x256xf32>
    %87 = arith.truncf %86 : vector<8x256xf32> to vector<8x256xbf16>
    %c1_69 = arith.constant 1 : index
    %c0_70 = arith.constant 0 : index
    %c0_71 = arith.constant 0 : index
    %88 = vector.load %arg10[%c1_69, %c0_70, %c0_71] : memref<2x16x8xbf16, #tpu.memory_space<vmem>>, vector<1x16x8xbf16>
    %89 = vector.shape_cast %88 : vector<1x16x8xbf16> to vector<16x8xbf16>
    %cst_72 = arith.constant dense<0.000000e+00> : vector<16x256xf32>
    %90 = tpu.matmul %89, %87, %cst_72 {dimension_numbers = #tpu.dot_dimension_numbers<[1], [0], [0], [1], [0, 0, 1, 1], [], []>} : vector<16x8xbf16>, vector<8x256xbf16>, vector<16x256xf32> -> vector<16x256xf32>
    %c1_73 = arith.constant 1 : index
    %c0_74 = arith.constant 0 : index
    %c0_75 = arith.constant 0 : index
    %91 = vector.load %arg11[%c1_73, %c0_74, %c0_75] : memref<2x16x1xf32, #tpu.memory_space<vmem>>, vector<1x16x1xf32>
    %92 = vector.shape_cast %91 : vector<1x16x1xf32> to vector<16x1xf32>
    %93 = vector.broadcast %92 : vector<16x1xf32> to vector<16x256xf32>
    %94 = arith.mulf %90, %93 : vector<16x256xf32>
    %c1_76 = arith.constant 1 : index
    %c0_77 = arith.constant 0 : index
    %c0_78 = arith.constant 0 : index
    %95 = vector.load %arg12[%c1_76, %c0_77, %c0_78] : memref<2x16x1xf32, #tpu.memory_space<vmem>>, vector<1x16x1xf32>
    %96 = vector.shape_cast %95 : vector<1x16x1xf32> to vector<16x1xf32>
    %97 = vector.broadcast %96 : vector<16x1xf32> to vector<16x256xf32>
    %98 = arith.addf %94, %97 : vector<16x256xf32>
    %cst_79 = arith.constant 0.000000e+00 : f32
    %99 = vector.broadcast %cst_79 : f32 to vector<16x256xf32>
    %100 = arith.maximumf %98, %99 : vector<16x256xf32>
    %101 = arith.truncf %100 : vector<16x256xf32> to vector<16x256xbf16>
    %c1_80 = arith.constant 1 : index
    %c0_81 = arith.constant 0 : index
    %c0_82 = arith.constant 0 : index
    %102 = vector.load %arg13[%c1_80, %c0_81, %c0_82] : memref<2x16x16xbf16, #tpu.memory_space<vmem>>, vector<1x16x16xbf16>
    %103 = vector.shape_cast %102 : vector<1x16x16xbf16> to vector<16x16xbf16>
    %cst_83 = arith.constant dense<0.000000e+00> : vector<16x256xf32>
    %104 = tpu.matmul %103, %101, %cst_83 {dimension_numbers = #tpu.dot_dimension_numbers<[1], [0], [0], [1], [0, 0, 1, 1], [], []>} : vector<16x16xbf16>, vector<16x256xbf16>, vector<16x256xf32> -> vector<16x256xf32>
    %c1_84 = arith.constant 1 : index
    %c0_85 = arith.constant 0 : index
    %c0_86 = arith.constant 0 : index
    %105 = vector.load %arg14[%c1_84, %c0_85, %c0_86] : memref<2x16x1xf32, #tpu.memory_space<vmem>>, vector<1x16x1xf32>
    %106 = vector.shape_cast %105 : vector<1x16x1xf32> to vector<16x1xf32>
    %107 = vector.broadcast %106 : vector<16x1xf32> to vector<16x256xf32>
    %108 = arith.mulf %104, %107 : vector<16x256xf32>
    %c1_87 = arith.constant 1 : index
    %c0_88 = arith.constant 0 : index
    %c0_89 = arith.constant 0 : index
    %109 = vector.load %arg15[%c1_87, %c0_88, %c0_89] : memref<2x16x1xf32, #tpu.memory_space<vmem>>, vector<1x16x1xf32>
    %110 = vector.shape_cast %109 : vector<1x16x1xf32> to vector<16x1xf32>
    %111 = vector.broadcast %110 : vector<16x1xf32> to vector<16x256xf32>
    %112 = arith.addf %108, %111 : vector<16x256xf32>
    %cst_90 = arith.constant 0.000000e+00 : f32
    %113 = vector.broadcast %cst_90 : f32 to vector<16x256xf32>
    %114 = arith.maximumf %112, %113 : vector<16x256xf32>
    %115 = arith.truncf %114 : vector<16x256xf32> to vector<16x256xbf16>
    %cst_91 = arith.constant dense<0.000000e+00> : vector<8x256xf32>
    %116 = tpu.matmul %28, %115, %cst_91 {dimension_numbers = #tpu.dot_dimension_numbers<[1], [0], [0], [1], [0, 0, 1, 1], [], []>} : vector<8x16xbf16>, vector<16x256xbf16>, vector<8x256xf32> -> vector<8x256xf32>
    %c1_92 = arith.constant 1 : index
    %c0_93 = arith.constant 0 : index
    %c0_94 = arith.constant 0 : index
    %117 = vector.load %arg16[%c1_92, %c0_93, %c0_94] : memref<2x8x8xbf16, #tpu.memory_space<vmem>>, vector<1x8x8xbf16>
    %118 = vector.shape_cast %117 : vector<1x8x8xbf16> to vector<8x8xbf16>
    %119 = arith.truncf %116 : vector<8x256xf32> to vector<8x256xbf16>
    %cst_95 = arith.constant dense<0.000000e+00> : vector<8x256xf32>
    %120 = tpu.matmul %118, %119, %cst_95 {dimension_numbers = #tpu.dot_dimension_numbers<[1], [0], [0], [1], [0, 0, 1, 1], [], []>} : vector<8x8xbf16>, vector<8x256xbf16>, vector<8x256xf32> -> vector<8x256xf32>
    %c1_96 = arith.constant 1 : index
    %c0_97 = arith.constant 0 : index
    %c0_98 = arith.constant 0 : index
    %121 = vector.load %arg17[%c1_96, %c0_97, %c0_98] : memref<2x8x8xbf16, #tpu.memory_space<vmem>>, vector<1x8x8xbf16>
    %122 = vector.shape_cast %121 : vector<1x8x8xbf16> to vector<8x8xbf16>
    %123 = arith.truncf %84 : vector<8x256xf32> to vector<8x256xbf16>
    %cst_99 = arith.constant dense<0.000000e+00> : vector<8x256xf32>
    %124 = tpu.matmul %122, %123, %cst_99 {dimension_numbers = #tpu.dot_dimension_numbers<[1], [0], [0], [1], [0, 0, 1, 1], [], []>} : vector<8x8xbf16>, vector<8x256xbf16>, vector<8x256xf32> -> vector<8x256xf32>
    %125 = arith.addf %120, %124 : vector<8x256xf32>
    %c1_100 = arith.constant 1 : index
    %c0_101 = arith.constant 0 : index
    %c0_102 = arith.constant 0 : index
    %126 = vector.load %arg18[%c1_100, %c0_101, %c0_102] : memref<2x8x1xf32, #tpu.memory_space<vmem>>, vector<1x8x1xf32>
    %127 = vector.shape_cast %126 : vector<1x8x1xf32> to vector<8x1xf32>
    %128 = vector.broadcast %127 : vector<8x1xf32> to vector<8x256xf32>
    %129 = arith.mulf %125, %128 : vector<8x256xf32>
    %c1_103 = arith.constant 1 : index
    %c0_104 = arith.constant 0 : index
    %c0_105 = arith.constant 0 : index
    %130 = vector.load %arg19[%c1_103, %c0_104, %c0_105] : memref<2x8x1xf32, #tpu.memory_space<vmem>>, vector<1x8x1xf32>
    %131 = vector.shape_cast %130 : vector<1x8x1xf32> to vector<8x1xf32>
    %132 = vector.broadcast %131 : vector<8x1xf32> to vector<8x256xf32>
    %133 = arith.addf %129, %132 : vector<8x256xf32>
    %cst_106 = arith.constant 0.000000e+00 : f32
    %134 = vector.broadcast %cst_106 : f32 to vector<8x256xf32>
    %135 = arith.maximumf %133, %134 : vector<8x256xf32>
    %c0_107 = arith.constant 0 : index
    %c0_108 = arith.constant 0 : index
    %c0_109 = arith.constant 0 : index
    %136 = vector.load %arg21[%c0_107, %c0_108, %c0_109] : memref<1x8x256xf32, #tpu.memory_space<vmem>>, vector<1x8x256xf32>
    %137 = vector.shape_cast %136 : vector<1x8x256xf32> to vector<8x256xf32>
    %138 = vector.shape_cast %135 : vector<8x256xf32> to vector<1x8x256xf32>
    tpu.vector_store %arg21[%c0_107, %c0_108, %c0_109], %138 {strides = array<i32>} : memref<1x8x256xf32, #tpu.memory_space<vmem>>, vector<1x8x256xf32>,
    return
  }
  func.func @transform_0(%arg0: i32, %arg1: i32) -> (i32, i32, i32) {
    %c0_i32 = arith.constant 0 : i32
    %c0_i32_0 = arith.constant 0 : i32
    return %arg0, %c0_i32, %arg1 : i32, i32, i32
  }
  func.func @transform_1(%arg0: i32, %arg1: i32) -> (i32, i32, i32) {
    %c0_i32 = arith.constant 0 : i32
    %c0_i32_0 = arith.constant 0 : i32
    return %arg0, %c0_i32, %arg1 : i32, i32, i32
  }
  func.func @transform_2(%arg0: i32, %arg1: i32) -> (i32, i32, i32) {
    %c0_i32 = arith.constant 0 : i32
    %c0_i32_0 = arith.constant 0 : i32
    return %arg0, %c0_i32, %arg1 : i32, i32, i32
  }
  func.func @transform_3(%arg0: i32, %arg1: i32) -> (i32, i32, i32) {
    %c0_i32 = arith.constant 0 : i32
    %c0_i32_0 = arith.constant 0 : i32
    %c0_i32_1 = arith.constant 0 : i32
    return %arg0, %c0_i32, %c0_i32_0 : i32, i32, i32
  }
  func.func @transform_4(%arg0: i32, %arg1: i32) -> (i32, i32, i32) {
    %c0_i32 = arith.constant 0 : i32
    %c0_i32_0 = arith.constant 0 : i32
    %c0_i32_1 = arith.constant 0 : i32
    return %arg0, %c0_i32, %c0_i32_0 : i32, i32, i32
  }
  func.func @transform_5(%arg0: i32, %arg1: i32) -> (i32, i32, i32) {
    %c0_i32 = arith.constant 0 : i32
    %c0_i32_0 = arith.constant 0 : i32
    %c0_i32_1 = arith.constant 0 : i32
    %c0_i32_2 = arith.constant 0 : i32
    return %c0_i32, %c0_i32_0, %c0_i32_1 : i32, i32, i32
  }
  func.func @transform_6(%arg0: i32, %arg1: i32) -> (i32, i32) {
    %c0_i32 = arith.constant 0 : i32
    %c0_i32_0 = arith.constant 0 : i32
    %c0_i32_1 = arith.constant 0 : i32
    return %c0_i32, %c0_i32_0 : i32, i32
  }
  func.func @transform_7(%arg0: i32, %arg1: i32) -> (i32, i32) {
    %c0_i32 = arith.constant 0 : i32
    %c0_i32_0 = arith.constant 0 : i32
    %c0_i32_1 = arith.constant 0 : i32
    return %c0_i32, %c0_i32_0 : i32, i32
  }
  func.func @transform_8(%arg0: i32, %arg1: i32) -> (i32, i32, i32) {
    %c0_i32 = arith.constant 0 : i32
    %c0_i32_0 = arith.constant 0 : i32
    %c0_i32_1 = arith.constant 0 : i32
    %c0_i32_2 = arith.constant 0 : i32
    return %c0_i32, %c0_i32_0, %c0_i32_1 : i32, i32, i32
  }
  func.func @transform_9(%arg0: i32, %arg1: i32) -> (i32, i32, i32) {
    %c0_i32 = arith.constant 0 : i32
    %c0_i32_0 = arith.constant 0 : i32
    %c0_i32_1 = arith.constant 0 : i32
    %c0_i32_2 = arith.constant 0 : i32
    return %c0_i32, %c0_i32_0, %c0_i32_1 : i32, i32, i32
  }
  func.func @transform_10(%arg0: i32, %arg1: i32) -> (i32, i32, i32) {
    %c0_i32 = arith.constant 0 : i32
    %c0_i32_0 = arith.constant 0 : i32
    %c0_i32_1 = arith.constant 0 : i32
    %c0_i32_2 = arith.constant 0 : i32
    return %c0_i32, %c0_i32_0, %c0_i32_1 : i32, i32, i32
  }
  func.func @transform_11(%arg0: i32, %arg1: i32) -> (i32, i32, i32) {
    %c0_i32 = arith.constant 0 : i32
    %c0_i32_0 = arith.constant 0 : i32
    %c0_i32_1 = arith.constant 0 : i32
    %c0_i32_2 = arith.constant 0 : i32
    return %c0_i32, %c0_i32_0, %c0_i32_1 : i32, i32, i32
  }
  func.func @transform_12(%arg0: i32, %arg1: i32) -> (i32, i32, i32) {
    %c0_i32 = arith.constant 0 : i32
    %c0_i32_0 = arith.constant 0 : i32
    %c0_i32_1 = arith.constant 0 : i32
    %c0_i32_2 = arith.constant 0 : i32
    return %c0_i32, %c0_i32_0, %c0_i32_1 : i32, i32, i32
  }
  func.func @transform_13(%arg0: i32, %arg1: i32) -> (i32, i32, i32) {
    %c0_i32 = arith.constant 0 : i32
    %c0_i32_0 = arith.constant 0 : i32
    %c0_i32_1 = arith.constant 0 : i32
    %c0_i32_2 = arith.constant 0 : i32
    return %c0_i32, %c0_i32_0, %c0_i32_1 : i32, i32, i32
  }
  func.func @transform_14(%arg0: i32, %arg1: i32) -> (i32, i32, i32) {
    %c0_i32 = arith.constant 0 : i32
    %c0_i32_0 = arith.constant 0 : i32
    %c0_i32_1 = arith.constant 0 : i32
    %c0_i32_2 = arith.constant 0 : i32
    return %c0_i32, %c0_i32_0, %c0_i32_1 : i32, i32, i32
  }
  func.func @transform_15(%arg0: i32, %arg1: i32) -> (i32, i32, i32) {
    %c0_i32 = arith.constant 0 : i32
    %c0_i32_0 = arith.constant 0 : i32
    %c0_i32_1 = arith.constant 0 : i32
    %c0_i32_2 = arith.constant 0 : i32
    return %c0_i32, %c0_i32_0, %c0_i32_1 : i32, i32, i32
  }
  func.func @transform_16(%arg0: i32, %arg1: i32) -> (i32, i32, i32) {
    %c0_i32 = arith.constant 0 : i32
    %c0_i32_0 = arith.constant 0 : i32
    %c0_i32_1 = arith.constant 0 : i32
    %c0_i32_2 = arith.constant 0 : i32
    return %c0_i32, %c0_i32_0, %c0_i32_1 : i32, i32, i32
  }
  func.func @transform_17(%arg0: i32, %arg1: i32) -> (i32, i32, i32) {
    %c0_i32 = arith.constant 0 : i32
    %c0_i32_0 = arith.constant 0 : i32
    %c0_i32_1 = arith.constant 0 : i32
    %c0_i32_2 = arith.constant 0 : i32
    return %c0_i32, %c0_i32_0, %c0_i32_1 : i32, i32, i32
  }
  func.func @transform_18(%arg0: i32, %arg1: i32) -> (i32, i32, i32) {
    %c0_i32 = arith.constant 0 : i32
    %c0_i32_0 = arith.constant 0 : i32
    return %arg0, %c0_i32, %arg1 : i32, i32, i32
  }
  func.func @transform_19(%arg0: i32, %arg1: i32) -> (i32, i32, i32) {
    %c0_i32 = arith.constant 0 : i32
    %c0_i32_0 = arith.constant 0 : i32
    return %arg0, %c0_i32, %arg1 : i32, i32, i32
  }
}

</mosaic_0001>

<llo_original>
// kernel: multi_hgd_forward.2
$region0: #{multi_hgd_forward.2}
  #allocation0 [shape = 'u32[]', space=smem, size = 0x4, offset = 0x4, fixed_abs, tag = 'smem constant byte address 0x4 - core index']
  #allocation1 [shape = 'u32[72,128]{1,0:T(1,128)}', space=vmem, size = 0x9000, scoped, tag = 'internal scratch']
  %s0 = inlined_call_operand.vmem [shape: f32[2,4,16], index: 0, kind: input, shape index: {}]
  %s1 = inlined_call_operand.vmem [shape: f32[2,4,16], index: 1, kind: input, shape index: {}]
  %s2 = inlined_call_operand.vmem [shape: f32[2,4,16], index: 2, kind: input, shape index: {}]
  %s3 = inlined_call_operand.vmem [shape: f32[3,24,4], index: 3, kind: input, shape index: {}]
  %s4 = inlined_call_operand.vmem [shape: f32[24,1], index: 4, kind: input, shape index: {}]
  %s5 = inlined_call_operand.vmem [shape: f32[24,1], index: 5, kind: input, shape index: {}]
  %s6 = inlined_call_operand.vmem [shape: f32[16,16], index: 6, kind: input, shape index: {}]
  %s7 = inlined_call_operand.vmem [shape: f32[16,1], index: 7, kind: input, shape index: {}]
  %s8 = inlined_call_operand.vmem [shape: f32[16,1], index: 8, kind: input, shape index: {}]
  %s9 = inlined_call_operand.vmem [shape: bf16[2,8,16], index: 9, kind: output, shape index: {0}]
  %s10 = inlined_call_operand.vmem [shape: f32[2,8,1], index: 10, kind: output, shape index: {1}]
  %11 = xla_tuple %s9, %s10
  %s12 = sld [smem:[#allocation0]]
  $region77: #{multi_hgd_forward.2} parent=0
    _
  %s14 = ssub.s32 1, %s12
  %s15 = scalar_select 0, %s14, %s12
  loop: start=0, step=1, limit=4
  $region2: #{multi_hgd_forward.2} parent=0 // loop_pre_header
    _
  $region3: #{multi_hgd_forward.2} parent=0 // loop_header
    %s17 = sphi 0, %s21
    %p18 = scmp.ge.s32.totalorder %s17, 4
    %s27 = sphi 0, %s29
    %s30 = sphi 0, %s27
    %s31 = sphi 0, %s30
    %s47 = sphi 0, %s31
    %s53 = sphi 0, %s55
    %s56 = sphi 0, %s53
    %s57 = sphi 0, %s56
    %s73 = sphi 0, %s57
    %s79 = sphi 0, %s81
    %s82 = sphi 0, %s79
    %s83 = sphi 0, %s82
    %s99 = sphi 0, %s83
    %s103 = sphi 0, %s103
    %s105 = sphi 0, %s103
    %s106 = sphi 0, %s105
    %s120 = sphi 0, %s106
    %s124 = sphi 0, %s124
    %s126 = sphi 0, %s124
    %s127 = sphi 0, %s126
    %s141 = sphi 0, %s127
    %s145 = sphi 0, %s145
    %s147 = sphi 0, %s145
    %s148 = sphi 0, %s147
    %s162 = sphi 0, %s148
    %s166 = sphi 0, %s166
    %s168 = sphi 0, %s166
    %s169 = sphi 0, %s168
    %s183 = sphi 0, %s169
    %s187 = sphi 0, %s187
    %s189 = sphi 0, %s187
    %s190 = sphi 0, %s189
    %s204 = sphi 0, %s190
    %s208 = sphi 0, %s208
    %s210 = sphi 0, %s208
    %s211 = sphi 0, %s210
    %s225 = sphi 0, %s211
    %s231 = sphi 0, %s233
    %s234 = sphi 0, %s231
    %s235 = sphi 0, %s234
    %s251 = sphi 0, %s235
    %s257 = sphi 0, %s259
    %s260 = sphi 0, %s257
    %s261 = sphi 0, %s260
    %s277 = sphi 0, %s261
  $region4: #{multi_hgd_forward.2} parent=0 // loop_header_branch
    %20 = sbr.rel (%p18) target = $region8
  $region5: #{multi_hgd_forward.2} parent=0 // loop_body
    %s22 = ssub.s32 %s17, 1
    %s23 = ssub.s32 %s17, 2
    %s24 = sadd.s32 %s17, 1
    %s25 = ssub.s32 %s17, %s24
    %p26 = scmp.eq.s32.totalorder %s25, 0
    %s28 = sadd.s32 %s27, 1
    %s29 = scalar_select %p26, %s27, %s28
    %p32 = pneg %p26
    %p33 = scmp.eq.s32.totalorder %s17, 1
    %p34 = por %p32, %p33
    %p35 = scmp.ne.s32.totalorder %s27, %s30
    %p36 = scmp.eq.s32.totalorder %s17, 0
    %p37 = por %p35, %p36
    %p38 = scmp.ne.s32.totalorder %s27, %s30
    %p39 = scmp.eq.s32.totalorder %s22, 1
    %p40 = por %p38, %p39
    %p41 = scmp.ne.s32.totalorder %s30, %s31
    %p42 = scmp.eq.s32.totalorder %s22, 0
    %p43 = por %p41, %p42
    %p44 = scmp.ne.s32.totalorder %s30, %s31
    %p45 = scmp.eq.s32.totalorder %s23, 1
    %p46 = por %p44, %p45
    %p48 = scmp.ne.s32.totalorder %s31, %s47
    %p49 = scmp.eq.s32.totalorder %s23, 0
    %p50 = por %p48, %p49
    %s51 = ssub.s32 %s17, %s24
    %p52 = scmp.eq.s32.totalorder %s51, 0
    %s54 = sadd.s32 %s53, 1
    %s55 = scalar_select %p52, %s53, %s54
    %p58 = pneg %p52
    %p59 = scmp.eq.s32.totalorder %s17, 1
    %p60 = por %p58, %p59
    %p61 = scmp.ne.s32.totalorder %s53, %s56
    %p62 = scmp.eq.s32.totalorder %s17, 0
    %p63 = por %p61, %p62
    %p64 = scmp.ne.s32.totalorder %s53, %s56
    %p65 = scmp.eq.s32.totalorder %s22, 1
    %p66 = por %p64, %p65
    %p67 = scmp.ne.s32.totalorder %s56, %s57
    %p68 = scmp.eq.s32.totalorder %s22, 0
    %p69 = por %p67, %p68
    %p70 = scmp.ne.s32.totalorder %s56, %s57
    %p71 = scmp.eq.s32.totalorder %s23, 1
    %p72 = por %p70, %p71
    %p74 = scmp.ne.s32.totalorder %s57, %s73
    %p75 = scmp.eq.s32.totalorder %s23, 0
    %p76 = por %p74, %p75
    %s77 = ssub.s32 %s17, %s24
    %p78 = scmp.eq.s32.totalorder %s77, 0
    %s80 = sadd.s32 %s79, 1
    %s81 = scalar_select %p78, %s79, %s80
    %p84 = pneg %p78
    %p85 = scmp.eq.s32.totalorder %s17, 1
    %p86 = por %p84, %p85
    %p87 = scmp.ne.s32.totalorder %s79, %s82
    %p88 = scmp.eq.s32.totalorder %s17, 0
    %p89 = por %p87, %p88
    %p90 = scmp.ne.s32.totalorder %s79, %s82
    %p91 = scmp.eq.s32.totalorder %s22, 1
    %p92 = por %p90, %p91
    %p93 = scmp.ne.s32.totalorder %s82, %s83
    %p94 = scmp.eq.s32.totalorder %s22, 0
    %p95 = por %p93, %p94
    %p96 = scmp.ne.s32.totalorder %s82, %s83
    %p97 = scmp.eq.s32.totalorder %s23, 1
    %p98 = por %p96, %p97
    %p100 = scmp.ne.s32.totalorder %s83, %s99
    %p101 = scmp.eq.s32.totalorder %s23, 0
    %p102 = por %p100, %p101
    %s104 = sadd.s32 %s103, 1
    %p107 = scmp.eq.s32.totalorder %s17, 1
    %p108 = scmp.ne.s32.totalorder %s103, %s105
    %p109 = scmp.eq.s32.totalorder %s17, 0
    %p110 = por %p108, %p109
    %p111 = scmp.ne.s32.totalorder %s103, %s105
    %p112 = scmp.eq.s32.totalorder %s22, 1
    %p113 = por %p111, %p112
    %p114 = scmp.ne.s32.totalorder %s105, %s106
    %p115 = scmp.eq.s32.totalorder %s22, 0
    %p116 = por %p114, %p115
    %p117 = scmp.ne.s32.totalorder %s105, %s106
    %p118 = scmp.eq.s32.totalorder %s23, 1
    %p119 = por %p117, %p118
    %p121 = scmp.ne.s32.totalorder %s106, %s120
    %p122 = scmp.eq.s32.totalorder %s23, 0
    %p123 = por %p121, %p122
    %s125 = sadd.s32 %s124, 1
    %p128 = scmp.eq.s32.totalorder %s17, 1
    %p129 = scmp.ne.s32.totalorder %s124, %s126
    %p130 = scmp.eq.s32.totalorder %s17, 0
    %p131 = por %p129, %p130
    %p132 = scmp.ne.s32.totalorder %s124, %s126
    %p133 = scmp.eq.s32.totalorder %s22, 1
    %p134 = por %p132, %p133
    %p135 = scmp.ne.s32.totalorder %s126, %s127
    %p136 = scmp.eq.s32.totalorder %s22, 0
    %p137 = por %p135, %p136
    %p138 = scmp.ne.s32.totalorder %s126, %s127
    %p139 = scmp.eq.s32.totalorder %s23, 1
    %p140 = por %p138, %p139
    %p142 = scmp.ne.s32.totalorder %s127, %s141
    %p143 = scmp.eq.s32.totalorder %s23, 0
    %p144 = por %p142, %p143
    %s146 = sadd.s32 %s145, 1
    %p149 = scmp.eq.s32.totalorder %s17, 1
    %p150 = scmp.ne.s32.totalorder %s145, %s147
    %p151 = scmp.eq.s32.totalorder %s17, 0
    %p152 = por %p150, %p151
    %p153 = scmp.ne.s32.totalorder %s145, %s147
    %p154 = scmp.eq.s32.totalorder %s22, 1
    %p155 = por %p153, %p154
    %p156 = scmp.ne.s32.totalorder %s147, %s148
    %p157 = scmp.eq.s32.totalorder %s22, 0
    %p158 = por %p156, %p157
    %p159 = scmp.ne.s32.totalorder %s147, %s148
    %p160 = scmp.eq.s32.totalorder %s23, 1
    %p161 = por %p159, %p160
    %p163 = scmp.ne.s32.totalorder %s148, %s162
    %p164 = scmp.eq.s32.totalorder %s23, 0
    %p165 = por %p163, %p164
    %s167 = sadd.s32 %s166, 1
    %p170 = scmp.eq.s32.totalorder %s17, 1
    %p171 = scmp.ne.s32.totalorder %s166, %s168
    %p172 = scmp.eq.s32.totalorder %s17, 0
    %p173 = por %p171, %p172
    %p174 = scmp.ne.s32.totalorder %s166, %s168
    %p175 = scmp.eq.s32.totalorder %s22, 1
    %p176 = por %p174, %p175
    %p177 = scmp.ne.s32.totalorder %s168, %s169
    %p178 = scmp.eq.s32.totalorder %s22, 0
    %p179 = por %p177, %p178
    %p180 = scmp.ne.s32.totalorder %s168, %s169
    %p181 = scmp.eq.s32.totalorder %s23, 1
    %p182 = por %p180, %p181
    %p184 = scmp.ne.s32.totalorder %s169, %s183
    %p185 = scmp.eq.s32.totalorder %s23, 0
    %p186 = por %p184, %p185
    %s188 = sadd.s32 %s187, 1
    %p191 = scmp.eq.s32.totalorder %s17, 1
    %p192 = scmp.ne.s32.totalorder %s187, %s189
    %p193 = scmp.eq.s32.totalorder %s17, 0
    %p194 = por %p192, %p193
    %p195 = scmp.ne.s32.totalorder %s187, %s189
    %p196 = scmp.eq.s32.totalorder %s22, 1
    %p197 = por %p195, %p196
    %p198 = scmp.ne.s32.totalorder %s189, %s190
    %p199 = scmp.eq.s32.totalorder %s22, 0
    %p200 = por %p198, %p199
    %p201 = scmp.ne.s32.totalorder %s189, %s190
    %p202 = scmp.eq.s32.totalorder %s23, 1
    %p203 = por %p201, %p202
    %p205 = scmp.ne.s32.totalorder %s190, %s204
    %p206 = scmp.eq.s32.totalorder %s23, 0
    %p207 = por %p205, %p206
    %s209 = sadd.s32 %s208, 1
    %p212 = scmp.eq.s32.totalorder %s17, 1
    %p213 = scmp.ne.s32.totalorder %s208, %s210
    %p214 = scmp.eq.s32.totalorder %s17, 0
    %p215 = por %p213, %p214
    %p216 = scmp.ne.s32.totalorder %s208, %s210
    %p217 = scmp.eq.s32.totalorder %s22, 1
    %p218 = por %p216, %p217
    %p219 = scmp.ne.s32.totalorder %s210, %s211
    %p220 = scmp.eq.s32.totalorder %s22, 0
    %p221 = por %p219, %p220
    %p222 = scmp.ne.s32.totalorder %s210, %s211
    %p223 = scmp.eq.s32.totalorder %s23, 1
    %p224 = por %p222, %p223
    %p226 = scmp.ne.s32.totalorder %s211, %s225
    %p227 = scmp.eq.s32.totalorder %s23, 0
    %p228 = por %p226, %p227
    %s229 = ssub.s32 %s17, %s24
    %p230 = scmp.eq.s32.totalorder %s229, 0
    %s232 = sadd.s32 %s231, 1
    %s233 = scalar_select %p230, %s231, %s232
    %p236 = pneg %p230
    %p237 = scmp.eq.s32.totalorder %s17, 1
    %p238 = por %p236, %p237
    %p239 = scmp.ne.s32.totalorder %s231, %s234
    %p240 = scmp.eq.s32.totalorder %s17, 0
    %p241 = por %p239, %p240
    %p242 = scmp.ne.s32.totalorder %s231, %s234
    %p243 = scmp.eq.s32.totalorder %s22, 1
    %p244 = por %p242, %p243
    %p245 = scmp.ne.s32.totalorder %s234, %s235
    %p246 = scmp.eq.s32.totalorder %s22, 0
    %p247 = por %p245, %p246
    %p248 = scmp.ne.s32.totalorder %s234, %s235
    %p249 = scmp.eq.s32.totalorder %s23, 1
    %p250 = por %p248, %p249
    %p252 = scmp.ne.s32.totalorder %s235, %s251
    %p253 = scmp.eq.s32.totalorder %s23, 0
    %p254 = por %p252, %p253
    %s255 = ssub.s32 %s17, %s24
    %p256 = scmp.eq.s32.totalorder %s255, 0
    %s258 = sadd.s32 %s257, 1
    %s259 = scalar_select %p256, %s257, %s258
    %p262 = pneg %p256
    %p263 = scmp.eq.s32.totalorder %s17, 1
    %p264 = por %p262, %p263
    %p265 = scmp.ne.s32.totalorder %s257, %s260
    %p266 = scmp.eq.s32.totalorder %s17, 0
    %p267 = por %p265, %p266
    %p268 = scmp.ne.s32.totalorder %s257, %s260
    %p269 = scmp.eq.s32.totalorder %s22, 1
    %p270 = por %p268, %p269
    %p271 = scmp.ne.s32.totalorder %s260, %s261
    %p272 = scmp.eq.s32.totalorder %s22, 0
    %p273 = por %p271, %p272
    %p274 = scmp.ne.s32.totalorder %s260, %s261
    %p275 = scmp.eq.s32.totalorder %s23, 1
    %p276 = por %p274, %p275
    %p278 = scmp.ne.s32.totalorder %s261, %s277
    %p279 = scmp.eq.s32.totalorder %s23, 0
    %p280 = por %p278, %p279
    %p281 = scmp.le.s32.totalorder 1, %s17
    %p282 = scmp.lt.s32.totalorder %s17, 3
    %p283 = pnand %p281, %p282
    %p284 = pneg %p283
    // Predicated region
    $region9: #{multi_hgd_forward.2} parent=5 // pred_check
      _
    $region10: #{multi_hgd_forward.2} parent=5 // pred_check_branch
      %286 = sbr.rel (%p283) target = $region12
    $region11: #{multi_hgd_forward.2} parent=5 // pred_region
      %s287 = ssub.s32 %s17, 1
      // Predicated region
      $region13: #{multi_hgd_forward.2} parent=11 // pred_check
        %p288 = pneg %p116
      $region14: #{multi_hgd_forward.2} parent=11 // pred_check_branch
        %290 = sbr.rel (%p288) target = $region16
      $region15: #{multi_hgd_forward.2} parent=11 // pred_region
        _
      $region16: #{multi_hgd_forward.2} parent=11 // pred_fallthru
        _
      // Predicated region
      $region17: #{multi_hgd_forward.2} parent=11 // pred_check
        %p291 = pneg %p137
      $region18: #{multi_hgd_forward.2} parent=11 // pred_check_branch
        %293 = sbr.rel (%p291) target = $region20
      $region19: #{multi_hgd_forward.2} parent=11 // pred_region
        _
      $region20: #{multi_hgd_forward.2} parent=11 // pred_fallthru
        _
      // Predicated region
      $region21: #{multi_hgd_forward.2} parent=11 // pred_check
        %p294 = pneg %p158
      $region22: #{multi_hgd_forward.2} parent=11 // pred_check_branch
        %296 = sbr.rel (%p294) target = $region24
      $region23: #{multi_hgd_forward.2} parent=11 // pred_region
        _
      $region24: #{multi_hgd_forward.2} parent=11 // pred_fallthru
        _
      // Predicated region
      $region25: #{multi_hgd_forward.2} parent=11 // pred_check
        %p297 = pneg %p179
      $region26: #{multi_hgd_forward.2} parent=11 // pred_check_branch
        %299 = sbr.rel (%p297) target = $region28
      $region27: #{multi_hgd_forward.2} parent=11 // pred_region
        _
      $region28: #{multi_hgd_forward.2} parent=11 // pred_fallthru
        _
      // Predicated region
      $region29: #{multi_hgd_forward.2} parent=11 // pred_check
        %p300 = pneg %p200
      $region30: #{multi_hgd_forward.2} parent=11 // pred_check_branch
        %302 = sbr.rel (%p300) target = $region32
      $region31: #{multi_hgd_forward.2} parent=11 // pred_region
        _
      $region32: #{multi_hgd_forward.2} parent=11 // pred_fallthru
        _
      // Predicated region
      $region33: #{multi_hgd_forward.2} parent=11 // pred_check
        %p303 = pneg %p221
      $region34: #{multi_hgd_forward.2} parent=11 // pred_check_branch
        %305 = sbr.rel (%p303) target = $region36
      $region35: #{multi_hgd_forward.2} parent=11 // pred_region
        _
      $region36: #{multi_hgd_forward.2} parent=11 // pred_fallthru
        _
    $region12: #{multi_hgd_forward.2} parent=5 // pred_fallthru
      _
    %p306 = scmp.lt.s32.totalorder %s17, 2
    // Predicated region
    $region37: #{multi_hgd_forward.2} parent=5 // pred_check
      %p307 = pneg %p306
    $region38: #{multi_hgd_forward.2} parent=5 // pred_check_branch
      %309 = sbr.rel (%p307) target = $region40
    $region39: #{multi_hgd_forward.2} parent=5 // pred_region
      // Predicated region
      $region41: #{multi_hgd_forward.2} parent=39 // pred_check
        %p310 = pneg %p37
      $region42: #{multi_hgd_forward.2} parent=39 // pred_check_branch
        %312 = sbr.rel (%p310) target = $region44
      $region43: #{multi_hgd_forward.2} parent=39 // pred_region
        %p313 = scmp.lt.s32.totalorder %s17, 1
        %s314 = scalar_select %p313, %s17, 1
        %s315 = smul.addr %s314, 4
        %s316 = scalar_lea.vmem %s0, %s315
      $region44: #{multi_hgd_forward.2} parent=39 // pred_fallthru
        _
      // Predicated region
      $region45: #{multi_hgd_forward.2} parent=39 // pred_check
        %p317 = pneg %p63
      $region46: #{multi_hgd_forward.2} parent=39 // pred_check_branch
        %319 = sbr.rel (%p317) target = $region48
      $region47: #{multi_hgd_forward.2} parent=39 // pred_region
        %p320 = scmp.lt.s32.totalorder %s17, 1
        %s321 = scalar_select %p320, %s17, 1
        %s322 = smul.addr %s321, 4
        %s323 = scalar_lea.vmem %s1, %s322
      $region48: #{multi_hgd_forward.2} parent=39 // pred_fallthru
        _
      // Predicated region
      $region49: #{multi_hgd_forward.2} parent=39 // pred_check
        %p324 = pneg %p89
      $region50: #{multi_hgd_forward.2} parent=39 // pred_check_branch
        %326 = sbr.rel (%p324) target = $region52
      $region51: #{multi_hgd_forward.2} parent=39 // pred_region
        %p327 = scmp.lt.s32.totalorder %s17, 1
        %s328 = scalar_select %p327, %s17, 1
        %s329 = smul.addr %s328, 4
        %s330 = scalar_lea.vmem %s2, %s329
      $region52: #{multi_hgd_forward.2} parent=39 // pred_fallthru
        _
    $region40: #{multi_hgd_forward.2} parent=5 // pred_fallthru
      _
    %p331 = scmp.le.s32.totalorder 1, %s17
    %p332 = scmp.lt.s32.totalorder %s17, 3
    %p333 = pnand %p331, %p332
    %p334 = pneg %p333
    // Predicated region
    $region53: #{multi_hgd_forward.2} parent=5 // pred_check
      _
    $region54: #{multi_hgd_forward.2} parent=5 // pred_check_branch
      %336 = sbr.rel (%p333) target = $region56
    $region55: #{multi_hgd_forward.2} parent=5 // pred_region
      %s337 = ssub.s32 %s17, 1
      %p338 = scmp.lt.s32.totalorder %s22, 1
      %s339 = scalar_select %p338, %s22, 1
      %s340 = smul.addr %s339, 4
      %s341 = scalar_lea.vmem %s0, %s340
      %p342 = pneg %p43
      %p343 = pneg %p40
      %p344 = scmp.lt.s32.totalorder %s22, 1
      %s345 = scalar_select %p344, %s22, 1
      %s346 = smul.addr %s345, 4
      %s347 = scalar_lea.vmem %s1, %s346
      %p348 = pneg %p69
      %p349 = pneg %p66
      %p350 = scmp.lt.s32.totalorder %s22, 1
      %s351 = scalar_select %p350, %s22, 1
      %s352 = smul.addr %s351, 4
      %s353 = scalar_lea.vmem %s2, %s352
      %p354 = pneg %p95
      %p355 = pneg %p92
      %p356 = pneg %p116
      %p357 = pneg %p113
      %p358 = pneg %p137
      %p359 = pneg %p134
      %p360 = pneg %p158
      %p361 = pneg %p155
      %p362 = pneg %p179
      %p363 = pneg %p176
      %p364 = pneg %p200
      %p365 = pneg %p197
      %p366 = pneg %p221
      %p367 = pneg %p218
      %p368 = pneg %p247
      %p369 = pneg %p244
      %p370 = scmp.lt.s32.totalorder %s22, 1
      %s371 = scalar_select %p370, %s22, 1
      %s372 = smul.addr %s371, 4
      %s373 = scalar_lea.vmem %s9, %s372
      %p374 = pneg %p273
      %p375 = pneg %p270
      %p376 = scmp.lt.s32.totalorder %s22, 1
      %s377 = scalar_select %p376, %s22, 1
      %s378 = smul.addr %s377, 8
      %s379 = scalar_lea.vmem %s10, %s378
      %p380 = scmp.lt.s32.totalorder %s22, 1
      %s381 = scalar_select %p380, %s22, 1
      %s382 = smul.addr %s381, 4
      %s383 = scalar_lea.vmem %s0, %s382
      %p384 = scmp.lt.s32.totalorder %s22, 1
      %s385 = scalar_select %p384, %s22, 1
      %s386 = smul.addr %s385, 4
      %s387 = scalar_lea.vmem %s1, %s386
      %p388 = scmp.lt.s32.totalorder %s22, 1
      %s389 = scalar_select %p388, %s22, 1
      %s390 = smul.addr %s389, 4
      %s391 = scalar_lea.vmem %s2, %s390
      %p392 = scmp.lt.s32.totalorder %s22, 1
      %s393 = scalar_select %p392, %s22, 1
      %s394 = smul.addr %s393, 4
      %s395 = scalar_lea.vmem %s9, %s394
      %p396 = scmp.lt.s32.totalorder %s22, 1
      %s397 = scalar_select %p396, %s22, 1
      %s398 = smul.addr %s397, 8
      %s399 = scalar_lea.vmem %s10, %s398
      %v400 = vld [vmem:[%s3] sm:$0xff]
      %v401 = vld [vmem:[%s3 + $0x8] sm:$0xff]
      %v402 = vld [vmem:[%s3 + $0x10] sm:$0xff]
      %v403 = vld [vmem:[%s383] sm:$0xf]
      %s404 = scalar_lea.vmem %s3, 24
      %v405 = vld [vmem:[%s404] sm:$0xff]
      %v406 = vld [vmem:[%s404 + $0x8] sm:$0xff]
      %v407 = vld [vmem:[%s404 + $0x10] sm:$0xff]
      %v408 = vld [vmem:[%s387] sm:$0xf]
      %vm409 = vcmask 31744
      %v411 = vsel %vm409, %v405, 0
      %v414 = vsel %vm409, %v406, 0
      %v417 = vsel %vm409, %v407, 0
      %vm419 = vcmask 1043456
      %v421 = vsel %vm419, %v408, 0
      %423 = vmatpush.msra.mxu0 0.0
      %424 = vmatpush.msra.mxu0 0.0
      %425 = vmatpush.msra.mxu0 0.0
      %426 = vmatpush.msra.mxu0 0.0
      %427 = vmatpush.msra.mxu0 0.0
      %428 = vmatpush.msra.mxu0 0.0
      %429 = vmatpush.msra.mxu0 0.0
      %430 = vmatpush.msra.mxu0 0.0
      %431 = vmatpush.msra.mxu0 0.0
      %432 = vmatpush.msra.mxu0 0.0
      %433 = vmatpush.msra.mxu0 0.0
      %434 = vmatpush.msra.mxu0 0.0
      %435 = vmatpush.msra.mxu0 0.0
      %436 = vmatpush.msra.mxu0 0.0
      %437 = vmatpush.msra.mxu0 0.0
      %438 = vmatpush.msra.mxu0 %v421
      %439 = vmatmul.f32.gmra.mxu0 %v411
      %v440 = vpop.f32.mrf.mxu0
      %v441 = vadd.f32 0.0, %v440
      %442 = vmatmul.f32.gmra.mxu0 %v414
      %v443 = vpop.f32.mrf.mxu0
      %v444 = vadd.f32 0.0, %v443
      %445 = vmatmul.f32.gmra.mxu0 %v417
      %v446 = vpop.f32.mrf.mxu0
      %v447 = vadd.f32 0.0, %v446
      %448 = vdwg.mxu0
      %v450 = vsel %vm409, %v400, 0
      %v453 = vsel %vm409, %v401, 0
      %v456 = vsel %vm409, %v402, 0
      %v459 = vsel %vm419, %v403, 0
      %461 = vmatpush.msra.mxu0 0.0
      %462 = vmatpush.msra.mxu0 0.0
      %463 = vmatpush.msra.mxu0 0.0
      %464 = vmatpush.msra.mxu0 0.0
      %465 = vmatpush.msra.mxu0 0.0
      %466 = vmatpush.msra.mxu0 0.0
      %467 = vmatpush.msra.mxu0 0.0
      %468 = vmatpush.msra.mxu0 0.0
      %469 = vmatpush.msra.mxu0 0.0
      %470 = vmatpush.msra.mxu0 0.0
      %471 = vmatpush.msra.mxu0 0.0
      %472 = vmatpush.msra.mxu0 0.0
      %473 = vmatpush.msra.mxu0 0.0
      %474 = vmatpush.msra.mxu0 0.0
      %475 = vmatpush.msra.mxu0 0.0
      %476 = vmatpush.msra.mxu0 %v459
      %477 = vmatmul.f32.gmra.mxu0 %v450
      %v478 = vpop.f32.mrf.mxu0
      %v479 = vadd.f32 %v441, %v478
      %480 = vmatmul.f32.gmra.mxu0 %v453
      %v481 = vpop.f32.mrf.mxu0
      %v482 = vadd.f32 %v444, %v481
      %483 = vmatmul.f32.gmra.mxu0 %v456
      %v484 = vpop.f32.mrf.mxu0
      %v485 = vadd.f32 %v447, %v484
      %486 = vdwg.mxu0
      %s487 = scalar_lea.vmem %s3, 48
      %v488 = vld [vmem:[%s487] sm:$0xff]
      %v489 = vld [vmem:[%s487 + $0x8] sm:$0xff]
      %v490 = vld [vmem:[%s487 + $0x10] sm:$0xff]
      %v491 = vld [vmem:[%s391] sm:$0xf]
      %v493 = vsel %vm409, %v488, 0
      %v496 = vsel %vm409, %v489, 0
      %v499 = vsel %vm409, %v490, 0
      %v502 = vsel %vm419, %v491, 0
      %504 = vmatpush.msra.mxu0 0.0
      %505 = vmatpush.msra.mxu0 0.0
      %506 = vmatpush.msra.mxu0 0.0
      %507 = vmatpush.msra.mxu0 0.0
      %508 = vmatpush.msra.mxu0 0.0
      %509 = vmatpush.msra.mxu0 0.0
      %510 = vmatpush.msra.mxu0 0.0
      %511 = vmatpush.msra.mxu0 0.0
      %512 = vmatpush.msra.mxu0 0.0
      %513 = vmatpush.msra.mxu0 0.0
      %514 = vmatpush.msra.mxu0 0.0
      %515 = vmatpush.msra.mxu0 0.0
      %516 = vmatpush.msra.mxu0 0.0
      %517 = vmatpush.msra.mxu0 0.0
      %518 = vmatpush.msra.mxu0 0.0
      %519 = vmatpush.msra.mxu0 %v502
      %520 = vmatmul.f32.gmra.mxu0 %v493
      %v521 = vpop.f32.mrf.mxu0
      %v522 = vadd.f32 0.0, %v521
      %523 = vmatmul.f32.gmra.mxu0 %v496
      %v524 = vpop.f32.mrf.mxu0
      %v525 = vadd.f32 0.0, %v524
      %526 = vmatmul.f32.gmra.mxu0 %v499
      %v527 = vpop.f32.mrf.mxu0
      %v528 = vadd.f32 0.0, %v527
      %529 = vdwg.mxu0
      %v530 = vadd.f32 %v479, %v522
      %v531 = vadd.f32 %v482, %v525
      %v532 = vadd.f32 %v485, %v528
      %v533 = vld [vmem:[%s4] sm:$0xff]
      %v534 = vld [vmem:[%s4 + $0x8] sm:$0xff]
      %v535 = vld [vmem:[%s4 + $0x10] sm:$0xff]
      %537 = vset.pattern.permute.xlu0 0
      %538 = vperm.xlu0 %537, %v533
      %v539 = vpop.permute.xlu0 %538
      %542 = vset.pattern.permute.xlu0 0
      %543 = vperm.xlu0 %542, %v534
      %v544 = vpop.permute.xlu0 %543
      %547 = vset.pattern.permute.xlu0 0
      %548 = vperm.xlu0 %547, %v535
      %v549 = vpop.permute.xlu0 %548
      %v551 = vmul.f32 %v530, %v539
      %v552 = vmul.f32 %v531, %v544
      %v553 = vmul.f32 %v532, %v549
      %v554 = vld [vmem:[%s5] sm:$0xff]
      %v555 = vld [vmem:[%s5 + $0x8] sm:$0xff]
      %v556 = vld [vmem:[%s5 + $0x10] sm:$0xff]
      %558 = vset.pattern.permute.xlu0 0
      %559 = vperm.xlu0 %558, %v554
      %v560 = vpop.permute.xlu0 %559
      %563 = vset.pattern.permute.xlu0 0
      %564 = vperm.xlu0 %563, %v555
      %v565 = vpop.permute.xlu0 %564
      %568 = vset.pattern.permute.xlu0 0
      %569 = vperm.xlu0 %568, %v556
      %v570 = vpop.permute.xlu0 %569
      %v572 = vadd.f32 %v551, %v560
      %v573 = vadd.f32 %v552, %v565
      %v574 = vadd.f32 %v553, %v570
      %v575 = vmax.f32 %v572, 0.0
      %v576 = vmax.f32 %v573, 0.0
      %v577 = vmax.f32 %v574, 0.0
      %v578 = vld [vmem:[%s6] sm:$0xff]
      %v579 = vld [vmem:[%s6 + $0x8] sm:$0xff]
      %vm580 = vcmask 130048
      %v582 = vsel %vm580, %v578, 0
      %v585 = vsel %vm580, %v579, 0
      %587 = vmatpush.msra.mxu0 0.0
      %588 = vmatpush.msra.mxu0 0.0
      %589 = vmatpush.msra.mxu0 0.0
      %590 = vmatpush.msra.mxu0 0.0
      %591 = vmatpush.msra.mxu0 0.0
      %592 = vmatpush.msra.mxu0 0.0
      %593 = vmatpush.msra.mxu0 0.0
      %594 = vmatpush.msra.mxu0 0.0
      %595 = vmatpush.msra.mxu0 0.0
      %596 = vmatpush.msra.mxu0 0.0
      %597 = vmatpush.msra.mxu0 0.0
      %598 = vmatpush.msra.mxu0 0.0
      %599 = vmatpush.msra.mxu0 0.0
      %600 = vmatpush.msra.mxu0 0.0
      %601 = vmatpush.msra.mxu0 %v577
      %602 = vmatpush.msra.mxu0 %v576
      %603 = vmatmul.f32.gmra.mxu0 %v582
      %v604 = vpop.f32.mrf.mxu0
      %v605 = vadd.f32 0.0, %v604
      %606 = vmatmul.f32.gmra.mxu0 %v585
      %v607 = vpop.f32.mrf.mxu0
      %v608 = vadd.f32 0.0, %v607
      %609 = vdwg.mxu0
      %v610 = vld [vmem:[%s7] sm:$0xff]
      %v611 = vld [vmem:[%s7 + $0x8] sm:$0xff]
      %613 = vset.pattern.permute.xlu0 0
      %614 = vperm.xlu0 %613, %v610
      %v615 = vpop.permute.xlu0 %614
      %618 = vset.pattern.permute.xlu0 0
      %619 = vperm.xlu0 %618, %v611
      %v620 = vpop.permute.xlu0 %619
      %v622 = vmul.f32 %v605, %v615
      %v623 = vmul.f32 %v608, %v620
      %v624 = vld [vmem:[%s8] sm:$0xff]
      %v625 = vld [vmem:[%s8 + $0x8] sm:$0xff]
      %627 = vset.pattern.permute.xlu0 0
      %628 = vperm.xlu0 %627, %v624
      %v629 = vpop.permute.xlu0 %628
      %632 = vset.pattern.permute.xlu0 0
      %633 = vperm.xlu0 %632, %v625
      %v634 = vpop.permute.xlu0 %633
      %v636 = vadd.f32 %v622, %v629
      %v637 = vadd.f32 %v623, %v634
      %v638 = vsel %vm580, %v636, -inf
      %639 = vmax.xlane.f32.xlu0 %v638
      %v640 = vpop.xlane.xlu0 %639
      %v641 = vsel %vm580, %v637, -inf
      %642 = vmax.xlane.f32.xlu0 %v641
      %v643 = vpop.xlane.xlu0 %642
      %v644 = vsub.f32 %v636, %v640
      %v645 = vsub.f32 %v637, %v643
      %v646 = vmul.f32 %v644, 1.442695
      %v647 = vpow.pop %v646
      %v648 = vmul.f32 %v645, 1.442695
      %v649 = vpow.pop %v648
      %v650 = vsel %vm580, %v647, 0.0
      %651 = vadd.xlane.f32.xlu0 %v650
      %v652 = vpop.xlane.xlu0 %651
      %v653 = vsel %vm580, %v649, 0.0
      %654 = vadd.xlane.f32.xlu0 %v653
      %v655 = vpop.xlane.xlu0 %654
      %v656 = vrcp.pop %v652
      %v657 = vmul.f32 %v652, %v656
      %v658 = vsub.f32 1.0, %v657
      %v659 = vmul.f32 %v656, %v658
      %v660 = vadd.f32 %v656, %v659
      %vm661 = vweird.f32 %v652
      %vm662 = vweird.f32 %v656
      %vm663 = vmor %vm661, %vm662
      %v664 = vsel %vm663, %v656, %v660
      %v665 = vand.u32 2147483647, %v652
      %vm666 = vcmp.eq.f32.partialorder %v665, 8.507059e+37
      %v667 = vand.u32 %v652, 2147483648
      %v668 = vor.u32 1.1754944e-38, %v667
      %v669 = vsel %vm666, %v668, %v664
      %v670 = vmul.f32 %v647, %v669
      %v671 = vrcp.pop %v655
      %v672 = vmul.f32 %v655, %v671
      %v673 = vsub.f32 1.0, %v672
      %v674 = vmul.f32 %v671, %v673
      %v675 = vadd.f32 %v671, %v674
      %vm676 = vweird.f32 %v655
      %vm677 = vweird.f32 %v671
      %vm678 = vmor %vm676, %vm677
      %v679 = vsel %vm678, %v671, %v675
      %v680 = vand.u32 2147483647, %v655
      %vm681 = vcmp.eq.f32.partialorder %v680, 8.507059e+37
      %v682 = vand.u32 %v655, 2147483648
      %v683 = vor.u32 1.1754944e-38, %v682
      %v684 = vsel %vm681, %v683, %v679
      %v685 = vmul.f32 %v649, %v684
      %v687 = vsel %vm580, %v575, 0
      %v690 = vsel %vm580, %v670, 0
      %v693 = vsel %vm580, %v685, 0
      %695 = vmatpush.xpose.msra.mxu0 0.0
      %696 = vmatpush.xpose.msra.mxu0 0.0
      %697 = vmatpush.xpose.msra.mxu0 0.0
      %698 = vmatpush.xpose.msra.mxu0 0.0
      %699 = vmatpush.xpose.msra.mxu0 0.0
      %700 = vmatpush.xpose.msra.mxu0 0.0
      %701 = vmatpush.xpose.msra.mxu0 0.0
      %702 = vmatpush.xpose.msra.mxu0 0.0
      %703 = vmatpush.xpose.msra.mxu0 0.0
      %704 = vmatpush.xpose.msra.mxu0 0.0
      %705 = vmatpush.xpose.msra.mxu0 0.0
      %706 = vmatpush.xpose.msra.mxu0 0.0
      %707 = vmatpush.xpose.msra.mxu0 0.0
      %708 = vmatpush.xpose.msra.mxu0 0.0
      %709 = vmatpush.xpose.msra.mxu0 %v693
      %710 = vmatpush.xpose.msra.mxu0 %v690
      %711 = vmatmul.f32.gmra.mxu0 %v687
      %v712 = vpop.f32.mrf.mxu0
      %v713 = vadd.f32 0.0, %v712
      %714 = vdwg.mxu0
      %v715 = vmul.f32 %v713, 0.25
      %v716 = vpack.c.bf16 %v715, %v715
      %vm717 = vcmask 125952
      %718 = vst.msk [vmem:[%s395] sm:$0xf] %vm717, %v716
      %v719 = vsel %vm580, %v575, 0.0
      %720 = vadd.xlane.f32.xlu0 %v719
      %v721 = vpop.xlane.xlu0 %720
      %v722 = vrcp.pop 16.0
      %v723 = vmul.f32 16.0, %v722
      %v724 = vsub.f32 1.0, %v723
      %v725 = vmul.f32 %v722, %v724
      %v726 = vadd.f32 %v722, %v725
      %vm727 = vweird.f32 %v722
      %v728 = vsel %vm727, %v722, %v726
      %v729 = vmul.f32 %v721, %v728
      %vm730 = vcmask 7168
      %731 = vst.msk [vmem:[%s399] sm:$0xff] %vm730, %v729
      %p732 = scmp.lt.s32.totalorder %s22, 1
      %s733 = scalar_select %p732, %s22, 1
      %s734 = smul.addr %s733, 4
      %s735 = scalar_lea.vmem %s9, %s734
      %p736 = scmp.lt.s32.totalorder %s22, 1
      %s737 = scalar_select %p736, %s22, 1
      %s738 = smul.addr %s737, 8
      %s739 = scalar_lea.vmem %s10, %s738
      // Predicated region
      $region57: #{multi_hgd_forward.2} parent=55 // pred_check
        %p740 = pneg %p244
      $region58: #{multi_hgd_forward.2} parent=55 // pred_check_branch
        %742 = sbr.rel (%p740) target = $region60
      $region59: #{multi_hgd_forward.2} parent=55 // pred_region
        _
      $region60: #{multi_hgd_forward.2} parent=55 // pred_fallthru
        _
      // Predicated region
      $region61: #{multi_hgd_forward.2} parent=55 // pred_check
        %p743 = pneg %p270
      $region62: #{multi_hgd_forward.2} parent=55 // pred_check_branch
        %745 = sbr.rel (%p743) target = $region64
      $region63: #{multi_hgd_forward.2} parent=55 // pred_region
        _
      $region64: #{multi_hgd_forward.2} parent=55 // pred_fallthru
        _
    $region56: #{multi_hgd_forward.2} parent=5 // pred_fallthru
      _
    %p746 = scmp.le.s32.totalorder 2, %s17
    // Predicated region
    $region65: #{multi_hgd_forward.2} parent=5 // pred_check
      %p747 = pneg %p746
    $region66: #{multi_hgd_forward.2} parent=5 // pred_check_branch
      %749 = sbr.rel (%p747) target = $region68
    $region67: #{multi_hgd_forward.2} parent=5 // pred_region
      %s750 = ssub.s32 %s17, 2
      // Predicated region
      $region69: #{multi_hgd_forward.2} parent=67 // pred_check
        %p751 = pneg %p250
      $region70: #{multi_hgd_forward.2} parent=67 // pred_check_branch
        %753 = sbr.rel (%p751) target = $region72
      $region71: #{multi_hgd_forward.2} parent=67 // pred_region
        %p754 = scmp.lt.s32.totalorder %s23, 1
        %s755 = scalar_select %p754, %s23, 1
        %s756 = smul.addr %s755, 4
        %s757 = scalar_lea.vmem %s9, %s756
      $region72: #{multi_hgd_forward.2} parent=67 // pred_fallthru
        _
      // Predicated region
      $region73: #{multi_hgd_forward.2} parent=67 // pred_check
        %p758 = pneg %p276
      $region74: #{multi_hgd_forward.2} parent=67 // pred_check_branch
        %760 = sbr.rel (%p758) target = $region76
      $region75: #{multi_hgd_forward.2} parent=67 // pred_region
        %p761 = scmp.lt.s32.totalorder %s23, 1
        %s762 = scalar_select %p761, %s23, 1
        %s763 = smul.addr %s762, 8
        %s764 = scalar_lea.vmem %s10, %s763
      $region76: #{multi_hgd_forward.2} parent=67 // pred_fallthru
        _
    $region68: #{multi_hgd_forward.2} parent=5 // pred_fallthru
      _
  $region6: #{multi_hgd_forward.2} parent=0 // loop_footer
    %s21 = sadd.s32 1, %s17
  $region7: #{multi_hgd_forward.2} parent=0 // loop_footer_branch
    %16 = sbr.rel target = $region3
  $region8: #{multi_hgd_forward.2} parent=0 // loop_exit
    _

// kernel: multi_hgd_forward.3
$region0: #{multi_hgd_forward.3}
  #allocation0 [shape = 'u32[]', space=smem, size = 0x4, offset = 0x4, fixed_abs, tag = 'smem constant byte address 0x4 - core index']
  #allocation1 [shape = 'u32[72,128]{1,0:T(1,128)}', space=vmem, size = 0x9000, scoped, tag = 'internal scratch']
  %s0 = inlined_call_operand.vmem [shape: bf16[2,4,256], index: 0, kind: input, shape index: {}]
  %s1 = inlined_call_operand.vmem [shape: bf16[2,4,256], index: 1, kind: input, shape index: {}]
  %s2 = inlined_call_operand.vmem [shape: bf16[2,4,256], index: 2, kind: input, shape index: {}]
  %s3 = inlined_call_operand.vmem [shape: bf16[2,8,16], index: 3, kind: input, shape index: {}]
  %s4 = inlined_call_operand.vmem [shape: f32[2,8,1], index: 4, kind: input, shape index: {}]
  %s5 = inlined_call_operand.vmem [shape: bf16[3,16,4], index: 5, kind: input, shape index: {}]
  %s6 = inlined_call_operand.vmem [shape: f32[16,1], index: 6, kind: input, shape index: {}]
  %s7 = inlined_call_operand.vmem [shape: f32[16,1], index: 7, kind: input, shape index: {}]
  %s8 = inlined_call_operand.vmem [shape: bf16[2,16,8], index: 8, kind: input, shape index: {}]
  %s9 = inlined_call_operand.vmem [shape: f32[2,16,1], index: 9, kind: input, shape index: {}]
  %s10 = inlined_call_operand.vmem [shape: f32[2,16,1], index: 10, kind: input, shape index: {}]
  %s11 = inlined_call_operand.vmem [shape: bf16[2,16,16], index: 11, kind: input, shape index: {}]
  %s12 = inlined_call_operand.vmem [shape: f32[2,16,1], index: 12, kind: input, shape index: {}]
  %s13 = inlined_call_operand.vmem [shape: f32[2,16,1], index: 13, kind: input, shape index: {}]
  %s14 = inlined_call_operand.vmem [shape: bf16[2,8,8], index: 14, kind: input, shape index: {}]
  %s15 = inlined_call_operand.vmem [shape: bf16[2,8,8], index: 15, kind: input, shape index: {}]
  %s16 = inlined_call_operand.vmem [shape: f32[2,8,1], index: 16, kind: input, shape index: {}]
  %s17 = inlined_call_operand.vmem [shape: f32[2,8,1], index: 17, kind: input, shape index: {}]
  %s18 = inlined_call_operand.vmem [shape: f32[2,8,256], index: 18, kind: output, shape index: {0}]
  %s19 = inlined_call_operand.vmem [shape: f32[2,8,256], index: 19, kind: output, shape index: {1}]
  %20 = xla_tuple %s18, %s19
  %s21 = sld [smem:[#allocation0]]
  $region113: #{multi_hgd_forward.3} parent=0
    _
  %s23 = ssub.s32 1, %s21
  %s24 = scalar_select 0, %s23, %s21
  loop: start=0, step=1, limit=4
  $region2: #{multi_hgd_forward.3} parent=0 // loop_pre_header
    _
  $region3: #{multi_hgd_forward.3} parent=0 // loop_header
    %s26 = sphi 0, %s30
    %p27 = scmp.ge.s32.totalorder %s26, 4
    %s33 = sphi 0, %s45
    %s34 = sphi 0, %s41
    %s35 = sphi 0, %s33
    %s36 = sphi 0, %s34
    %s37 = sphi 0, %s35
    %s38 = sphi 0, %s36
    %s50 = sphi 0, %s52
    %s53 = sphi 0, %s50
    %s54 = sphi 0, %s53
    %s70 = sphi 0, %s54
    %s78 = sphi 0, %s80
    %s81 = sphi 0, %s78
    %s82 = sphi 0, %s81
    %s98 = sphi 0, %s82
    %s106 = sphi 0, %s108
    %s109 = sphi 0, %s106
    %s110 = sphi 0, %s109
    %s126 = sphi 0, %s110
    %s132 = sphi 0, %s134
    %s135 = sphi 0, %s132
    %s136 = sphi 0, %s135
    %s152 = sphi 0, %s136
    %s158 = sphi 0, %s160
    %s161 = sphi 0, %s158
    %s162 = sphi 0, %s161
    %s178 = sphi 0, %s162
    %s182 = sphi 0, %s182
    %s184 = sphi 0, %s182
    %s185 = sphi 0, %s184
    %s199 = sphi 0, %s185
    %s203 = sphi 0, %s203
    %s205 = sphi 0, %s203
    %s206 = sphi 0, %s205
    %s220 = sphi 0, %s206
    %s224 = sphi 0, %s224
    %s226 = sphi 0, %s224
    %s227 = sphi 0, %s226
    %s241 = sphi 0, %s227
    %s245 = sphi 0, %s245
    %s247 = sphi 0, %s245
    %s248 = sphi 0, %s247
    %s262 = sphi 0, %s248
    %s266 = sphi 0, %s266
    %s268 = sphi 0, %s266
    %s269 = sphi 0, %s268
    %s283 = sphi 0, %s269
    %s287 = sphi 0, %s287
    %s289 = sphi 0, %s287
    %s290 = sphi 0, %s289
    %s304 = sphi 0, %s290
    %s308 = sphi 0, %s308
    %s310 = sphi 0, %s308
    %s311 = sphi 0, %s310
    %s325 = sphi 0, %s311
    %s329 = sphi 0, %s329
    %s331 = sphi 0, %s329
    %s332 = sphi 0, %s331
    %s346 = sphi 0, %s332
    %s350 = sphi 0, %s350
    %s352 = sphi 0, %s350
    %s353 = sphi 0, %s352
    %s367 = sphi 0, %s353
    %s371 = sphi 0, %s371
    %s373 = sphi 0, %s371
    %s374 = sphi 0, %s373
    %s388 = sphi 0, %s374
    %s392 = sphi 0, %s392
    %s394 = sphi 0, %s392
    %s395 = sphi 0, %s394
    %s409 = sphi 0, %s395
    %s413 = sphi 0, %s413
    %s415 = sphi 0, %s413
    %s416 = sphi 0, %s415
    %s430 = sphi 0, %s416
    %s434 = sphi 0, %s434
    %s436 = sphi 0, %s434
    %s437 = sphi 0, %s436
    %s451 = sphi 0, %s437
    %s459 = sphi 0, %s461
    %s462 = sphi 0, %s459
    %s463 = sphi 0, %s462
    %s479 = sphi 0, %s463
    %s487 = sphi 0, %s489
    %s490 = sphi 0, %s487
    %s491 = sphi 0, %s490
    %s507 = sphi 0, %s491
  $region4: #{multi_hgd_forward.3} parent=0 // loop_header_branch
    %29 = sbr.rel (%p27) target = $region8
  $region5: #{multi_hgd_forward.3} parent=0 // loop_body
    %s31 = ssub.s32 %s26, 1
    %s32 = ssub.s32 %s26, 2
    %s39 = sadd.s32 1, %s34
    %p40 = scmp.ge.s32.totalorder %s39, 1
    %s41 = scalar_select %p40, 0, %s39
    %s42 = sadd.s32 1, %s33
    %s43 = scalar_select %p40, %s42, %s33
    %p44 = scmp.ge.s32.totalorder %s43, 2
    %s45 = scalar_select %p44, 0, %s43
    %s46 = ssub.s32 %s33, %s45
    %s47 = ssub.s32 %s34, %s41
    %s48 = sor.u32 %s46, %s47
    %p49 = scmp.eq.s32.totalorder %s48, 0
    %s51 = sadd.s32 %s50, 1
    %s52 = scalar_select %p49, %s50, %s51
    %p55 = pneg %p49
    %p56 = scmp.eq.s32.totalorder %s26, 1
    %p57 = por %p55, %p56
    %p58 = scmp.ne.s32.totalorder %s50, %s53
    %p59 = scmp.eq.s32.totalorder %s26, 0
    %p60 = por %p58, %p59
    %p61 = scmp.ne.s32.totalorder %s50, %s53
    %p62 = scmp.eq.s32.totalorder %s31, 1
    %p63 = por %p61, %p62
    %p64 = scmp.ne.s32.totalorder %s53, %s54
    %p65 = scmp.eq.s32.totalorder %s31, 0
    %p66 = por %p64, %p65
    %p67 = scmp.ne.s32.totalorder %s53, %s54
    %p68 = scmp.eq.s32.totalorder %s32, 1
    %p69 = por %p67, %p68
    %p71 = scmp.ne.s32.totalorder %s54, %s70
    %p72 = scmp.eq.s32.totalorder %s32, 0
    %p73 = por %p71, %p72
    %s74 = ssub.s32 %s33, %s45
    %s75 = ssub.s32 %s34, %s41
    %s76 = sor.u32 %s74, %s75
    %p77 = scmp.eq.s32.totalorder %s76, 0
    %s79 = sadd.s32 %s78, 1
    %s80 = scalar_select %p77, %s78, %s79
    %p83 = pneg %p77
    %p84 = scmp.eq.s32.totalorder %s26, 1
    %p85 = por %p83, %p84
    %p86 = scmp.ne.s32.totalorder %s78, %s81
    %p87 = scmp.eq.s32.totalorder %s26, 0
    %p88 = por %p86, %p87
    %p89 = scmp.ne.s32.totalorder %s78, %s81
    %p90 = scmp.eq.s32.totalorder %s31, 1
    %p91 = por %p89, %p90
    %p92 = scmp.ne.s32.totalorder %s81, %s82
    %p93 = scmp.eq.s32.totalorder %s31, 0
    %p94 = por %p92, %p93
    %p95 = scmp.ne.s32.totalorder %s81, %s82
    %p96 = scmp.eq.s32.totalorder %s32, 1
    %p97 = por %p95, %p96
    %p99 = scmp.ne.s32.totalorder %s82, %s98
    %p100 = scmp.eq.s32.totalorder %s32, 0
    %p101 = por %p99, %p100
    %s102 = ssub.s32 %s33, %s45
    %s103 = ssub.s32 %s34, %s41
    %s104 = sor.u32 %s102, %s103
    %p105 = scmp.eq.s32.totalorder %s104, 0
    %s107 = sadd.s32 %s106, 1
    %s108 = scalar_select %p105, %s106, %s107
    %p111 = pneg %p105
    %p112 = scmp.eq.s32.totalorder %s26, 1
    %p113 = por %p111, %p112
    %p114 = scmp.ne.s32.totalorder %s106, %s109
    %p115 = scmp.eq.s32.totalorder %s26, 0
    %p116 = por %p114, %p115
    %p117 = scmp.ne.s32.totalorder %s106, %s109
    %p118 = scmp.eq.s32.totalorder %s31, 1
    %p119 = por %p117, %p118
    %p120 = scmp.ne.s32.totalorder %s109, %s110
    %p121 = scmp.eq.s32.totalorder %s31, 0
    %p122 = por %p120, %p121
    %p123 = scmp.ne.s32.totalorder %s109, %s110
    %p124 = scmp.eq.s32.totalorder %s32, 1
    %p125 = por %p123, %p124
    %p127 = scmp.ne.s32.totalorder %s110, %s126
    %p128 = scmp.eq.s32.totalorder %s32, 0
    %p129 = por %p127, %p128
    %s130 = ssub.s32 %s33, %s45
    %p131 = scmp.eq.s32.totalorder %s130, 0
    %s133 = sadd.s32 %s132, 1
    %s134 = scalar_select %p131, %s132, %s133
    %p137 = pneg %p131
    %p138 = scmp.eq.s32.totalorder %s26, 1
    %p139 = por %p137, %p138
    %p140 = scmp.ne.s32.totalorder %s132, %s135
    %p141 = scmp.eq.s32.totalorder %s26, 0
    %p142 = por %p140, %p141
    %p143 = scmp.ne.s32.totalorder %s132, %s135
    %p144 = scmp.eq.s32.totalorder %s31, 1
    %p145 = por %p143, %p144
    %p146 = scmp.ne.s32.totalorder %s135, %s136
    %p147 = scmp.eq.s32.totalorder %s31, 0
    %p148 = por %p146, %p147
    %p149 = scmp.ne.s32.totalorder %s135, %s136
    %p150 = scmp.eq.s32.totalorder %s32, 1
    %p151 = por %p149, %p150
    %p153 = scmp.ne.s32.totalorder %s136, %s152
    %p154 = scmp.eq.s32.totalorder %s32, 0
    %p155 = por %p153, %p154
    %s156 = ssub.s32 %s33, %s45
    %p157 = scmp.eq.s32.totalorder %s156, 0
    %s159 = sadd.s32 %s158, 1
    %s160 = scalar_select %p157, %s158, %s159
    %p163 = pneg %p157
    %p164 = scmp.eq.s32.totalorder %s26, 1
    %p165 = por %p163, %p164
    %p166 = scmp.ne.s32.totalorder %s158, %s161
    %p167 = scmp.eq.s32.totalorder %s26, 0
    %p168 = por %p166, %p167
    %p169 = scmp.ne.s32.totalorder %s158, %s161
    %p170 = scmp.eq.s32.totalorder %s31, 1
    %p171 = por %p169, %p170
    %p172 = scmp.ne.s32.totalorder %s161, %s162
    %p173 = scmp.eq.s32.totalorder %s31, 0
    %p174 = por %p172, %p173
    %p175 = scmp.ne.s32.totalorder %s161, %s162
    %p176 = scmp.eq.s32.totalorder %s32, 1
    %p177 = por %p175, %p176
    %p179 = scmp.ne.s32.totalorder %s162, %s178
    %p180 = scmp.eq.s32.totalorder %s32, 0
    %p181 = por %p179, %p180
    %s183 = sadd.s32 %s182, 1
    %p186 = scmp.eq.s32.totalorder %s26, 1
    %p187 = scmp.ne.s32.totalorder %s182, %s184
    %p188 = scmp.eq.s32.totalorder %s26, 0
    %p189 = por %p187, %p188
    %p190 = scmp.ne.s32.totalorder %s182, %s184
    %p191 = scmp.eq.s32.totalorder %s31, 1
    %p192 = por %p190, %p191
    %p193 = scmp.ne.s32.totalorder %s184, %s185
    %p194 = scmp.eq.s32.totalorder %s31, 0
    %p195 = por %p193, %p194
    %p196 = scmp.ne.s32.totalorder %s184, %s185
    %p197 = scmp.eq.s32.totalorder %s32, 1
    %p198 = por %p196, %p197
    %p200 = scmp.ne.s32.totalorder %s185, %s199
    %p201 = scmp.eq.s32.totalorder %s32, 0
    %p202 = por %p200, %p201
    %s204 = sadd.s32 %s203, 1
    %p207 = scmp.eq.s32.totalorder %s26, 1
    %p208 = scmp.ne.s32.totalorder %s203, %s205
    %p209 = scmp.eq.s32.totalorder %s26, 0
    %p210 = por %p208, %p209
    %p211 = scmp.ne.s32.totalorder %s203, %s205
    %p212 = scmp.eq.s32.totalorder %s31, 1
    %p213 = por %p211, %p212
    %p214 = scmp.ne.s32.totalorder %s205, %s206
    %p215 = scmp.eq.s32.totalorder %s31, 0
    %p216 = por %p214, %p215
    %p217 = scmp.ne.s32.totalorder %s205, %s206
    %p218 = scmp.eq.s32.totalorder %s32, 1
    %p219 = por %p217, %p218
    %p221 = scmp.ne.s32.totalorder %s206, %s220
    %p222 = scmp.eq.s32.totalorder %s32, 0
    %p223 = por %p221, %p222
    %s225 = sadd.s32 %s224, 1
    %p228 = scmp.eq.s32.totalorder %s26, 1
    %p229 = scmp.ne.s32.totalorder %s224, %s226
    %p230 = scmp.eq.s32.totalorder %s26, 0
    %p231 = por %p229, %p230
    %p232 = scmp.ne.s32.totalorder %s224, %s226
    %p233 = scmp.eq.s32.totalorder %s31, 1
    %p234 = por %p232, %p233
    %p235 = scmp.ne.s32.totalorder %s226, %s227
    %p236 = scmp.eq.s32.totalorder %s31, 0
    %p237 = por %p235, %p236
    %p238 = scmp.ne.s32.totalorder %s226, %s227
    %p239 = scmp.eq.s32.totalorder %s32, 1
    %p240 = por %p238, %p239
    %p242 = scmp.ne.s32.totalorder %s227, %s241
    %p243 = scmp.eq.s32.totalorder %s32, 0
    %p244 = por %p242, %p243
    %s246 = sadd.s32 %s245, 1
    %p249 = scmp.eq.s32.totalorder %s26, 1
    %p250 = scmp.ne.s32.totalorder %s245, %s247
    %p251 = scmp.eq.s32.totalorder %s26, 0
    %p252 = por %p250, %p251
    %p253 = scmp.ne.s32.totalorder %s245, %s247
    %p254 = scmp.eq.s32.totalorder %s31, 1
    %p255 = por %p253, %p254
    %p256 = scmp.ne.s32.totalorder %s247, %s248
    %p257 = scmp.eq.s32.totalorder %s31, 0
    %p258 = por %p256, %p257
    %p259 = scmp.ne.s32.totalorder %s247, %s248
    %p260 = scmp.eq.s32.totalorder %s32, 1
    %p261 = por %p259, %p260
    %p263 = scmp.ne.s32.totalorder %s248, %s262
    %p264 = scmp.eq.s32.totalorder %s32, 0
    %p265 = por %p263, %p264
    %s267 = sadd.s32 %s266, 1
    %p270 = scmp.eq.s32.totalorder %s26, 1
    %p271 = scmp.ne.s32.totalorder %s266, %s268
    %p272 = scmp.eq.s32.totalorder %s26, 0
    %p273 = por %p271, %p272
    %p274 = scmp.ne.s32.totalorder %s266, %s268
    %p275 = scmp.eq.s32.totalorder %s31, 1
    %p276 = por %p274, %p275
    %p277 = scmp.ne.s32.totalorder %s268, %s269
    %p278 = scmp.eq.s32.totalorder %s31, 0
    %p279 = por %p277, %p278
    %p280 = scmp.ne.s32.totalorder %s268, %s269
    %p281 = scmp.eq.s32.totalorder %s32, 1
    %p282 = por %p280, %p281
    %p284 = scmp.ne.s32.totalorder %s269, %s283
    %p285 = scmp.eq.s32.totalorder %s32, 0
    %p286 = por %p284, %p285
    %s288 = sadd.s32 %s287, 1
    %p291 = scmp.eq.s32.totalorder %s26, 1
    %p292 = scmp.ne.s32.totalorder %s287, %s289
    %p293 = scmp.eq.s32.totalorder %s26, 0
    %p294 = por %p292, %p293
    %p295 = scmp.ne.s32.totalorder %s287, %s289
    %p296 = scmp.eq.s32.totalorder %s31, 1
    %p297 = por %p295, %p296
    %p298 = scmp.ne.s32.totalorder %s289, %s290
    %p299 = scmp.eq.s32.totalorder %s31, 0
    %p300 = por %p298, %p299
    %p301 = scmp.ne.s32.totalorder %s289, %s290
    %p302 = scmp.eq.s32.totalorder %s32, 1
    %p303 = por %p301, %p302
    %p305 = scmp.ne.s32.totalorder %s290, %s304
    %p306 = scmp.eq.s32.totalorder %s32, 0
    %p307 = por %p305, %p306
    %s309 = sadd.s32 %s308, 1
    %p312 = scmp.eq.s32.totalorder %s26, 1
    %p313 = scmp.ne.s32.totalorder %s308, %s310
    %p314 = scmp.eq.s32.totalorder %s26, 0
    %p315 = por %p313, %p314
    %p316 = scmp.ne.s32.totalorder %s308, %s310
    %p317 = scmp.eq.s32.totalorder %s31, 1
    %p318 = por %p316, %p317
    %p319 = scmp.ne.s32.totalorder %s310, %s311
    %p320 = scmp.eq.s32.totalorder %s31, 0
    %p321 = por %p319, %p320
    %p322 = scmp.ne.s32.totalorder %s310, %s311
    %p323 = scmp.eq.s32.totalorder %s32, 1
    %p324 = por %p322, %p323
    %p326 = scmp.ne.s32.totalorder %s311, %s325
    %p327 = scmp.eq.s32.totalorder %s32, 0
    %p328 = por %p326, %p327
    %s330 = sadd.s32 %s329, 1
    %p333 = scmp.eq.s32.totalorder %s26, 1
    %p334 = scmp.ne.s32.totalorder %s329, %s331
    %p335 = scmp.eq.s32.totalorder %s26, 0
    %p336 = por %p334, %p335
    %p337 = scmp.ne.s32.totalorder %s329, %s331
    %p338 = scmp.eq.s32.totalorder %s31, 1
    %p339 = por %p337, %p338
    %p340 = scmp.ne.s32.totalorder %s331, %s332
    %p341 = scmp.eq.s32.totalorder %s31, 0
    %p342 = por %p340, %p341
    %p343 = scmp.ne.s32.totalorder %s331, %s332
    %p344 = scmp.eq.s32.totalorder %s32, 1
    %p345 = por %p343, %p344
    %p347 = scmp.ne.s32.totalorder %s332, %s346
    %p348 = scmp.eq.s32.totalorder %s32, 0
    %p349 = por %p347, %p348
    %s351 = sadd.s32 %s350, 1
    %p354 = scmp.eq.s32.totalorder %s26, 1
    %p355 = scmp.ne.s32.totalorder %s350, %s352
    %p356 = scmp.eq.s32.totalorder %s26, 0
    %p357 = por %p355, %p356
    %p358 = scmp.ne.s32.totalorder %s350, %s352
    %p359 = scmp.eq.s32.totalorder %s31, 1
    %p360 = por %p358, %p359
    %p361 = scmp.ne.s32.totalorder %s352, %s353
    %p362 = scmp.eq.s32.totalorder %s31, 0
    %p363 = por %p361, %p362
    %p364 = scmp.ne.s32.totalorder %s352, %s353
    %p365 = scmp.eq.s32.totalorder %s32, 1
    %p366 = por %p364, %p365
    %p368 = scmp.ne.s32.totalorder %s353, %s367
    %p369 = scmp.eq.s32.totalorder %s32, 0
    %p370 = por %p368, %p369
    %s372 = sadd.s32 %s371, 1
    %p375 = scmp.eq.s32.totalorder %s26, 1
    %p376 = scmp.ne.s32.totalorder %s371, %s373
    %p377 = scmp.eq.s32.totalorder %s26, 0
    %p378 = por %p376, %p377
    %p379 = scmp.ne.s32.totalorder %s371, %s373
    %p380 = scmp.eq.s32.totalorder %s31, 1
    %p381 = por %p379, %p380
    %p382 = scmp.ne.s32.totalorder %s373, %s374
    %p383 = scmp.eq.s32.totalorder %s31, 0
    %p384 = por %p382, %p383
    %p385 = scmp.ne.s32.totalorder %s373, %s374
    %p386 = scmp.eq.s32.totalorder %s32, 1
    %p387 = por %p385, %p386
    %p389 = scmp.ne.s32.totalorder %s374, %s388
    %p390 = scmp.eq.s32.totalorder %s32, 0
    %p391 = por %p389, %p390
    %s393 = sadd.s32 %s392, 1
    %p396 = scmp.eq.s32.totalorder %s26, 1
    %p397 = scmp.ne.s32.totalorder %s392, %s394
    %p398 = scmp.eq.s32.totalorder %s26, 0
    %p399 = por %p397, %p398
    %p400 = scmp.ne.s32.totalorder %s392, %s394
    %p401 = scmp.eq.s32.totalorder %s31, 1
    %p402 = por %p400, %p401
    %p403 = scmp.ne.s32.totalorder %s394, %s395
    %p404 = scmp.eq.s32.totalorder %s31, 0
    %p405 = por %p403, %p404
    %p406 = scmp.ne.s32.totalorder %s394, %s395
    %p407 = scmp.eq.s32.totalorder %s32, 1
    %p408 = por %p406, %p407
    %p410 = scmp.ne.s32.totalorder %s395, %s409
    %p411 = scmp.eq.s32.totalorder %s32, 0
    %p412 = por %p410, %p411
    %s414 = sadd.s32 %s413, 1
    %p417 = scmp.eq.s32.totalorder %s26, 1
    %p418 = scmp.ne.s32.totalorder %s413, %s415
    %p419 = scmp.eq.s32.totalorder %s26, 0
    %p420 = por %p418, %p419
    %p421 = scmp.ne.s32.totalorder %s413, %s415
    %p422 = scmp.eq.s32.totalorder %s31, 1
    %p423 = por %p421, %p422
    %p424 = scmp.ne.s32.totalorder %s415, %s416
    %p425 = scmp.eq.s32.totalorder %s31, 0
    %p426 = por %p424, %p425
    %p427 = scmp.ne.s32.totalorder %s415, %s416
    %p428 = scmp.eq.s32.totalorder %s32, 1
    %p429 = por %p427, %p428
    %p431 = scmp.ne.s32.totalorder %s416, %s430
    %p432 = scmp.eq.s32.totalorder %s32, 0
    %p433 = por %p431, %p432
    %s435 = sadd.s32 %s434, 1
    %p438 = scmp.eq.s32.totalorder %s26, 1
    %p439 = scmp.ne.s32.totalorder %s434, %s436
    %p440 = scmp.eq.s32.totalorder %s26, 0
    %p441 = por %p439, %p440
    %p442 = scmp.ne.s32.totalorder %s434, %s436
    %p443 = scmp.eq.s32.totalorder %s31, 1
    %p444 = por %p442, %p443
    %p445 = scmp.ne.s32.totalorder %s436, %s437
    %p446 = scmp.eq.s32.totalorder %s31, 0
    %p447 = por %p445, %p446
    %p448 = scmp.ne.s32.totalorder %s436, %s437
    %p449 = scmp.eq.s32.totalorder %s32, 1
    %p450 = por %p448, %p449
    %p452 = scmp.ne.s32.totalorder %s437, %s451
    %p453 = scmp.eq.s32.totalorder %s32, 0
    %p454 = por %p452, %p453
    %s455 = ssub.s32 %s33, %s45
    %s456 = ssub.s32 %s34, %s41
    %s457 = sor.u32 %s455, %s456
    %p458 = scmp.eq.s32.totalorder %s457, 0
    %s460 = sadd.s32 %s459, 1
    %s461 = scalar_select %p458, %s459, %s460
    %p464 = pneg %p458
    %p465 = scmp.eq.s32.totalorder %s26, 1
    %p466 = por %p464, %p465
    %p467 = scmp.ne.s32.totalorder %s459, %s462
    %p468 = scmp.eq.s32.totalorder %s26, 0
    %p469 = por %p467, %p468
    %p470 = scmp.ne.s32.totalorder %s459, %s462
    %p471 = scmp.eq.s32.totalorder %s31, 1
    %p472 = por %p470, %p471
    %p473 = scmp.ne.s32.totalorder %s462, %s463
    %p474 = scmp.eq.s32.totalorder %s31, 0
    %p475 = por %p473, %p474
    %p476 = scmp.ne.s32.totalorder %s462, %s463
    %p477 = scmp.eq.s32.totalorder %s32, 1
    %p478 = por %p476, %p477
    %p480 = scmp.ne.s32.totalorder %s463, %s479
    %p481 = scmp.eq.s32.totalorder %s32, 0
    %p482 = por %p480, %p481
    %s483 = ssub.s32 %s33, %s45
    %s484 = ssub.s32 %s34, %s41
    %s485 = sor.u32 %s483, %s484
    %p486 = scmp.eq.s32.totalorder %s485, 0
    %s488 = sadd.s32 %s487, 1
    %s489 = scalar_select %p486, %s487, %s488
    %p492 = pneg %p486
    %p493 = scmp.eq.s32.totalorder %s26, 1
    %p494 = por %p492, %p493
    %p495 = scmp.ne.s32.totalorder %s487, %s490
    %p496 = scmp.eq.s32.totalorder %s26, 0
    %p497 = por %p495, %p496
    %p498 = scmp.ne.s32.totalorder %s487, %s490
    %p499 = scmp.eq.s32.totalorder %s31, 1
    %p500 = por %p498, %p499
    %p501 = scmp.ne.s32.totalorder %s490, %s491
    %p502 = scmp.eq.s32.totalorder %s31, 0
    %p503 = por %p501, %p502
    %p504 = scmp.ne.s32.totalorder %s490, %s491
    %p505 = scmp.eq.s32.totalorder %s32, 1
    %p506 = por %p504, %p505
    %p508 = scmp.ne.s32.totalorder %s491, %s507
    %p509 = scmp.eq.s32.totalorder %s32, 0
    %p510 = por %p508, %p509
    %p511 = scmp.le.s32.totalorder 1, %s26
    %p512 = scmp.lt.s32.totalorder %s26, 3
    %p513 = pnand %p511, %p512
    %p514 = pneg %p513
    // Predicated region
    $region9: #{multi_hgd_forward.3} parent=5 // pred_check
      _
    $region10: #{multi_hgd_forward.3} parent=5 // pred_check_branch
      %516 = sbr.rel (%p513) target = $region12
    $region11: #{multi_hgd_forward.3} parent=5 // pred_region
      %s517 = ssub.s32 %s26, 1
      // Predicated region
      $region13: #{multi_hgd_forward.3} parent=11 // pred_check
        %p518 = pneg %p195
      $region14: #{multi_hgd_forward.3} parent=11 // pred_check_branch
        %520 = sbr.rel (%p518) target = $region16
      $region15: #{multi_hgd_forward.3} parent=11 // pred_region
        _
      $region16: #{multi_hgd_forward.3} parent=11 // pred_fallthru
        _
      // Predicated region
      $region17: #{multi_hgd_forward.3} parent=11 // pred_check
        %p521 = pneg %p216
      $region18: #{multi_hgd_forward.3} parent=11 // pred_check_branch
        %523 = sbr.rel (%p521) target = $region20
      $region19: #{multi_hgd_forward.3} parent=11 // pred_region
        _
      $region20: #{multi_hgd_forward.3} parent=11 // pred_fallthru
        _
      // Predicated region
      $region21: #{multi_hgd_forward.3} parent=11 // pred_check
        %p524 = pneg %p237
      $region22: #{multi_hgd_forward.3} parent=11 // pred_check_branch
        %526 = sbr.rel (%p524) target = $region24
      $region23: #{multi_hgd_forward.3} parent=11 // pred_region
        _
      $region24: #{multi_hgd_forward.3} parent=11 // pred_fallthru
        _
      // Predicated region
      $region25: #{multi_hgd_forward.3} parent=11 // pred_check
        %p527 = pneg %p258
      $region26: #{multi_hgd_forward.3} parent=11 // pred_check_branch
        %529 = sbr.rel (%p527) target = $region28
      $region27: #{multi_hgd_forward.3} parent=11 // pred_region
        _
      $region28: #{multi_hgd_forward.3} parent=11 // pred_fallthru
        _
      // Predicated region
      $region29: #{multi_hgd_forward.3} parent=11 // pred_check
        %p530 = pneg %p279
      $region30: #{multi_hgd_forward.3} parent=11 // pred_check_branch
        %532 = sbr.rel (%p530) target = $region32
      $region31: #{multi_hgd_forward.3} parent=11 // pred_region
        _
      $region32: #{multi_hgd_forward.3} parent=11 // pred_fallthru
        _
      // Predicated region
      $region33: #{multi_hgd_forward.3} parent=11 // pred_check
        %p533 = pneg %p300
      $region34: #{multi_hgd_forward.3} parent=11 // pred_check_branch
        %535 = sbr.rel (%p533) target = $region36
      $region35: #{multi_hgd_forward.3} parent=11 // pred_region
        _
      $region36: #{multi_hgd_forward.3} parent=11 // pred_fallthru
        _
      // Predicated region
      $region37: #{multi_hgd_forward.3} parent=11 // pred_check
        %p536 = pneg %p321
      $region38: #{multi_hgd_forward.3} parent=11 // pred_check_branch
        %538 = sbr.rel (%p536) target = $region40
      $region39: #{multi_hgd_forward.3} parent=11 // pred_region
        _
      $region40: #{multi_hgd_forward.3} parent=11 // pred_fallthru
        _
      // Predicated region
      $region41: #{multi_hgd_forward.3} parent=11 // pred_check
        %p539 = pneg %p342
      $region42: #{multi_hgd_forward.3} parent=11 // pred_check_branch
        %541 = sbr.rel (%p539) target = $region44
      $region43: #{multi_hgd_forward.3} parent=11 // pred_region
        _
      $region44: #{multi_hgd_forward.3} parent=11 // pred_fallthru
        _
      // Predicated region
      $region45: #{multi_hgd_forward.3} parent=11 // pred_check
        %p542 = pneg %p363
      $region46: #{multi_hgd_forward.3} parent=11 // pred_check_branch
        %544 = sbr.rel (%p542) target = $region48
      $region47: #{multi_hgd_forward.3} parent=11 // pred_region
        _
      $region48: #{multi_hgd_forward.3} parent=11 // pred_fallthru
        _
      // Predicated region
      $region49: #{multi_hgd_forward.3} parent=11 // pred_check
        %p545 = pneg %p384
      $region50: #{multi_hgd_forward.3} parent=11 // pred_check_branch
        %547 = sbr.rel (%p545) target = $region52
      $region51: #{multi_hgd_forward.3} parent=11 // pred_region
        _
      $region52: #{multi_hgd_forward.3} parent=11 // pred_fallthru
        _
      // Predicated region
      $region53: #{multi_hgd_forward.3} parent=11 // pred_check
        %p548 = pneg %p405
      $region54: #{multi_hgd_forward.3} parent=11 // pred_check_branch
        %550 = sbr.rel (%p548) target = $region56
      $region55: #{multi_hgd_forward.3} parent=11 // pred_region
        _
      $region56: #{multi_hgd_forward.3} parent=11 // pred_fallthru
        _
      // Predicated region
      $region57: #{multi_hgd_forward.3} parent=11 // pred_check
        %p551 = pneg %p426
      $region58: #{multi_hgd_forward.3} parent=11 // pred_check_branch
        %553 = sbr.rel (%p551) target = $region60
      $region59: #{multi_hgd_forward.3} parent=11 // pred_region
        _
      $region60: #{multi_hgd_forward.3} parent=11 // pred_fallthru
        _
      // Predicated region
      $region61: #{multi_hgd_forward.3} parent=11 // pred_check
        %p554 = pneg %p447
      $region62: #{multi_hgd_forward.3} parent=11 // pred_check_branch
        %556 = sbr.rel (%p554) target = $region64
      $region63: #{multi_hgd_forward.3} parent=11 // pred_region
        _
      $region64: #{multi_hgd_forward.3} parent=11 // pred_fallthru
        _
    $region12: #{multi_hgd_forward.3} parent=5 // pred_fallthru
      _
    %p557 = scmp.lt.s32.totalorder %s26, 2
    // Predicated region
    $region65: #{multi_hgd_forward.3} parent=5 // pred_check
      %p558 = pneg %p557
    $region66: #{multi_hgd_forward.3} parent=5 // pred_check_branch
      %560 = sbr.rel (%p558) target = $region68
    $region67: #{multi_hgd_forward.3} parent=5 // pred_region
      // Predicated region
      $region69: #{multi_hgd_forward.3} parent=67 // pred_check
        %p561 = pneg %p60
      $region70: #{multi_hgd_forward.3} parent=67 // pred_check_branch
        %563 = sbr.rel (%p561) target = $region72
      $region71: #{multi_hgd_forward.3} parent=67 // pred_region
        %s564 = smul.u32 2, %s34
        %p565 = scmp.lt.s32.totalorder %s33, 1
        %s566 = scalar_select %p565, %s33, 1
        %p567 = scmp.lt.s32.totalorder %s564, 1
        %s568 = scalar_select %p567, %s564, 1
        %s569 = smul.addr %s566, 2
        %s570 = sadd.s32 %s568, %s569
        %s571 = smul.addr %s570, 2
        %s572 = scalar_lea.vmem %s0, %s571
        %s573 = smul.u32 2, %s34
      $region72: #{multi_hgd_forward.3} parent=67 // pred_fallthru
        _
      // Predicated region
      $region73: #{multi_hgd_forward.3} parent=67 // pred_check
        %p574 = pneg %p88
      $region74: #{multi_hgd_forward.3} parent=67 // pred_check_branch
        %576 = sbr.rel (%p574) target = $region76
      $region75: #{multi_hgd_forward.3} parent=67 // pred_region
        %s577 = smul.u32 2, %s34
        %p578 = scmp.lt.s32.totalorder %s33, 1
        %s579 = scalar_select %p578, %s33, 1
        %p580 = scmp.lt.s32.totalorder %s577, 1
        %s581 = scalar_select %p580, %s577, 1
        %s582 = smul.addr %s579, 2
        %s583 = sadd.s32 %s581, %s582
        %s584 = smul.addr %s583, 2
        %s585 = scalar_lea.vmem %s1, %s584
        %s586 = smul.u32 2, %s34
      $region76: #{multi_hgd_forward.3} parent=67 // pred_fallthru
        _
      // Predicated region
      $region77: #{multi_hgd_forward.3} parent=67 // pred_check
        %p587 = pneg %p116
      $region78: #{multi_hgd_forward.3} parent=67 // pred_check_branch
        %589 = sbr.rel (%p587) target = $region80
      $region79: #{multi_hgd_forward.3} parent=67 // pred_region
        %s590 = smul.u32 2, %s34
        %p591 = scmp.lt.s32.totalorder %s33, 1
        %s592 = scalar_select %p591, %s33, 1
        %p593 = scmp.lt.s32.totalorder %s590, 1
        %s594 = scalar_select %p593, %s590, 1
        %s595 = smul.addr %s592, 2
        %s596 = sadd.s32 %s594, %s595
        %s597 = smul.addr %s596, 2
        %s598 = scalar_lea.vmem %s2, %s597
        %s599 = smul.u32 2, %s34
      $region80: #{multi_hgd_forward.3} parent=67 // pred_fallthru
        _
      // Predicated region
      $region81: #{multi_hgd_forward.3} parent=67 // pred_check
        %p600 = pneg %p142
      $region82: #{multi_hgd_forward.3} parent=67 // pred_check_branch
        %602 = sbr.rel (%p600) target = $region84
      $region83: #{multi_hgd_forward.3} parent=67 // pred_region
        %p603 = scmp.lt.s32.totalorder %s33, 1
        %s604 = scalar_select %p603, %s33, 1
        %s605 = smul.addr %s604, 4
        %s606 = scalar_lea.vmem %s3, %s605
      $region84: #{multi_hgd_forward.3} parent=67 // pred_fallthru
        _
      // Predicated region
      $region85: #{multi_hgd_forward.3} parent=67 // pred_check
        %p607 = pneg %p168
      $region86: #{multi_hgd_forward.3} parent=67 // pred_check_branch
        %609 = sbr.rel (%p607) target = $region88
      $region87: #{multi_hgd_forward.3} parent=67 // pred_region
        %p610 = scmp.lt.s32.totalorder %s33, 1
        %s611 = scalar_select %p610, %s33, 1
        %s612 = smul.addr %s611, 8
        %s613 = scalar_lea.vmem %s4, %s612
      $region88: #{multi_hgd_forward.3} parent=67 // pred_fallthru
        _
    $region68: #{multi_hgd_forward.3} parent=5 // pred_fallthru
      _
    %p614 = scmp.le.s32.totalorder 1, %s26
    %p615 = scmp.lt.s32.totalorder %s26, 3
    %p616 = pnand %p614, %p615
    %p617 = pneg %p616
    // Predicated region
    $region89: #{multi_hgd_forward.3} parent=5 // pred_check
      _
    $region90: #{multi_hgd_forward.3} parent=5 // pred_check_branch
      %619 = sbr.rel (%p616) target = $region92
    $region91: #{multi_hgd_forward.3} parent=5 // pred_region
      %s620 = ssub.s32 %s26, 1
      %s621 = smul.u32 2, %s36
      %p622 = scmp.lt.s32.totalorder %s35, 1
      %s623 = scalar_select %p622, %s35, 1
      %p624 = scmp.lt.s32.totalorder %s621, 1
      %s625 = scalar_select %p624, %s621, 1
      %s626 = smul.addr %s623, 2
      %s627 = sadd.s32 %s625, %s626
      %s628 = smul.addr %s627, 2
      %s629 = scalar_lea.vmem %s0, %s628
      %p630 = pneg %p66
      %p631 = pneg %p63
      %s632 = smul.u32 2, %s36
      %p633 = scmp.lt.s32.totalorder %s35, 1
      %s634 = scalar_select %p633, %s35, 1
      %p635 = scmp.lt.s32.totalorder %s632, 1
      %s636 = scalar_select %p635, %s632, 1
      %s637 = smul.addr %s634, 2
      %s638 = sadd.s32 %s636, %s637
      %s639 = smul.addr %s638, 2
      %s640 = scalar_lea.vmem %s1, %s639
      %p641 = pneg %p94
      %p642 = pneg %p91
      %s643 = smul.u32 2, %s36
      %p644 = scmp.lt.s32.totalorder %s35, 1
      %s645 = scalar_select %p644, %s35, 1
      %p646 = scmp.lt.s32.totalorder %s643, 1
      %s647 = scalar_select %p646, %s643, 1
      %s648 = smul.addr %s645, 2
      %s649 = sadd.s32 %s647, %s648
      %s650 = smul.addr %s649, 2
      %s651 = scalar_lea.vmem %s2, %s650
      %p652 = pneg %p122
      %p653 = pneg %p119
      %p654 = scmp.lt.s32.totalorder %s35, 1
      %s655 = scalar_select %p654, %s35, 1
      %s656 = smul.addr %s655, 4
      %s657 = scalar_lea.vmem %s3, %s656
      %p658 = pneg %p148
      %p659 = pneg %p145
      %p660 = scmp.lt.s32.totalorder %s35, 1
      %s661 = scalar_select %p660, %s35, 1
      %s662 = smul.addr %s661, 8
      %s663 = scalar_lea.vmem %s4, %s662
      %p664 = pneg %p174
      %p665 = pneg %p171
      %p666 = pneg %p195
      %p667 = pneg %p192
      %p668 = pneg %p216
      %p669 = pneg %p213
      %p670 = pneg %p237
      %p671 = pneg %p234
      %p672 = pneg %p258
      %p673 = pneg %p255
      %p674 = pneg %p279
      %p675 = pneg %p276
      %p676 = pneg %p300
      %p677 = pneg %p297
      %p678 = pneg %p321
      %p679 = pneg %p318
      %p680 = pneg %p342
      %p681 = pneg %p339
      %p682 = pneg %p363
      %p683 = pneg %p360
      %p684 = pneg %p384
      %p685 = pneg %p381
      %p686 = pneg %p405
      %p687 = pneg %p402
      %p688 = pneg %p426
      %p689 = pneg %p423
      %p690 = pneg %p447
      %p691 = pneg %p444
      %p692 = pneg %p475
      %p693 = pneg %p472
      %s694 = smul.u32 2, %s36
      %p695 = scmp.lt.s32.totalorder %s35, 1
      %s696 = scalar_select %p695, %s35, 1
      %p697 = scmp.lt.s32.totalorder %s694, 1
      %s698 = scalar_select %p697, %s694, 1
      %s699 = smul.addr %s696, 2
      %s700 = sadd.s32 %s698, %s699
      %s701 = smul.addr %s700, 8
      %s702 = scalar_lea.vmem %s18, %s701
      %p703 = pneg %p503
      %p704 = pneg %p500
      %s705 = smul.u32 2, %s36
      %p706 = scmp.lt.s32.totalorder %s35, 1
      %s707 = scalar_select %p706, %s35, 1
      %p708 = scmp.lt.s32.totalorder %s705, 1
      %s709 = scalar_select %p708, %s705, 1
      %s710 = smul.addr %s707, 2
      %s711 = sadd.s32 %s709, %s710
      %s712 = smul.addr %s711, 8
      %s713 = scalar_lea.vmem %s19, %s712
      %s714 = smul.u32 2, %s36
      %p715 = scmp.lt.s32.totalorder %s35, 1
      %s716 = scalar_select %p715, %s35, 1
      %p717 = scmp.lt.s32.totalorder %s714, 1
      %s718 = scalar_select %p717, %s714, 1
      %s719 = smul.addr %s716, 2
      %s720 = sadd.s32 %s718, %s719
      %s721 = smul.addr %s720, 2
      %s722 = scalar_lea.vmem %s0, %s721
      %s723 = smul.u32 2, %s36
      %s724 = smul.u32 2, %s36
      %p725 = scmp.lt.s32.totalorder %s35, 1
      %s726 = scalar_select %p725, %s35, 1
      %p727 = scmp.lt.s32.totalorder %s724, 1
      %s728 = scalar_select %p727, %s724, 1
      %s729 = smul.addr %s726, 2
      %s730 = sadd.s32 %s728, %s729
      %s731 = smul.addr %s730, 2
      %s732 = scalar_lea.vmem %s1, %s731
      %s733 = smul.u32 2, %s36
      %s734 = smul.u32 2, %s36
      %p735 = scmp.lt.s32.totalorder %s35, 1
      %s736 = scalar_select %p735, %s35, 1
      %p737 = scmp.lt.s32.totalorder %s734, 1
      %s738 = scalar_select %p737, %s734, 1
      %s739 = smul.addr %s736, 2
      %s740 = sadd.s32 %s738, %s739
      %s741 = smul.addr %s740, 2
      %s742 = scalar_lea.vmem %s2, %s741
      %s743 = smul.u32 2, %s36
      %p744 = scmp.lt.s32.totalorder %s35, 1
      %s745 = scalar_select %p744, %s35, 1
      %s746 = smul.addr %s745, 4
      %s747 = scalar_lea.vmem %s3, %s746
      %p748 = scmp.lt.s32.totalorder %s35, 1
      %s749 = scalar_select %p748, %s35, 1
      %s750 = smul.addr %s749, 8
      %s751 = scalar_lea.vmem %s4, %s750
      %s752 = smul.u32 2, %s36
      %p753 = scmp.lt.s32.totalorder %s35, 1
      %s754 = scalar_select %p753, %s35, 1
      %p755 = scmp.lt.s32.totalorder %s752, 1
      %s756 = scalar_select %p755, %s752, 1
      %s757 = smul.addr %s754, 2
      %s758 = sadd.s32 %s756, %s757
      %s759 = smul.addr %s758, 8
      %s760 = scalar_lea.vmem %s18, %s759
      %s761 = smul.u32 2, %s36
      %s762 = smul.u32 2, %s36
      %p763 = scmp.lt.s32.totalorder %s35, 1
      %s764 = scalar_select %p763, %s35, 1
      %p765 = scmp.lt.s32.totalorder %s762, 1
      %s766 = scalar_select %p765, %s762, 1
      %s767 = smul.addr %s764, 2
      %s768 = sadd.s32 %s766, %s767
      %s769 = smul.addr %s768, 8
      %s770 = scalar_lea.vmem %s19, %s769
      %s771 = smul.u32 2, %s36
      %v773 = vld [vmem:[%s5] sm:$0xf]
      %v774 = vld [vmem:[%s5 + $0x4] sm:$0xf]
      %v775 = vld [vmem:[%s722] sm:$0xf]
      %s776 = scalar_lea.vmem %s5, 8
      %v777 = vld [vmem:[%s776] sm:$0xf]
      %v778 = vld [vmem:[%s776 + $0x4] sm:$0xf]
      %v779 = vld [vmem:[%s732] sm:$0xf]
      %v782 = vunpack.c.l.b16 %v777
      %v783 = vunpack.c.l.b16 %v778
      %v784 = vpack.c.b16 %v783, %v782
      %786 = vst [vmem:[#allocation1] ss:$4 sm:$0xff] %v779
      %v787 = vld.sshfl [vmem:[#allocation1] sm:$0xff pattern:$0x73625140]
      %v788 = vld.sshfl [vmem:[#allocation1 + $0x8] sm:$0xff pattern:$0x73625140]
      %vm789 = vcmask 31744
      %v791 = vsel %vm789, %v784, 0
      %vm793 = vcmask 1041408
      %v794 = vsel %vm793, %v787, 0
      %v796 = vsel %vm793, %v788, 0
      %798 = vmatpush.bf16.msra.mxu0 0
      %799 = vmatpush.bf16.msra.mxu0 0
      %800 = vmatpush.bf16.msra.mxu0 0
      %801 = vmatpush.bf16.msra.mxu0 0
      %802 = vmatpush.bf16.msra.mxu0 0
      %803 = vmatpush.bf16.msra.mxu0 0
      %804 = vmatpush.bf16.msra.mxu0 0
      %805 = vmatpush.bf16.msra.mxu0 %v794
      %806 = vmatmul.bf16.gmra.mxu0 %v791
      %v807 = vpop.f32.mrf.mxu0
      %v808 = vadd.f32 0.0, %v807
      %v809 = vpop.f32.mrf.mxu0
      %v810 = vadd.f32 0.0, %v809
      %811 = vdwg.mxu0
      %812 = vmatpush.bf16.msra.mxu0 0
      %813 = vmatpush.bf16.msra.mxu0 0
      %814 = vmatpush.bf16.msra.mxu0 0
      %815 = vmatpush.bf16.msra.mxu0 0
      %816 = vmatpush.bf16.msra.mxu0 0
      %817 = vmatpush.bf16.msra.mxu0 0
      %818 = vmatpush.bf16.msra.mxu0 0
      %819 = vmatpush.bf16.msra.mxu0 %v796
      %820 = vmatmul.bf16.gmra.mxu0 %v791
      %v821 = vpop.f32.mrf.mxu0
      %v822 = vadd.f32 0.0, %v821
      %v823 = vpop.f32.mrf.mxu0
      %v824 = vadd.f32 0.0, %v823
      %825 = vdwg.mxu0
      %v828 = vunpack.c.l.b16 %v773
      %v829 = vunpack.c.l.b16 %v774
      %v830 = vpack.c.b16 %v829, %v828
      %832 = vst [vmem:[#allocation1] ss:$4 sm:$0xff] %v775
      %v833 = vld.sshfl [vmem:[#allocation1] sm:$0xff pattern:$0x73625140]
      %v834 = vld.sshfl [vmem:[#allocation1 + $0x8] sm:$0xff pattern:$0x73625140]
      %v836 = vsel %vm789, %v830, 0
      %v838 = vsel %vm793, %v833, 0
      %v840 = vsel %vm793, %v834, 0
      %842 = vmatpush.bf16.msra.mxu0 0
      %843 = vmatpush.bf16.msra.mxu0 0
      %844 = vmatpush.bf16.msra.mxu0 0
      %845 = vmatpush.bf16.msra.mxu0 0
      %846 = vmatpush.bf16.msra.mxu0 0
      %847 = vmatpush.bf16.msra.mxu0 0
      %848 = vmatpush.bf16.msra.mxu0 0
      %849 = vmatpush.bf16.msra.mxu0 %v838
      %850 = vmatmul.bf16.gmra.mxu0 %v836
      %v851 = vpop.f32.mrf.mxu0
      %v852 = vadd.f32 %v808, %v851
      %v853 = vpop.f32.mrf.mxu0
      %v854 = vadd.f32 %v810, %v853
      %855 = vdwg.mxu0
      %856 = vmatpush.bf16.msra.mxu0 0
      %857 = vmatpush.bf16.msra.mxu0 0
      %858 = vmatpush.bf16.msra.mxu0 0
      %859 = vmatpush.bf16.msra.mxu0 0
      %860 = vmatpush.bf16.msra.mxu0 0
      %861 = vmatpush.bf16.msra.mxu0 0
      %862 = vmatpush.bf16.msra.mxu0 0
      %863 = vmatpush.bf16.msra.mxu0 %v840
      %864 = vmatmul.bf16.gmra.mxu0 %v836
      %v865 = vpop.f32.mrf.mxu0
      %v866 = vadd.f32 %v822, %v865
      %v867 = vpop.f32.mrf.mxu0
      %v868 = vadd.f32 %v824, %v867
      %869 = vdwg.mxu0
      %s870 = scalar_lea.vmem %s5, 16
      %v871 = vld [vmem:[%s870] sm:$0xf]
      %v872 = vld [vmem:[%s870 + $0x4] sm:$0xf]
      %v873 = vld [vmem:[%s742] sm:$0xf]
      %v876 = vunpack.c.l.b16 %v871
      %v877 = vunpack.c.l.b16 %v872
      %v878 = vpack.c.b16 %v877, %v876
      %880 = vst [vmem:[#allocation1] ss:$4 sm:$0xff] %v873
      %v881 = vld.sshfl [vmem:[#allocation1] sm:$0xff pattern:$0x73625140]
      %v882 = vld.sshfl [vmem:[#allocation1 + $0x8] sm:$0xff pattern:$0x73625140]
      %v884 = vsel %vm789, %v878, 0
      %v886 = vsel %vm793, %v881, 0
      %v888 = vsel %vm793, %v882, 0
      %890 = vmatpush.bf16.msra.mxu0 0
      %891 = vmatpush.bf16.msra.mxu0 0
      %892 = vmatpush.bf16.msra.mxu0 0
      %893 = vmatpush.bf16.msra.mxu0 0
      %894 = vmatpush.bf16.msra.mxu0 0
      %895 = vmatpush.bf16.msra.mxu0 0
      %896 = vmatpush.bf16.msra.mxu0 0
      %897 = vmatpush.bf16.msra.mxu0 %v886
      %898 = vmatmul.bf16.gmra.mxu0 %v884
      %v899 = vpop.f32.mrf.mxu0
      %v900 = vadd.f32 0.0, %v899
      %v901 = vpop.f32.mrf.mxu0
      %v902 = vadd.f32 0.0, %v901
      %903 = vdwg.mxu0
      %904 = vmatpush.bf16.msra.mxu0 0
      %905 = vmatpush.bf16.msra.mxu0 0
      %906 = vmatpush.bf16.msra.mxu0 0
      %907 = vmatpush.bf16.msra.mxu0 0
      %908 = vmatpush.bf16.msra.mxu0 0
      %909 = vmatpush.bf16.msra.mxu0 0
      %910 = vmatpush.bf16.msra.mxu0 0
      %911 = vmatpush.bf16.msra.mxu0 %v888
      %912 = vmatmul.bf16.gmra.mxu0 %v884
      %v913 = vpop.f32.mrf.mxu0
      %v914 = vadd.f32 0.0, %v913
      %v915 = vpop.f32.mrf.mxu0
      %v916 = vadd.f32 0.0, %v915
      %917 = vdwg.mxu0
      %v918 = vadd.f32 %v852, %v900
      %v919 = vadd.f32 %v866, %v914
      %v920 = vadd.f32 %v854, %v902
      %v921 = vadd.f32 %v868, %v916
      %v922 = vld [vmem:[%s6] sm:$0xff]
      %v923 = vld [vmem:[%s6 + $0x8] sm:$0xff]
      %925 = vset.pattern.permute.xlu0 0
      %926 = vperm.xlu0 %925, %v922
      %v927 = vpop.permute.xlu0 %926
      %930 = vset.pattern.permute.xlu0 0
      %931 = vperm.xlu0 %930, %v923
      %v932 = vpop.permute.xlu0 %931
      %v934 = vmul.f32 %v918, %v927
      %v935 = vmul.f32 %v919, %v927
      %v936 = vmul.f32 %v920, %v932
      %v937 = vmul.f32 %v921, %v932
      %v938 = vld [vmem:[%s7] sm:$0xff]
      %v939 = vld [vmem:[%s7 + $0x8] sm:$0xff]
      %941 = vset.pattern.permute.xlu0 0
      %942 = vperm.xlu0 %941, %v938
      %v943 = vpop.permute.xlu0 %942
      %946 = vset.pattern.permute.xlu0 0
      %947 = vperm.xlu0 %946, %v939
      %v948 = vpop.permute.xlu0 %947
      %v950 = vadd.f32 %v934, %v943
      %v951 = vadd.f32 %v935, %v943
      %v952 = vadd.f32 %v936, %v948
      %v953 = vadd.f32 %v937, %v948
      %v954 = vmax.f32 %v950, 0.0
      %v955 = vmax.f32 %v951, 0.0
      %v956 = vmax.f32 %v952, 0.0
      %v957 = vmax.f32 %v953, 0.0
      %v958 = vld [vmem:[%s751] sm:$0xff]
      %v959 = vld [vmem:[%s747] sm:$0xf]
      %961 = vset.pattern.permute.xlu0 0
      %962 = vperm.xlu0 %961, %v958
      %v963 = vpop.permute.xlu0 %962
      %v965 = vadd.f32 %v954, %v963
      %v966 = vadd.f32 %v955, %v963
      %v967 = vpack.c.bf16 %v965, %v965
      %v968 = vpack.c.bf16 %v966, %v966
      %v969 = vld [vmem:[%s8] sm:$0xf]
      %v970 = vld [vmem:[%s8 + $0x4] sm:$0xf]
      %v973 = vunpack.c.l.b16 %v969
      %v974 = vunpack.c.l.b16 %v970
      %v975 = vpack.c.b16 %v974, %v973
      %vm976 = vcmask 64512
      %v978 = vsel %vm976, %v975, 0
      %vm980 = vcmask 1043456
      %v982 = vsel %vm980, %v967, 0
      %v985 = vsel %vm980, %v968, 0
      %987 = vmatpush.bf16.msra.mxu0 0
      %988 = vmatpush.bf16.msra.mxu0 0
      %989 = vmatpush.bf16.msra.mxu0 0
      %990 = vmatpush.bf16.msra.mxu0 0
      %991 = vmatpush.bf16.msra.mxu0 0
      %992 = vmatpush.bf16.msra.mxu0 0
      %993 = vmatpush.bf16.msra.mxu0 0
      %994 = vmatpush.bf16.msra.mxu0 %v982
      %995 = vmatmul.bf16.gmra.mxu0 %v978
      %v996 = vpop.f32.mrf.mxu0
      %v997 = vadd.f32 0.0, %v996
      %v998 = vpop.f32.mrf.mxu0
      %v999 = vadd.f32 0.0, %v998
      %1000 = vdwg.mxu0
      %1001 = vmatpush.bf16.msra.mxu0 0
      %1002 = vmatpush.bf16.msra.mxu0 0
      %1003 = vmatpush.bf16.msra.mxu0 0
      %1004 = vmatpush.bf16.msra.mxu0 0
      %1005 = vmatpush.bf16.msra.mxu0 0
      %1006 = vmatpush.bf16.msra.mxu0 0
      %1007 = vmatpush.bf16.msra.mxu0 0
      %1008 = vmatpush.bf16.msra.mxu0 %v985
      %1009 = vmatmul.bf16.gmra.mxu0 %v978
      %v1010 = vpop.f32.mrf.mxu0
      %v1011 = vadd.f32 0.0, %v1010
      %v1012 = vpop.f32.mrf.mxu0
      %v1013 = vadd.f32 0.0, %v1012
      %1014 = vdwg.mxu0
      %v1015 = vld [vmem:[%s9] sm:$0xff]
      %v1016 = vld [vmem:[%s9 + $0x8] sm:$0xff]
      %1018 = vset.pattern.permute.xlu0 0
      %1019 = vperm.xlu0 %1018, %v1015
      %v1020 = vpop.permute.xlu0 %1019
      %1023 = vset.pattern.permute.xlu0 0
      %1024 = vperm.xlu0 %1023, %v1016
      %v1025 = vpop.permute.xlu0 %1024
      %v1027 = vmul.f32 %v997, %v1020
      %v1028 = vmul.f32 %v1011, %v1020
      %v1029 = vmul.f32 %v999, %v1025
      %v1030 = vmul.f32 %v1013, %v1025
      %v1031 = vld [vmem:[%s10] sm:$0xff]
      %v1032 = vld [vmem:[%s10 + $0x8] sm:$0xff]
      %1034 = vset.pattern.permute.xlu0 0
      %1035 = vperm.xlu0 %1034, %v1031
      %v1036 = vpop.permute.xlu0 %1035
      %1039 = vset.pattern.permute.xlu0 0
      %1040 = vperm.xlu0 %1039, %v1032
      %v1041 = vpop.permute.xlu0 %1040
      %v1043 = vadd.f32 %v1027, %v1036
      %v1044 = vadd.f32 %v1028, %v1036
      %v1045 = vadd.f32 %v1029, %v1041
      %v1046 = vadd.f32 %v1030, %v1041
      %v1047 = vmax.f32 %v1043, 0.0
      %v1048 = vmax.f32 %v1044, 0.0
      %v1049 = vmax.f32 %v1045, 0.0
      %v1050 = vmax.f32 %v1046, 0.0
      %v1051 = vpack.c.bf16 %v1049, %v1047
      %v1052 = vpack.c.bf16 %v1050, %v1048
      %v1053 = vld [vmem:[%s11] sm:$0xf]
      %v1054 = vld [vmem:[%s11 + $0x4] sm:$0xf]
      %v1057 = vunpack.c.l.b16 %v1053
      %v1058 = vunpack.c.l.b16 %v1054
      %v1059 = vpack.c.b16 %v1058, %v1057
      %vm1060 = vcmask 130048
      %v1062 = vsel %vm1060, %v1059, 0
      %1064 = vmatpush.bf16.msra.mxu0 0
      %1065 = vmatpush.bf16.msra.mxu0 0
      %1066 = vmatpush.bf16.msra.mxu0 0
      %1067 = vmatpush.bf16.msra.mxu0 0
      %1068 = vmatpush.bf16.msra.mxu0 0
      %1069 = vmatpush.bf16.msra.mxu0 0
      %1070 = vmatpush.bf16.msra.mxu0 0
      %1071 = vmatpush.bf16.msra.mxu0 %v1051
      %1072 = vmatmul.bf16.gmra.mxu0 %v1062
      %v1073 = vpop.f32.mrf.mxu0
      %v1074 = vadd.f32 0.0, %v1073
      %v1075 = vpop.f32.mrf.mxu0
      %v1076 = vadd.f32 0.0, %v1075
      %1077 = vdwg.mxu0
      %1078 = vmatpush.bf16.msra.mxu0 0
      %1079 = vmatpush.bf16.msra.mxu0 0
      %1080 = vmatpush.bf16.msra.mxu0 0
      %1081 = vmatpush.bf16.msra.mxu0 0
      %1082 = vmatpush.bf16.msra.mxu0 0
      %1083 = vmatpush.bf16.msra.mxu0 0
      %1084 = vmatpush.bf16.msra.mxu0 0
      %1085 = vmatpush.bf16.msra.mxu0 %v1052
      %1086 = vmatmul.bf16.gmra.mxu0 %v1062
      %v1087 = vpop.f32.mrf.mxu0
      %v1088 = vadd.f32 0.0, %v1087
      %v1089 = vpop.f32.mrf.mxu0
      %v1090 = vadd.f32 0.0, %v1089
      %1091 = vdwg.mxu0
      %v1092 = vld [vmem:[%s12] sm:$0xff]
      %v1093 = vld [vmem:[%s12 + $0x8] sm:$0xff]
      %1095 = vset.pattern.permute.xlu0 0
      %1096 = vperm.xlu0 %1095, %v1092
      %v1097 = vpop.permute.xlu0 %1096
      %1100 = vset.pattern.permute.xlu0 0
      %1101 = vperm.xlu0 %1100, %v1093
      %v1102 = vpop.permute.xlu0 %1101
      %v1104 = vmul.f32 %v1074, %v1097
      %v1105 = vmul.f32 %v1088, %v1097
      %v1106 = vmul.f32 %v1076, %v1102
      %v1107 = vmul.f32 %v1090, %v1102
      %v1108 = vld [vmem:[%s13] sm:$0xff]
      %v1109 = vld [vmem:[%s13 + $0x8] sm:$0xff]
      %1111 = vset.pattern.permute.xlu0 0
      %1112 = vperm.xlu0 %1111, %v1108
      %v1113 = vpop.permute.xlu0 %1112
      %1116 = vset.pattern.permute.xlu0 0
      %1117 = vperm.xlu0 %1116, %v1109
      %v1118 = vpop.permute.xlu0 %1117
      %v1120 = vadd.f32 %v1104, %v1113
      %v1121 = vadd.f32 %v1105, %v1113
      %v1122 = vadd.f32 %v1106, %v1118
      %v1123 = vadd.f32 %v1107, %v1118
      %v1124 = vmax.f32 %v1120, 0.0
      %v1125 = vmax.f32 %v1121, 0.0
      %v1126 = vmax.f32 %v1122, 0.0
      %v1127 = vmax.f32 %v1123, 0.0
      %v1128 = vpack.c.bf16 %v1126, %v1124
      %v1129 = vpack.c.bf16 %v1127, %v1125
      %v1131 = vsel %vm1060, %v959, 0
      %1133 = vmatpush.bf16.msra.mxu0 0
      %1134 = vmatpush.bf16.msra.mxu0 0
      %1135 = vmatpush.bf16.msra.mxu0 0
      %1136 = vmatpush.bf16.msra.mxu0 0
      %1137 = vmatpush.bf16.msra.mxu0 0
      %1138 = vmatpush.bf16.msra.mxu0 0
      %1139 = vmatpush.bf16.msra.mxu0 0
      %1140 = vmatpush.bf16.msra.mxu0 %v1128
      %1141 = vmatmul.bf16.gmra.mxu0 %v1131
      %v1142 = vpop.f32.mrf.mxu0
      %v1143 = vadd.f32 0.0, %v1142
      %v1144 = vpop.f32.mrf.mxu0
      %1145 = vdwg.mxu0
      %1146 = vmatpush.bf16.msra.mxu0 0
      %1147 = vmatpush.bf16.msra.mxu0 0
      %1148 = vmatpush.bf16.msra.mxu0 0
      %1149 = vmatpush.bf16.msra.mxu0 0
      %1150 = vmatpush.bf16.msra.mxu0 0
      %1151 = vmatpush.bf16.msra.mxu0 0
      %1152 = vmatpush.bf16.msra.mxu0 0
      %1153 = vmatpush.bf16.msra.mxu0 %v1129
      %1154 = vmatmul.bf16.gmra.mxu0 %v1131
      %v1155 = vpop.f32.mrf.mxu0
      %v1156 = vadd.f32 0.0, %v1155
      %v1157 = vpop.f32.mrf.mxu0
      %1158 = vdwg.mxu0
      %v1159 = vld [vmem:[%s14] sm:$0xf]
      %v1160 = vpack.c.bf16 %v1143, %v1143
      %v1161 = vpack.c.bf16 %v1156, %v1156
      %v1162 = vld [vmem:[%s15] sm:$0xf]
      %v1163 = vpack.c.bf16 %v954, %v954
      %v1164 = vpack.c.bf16 %v955, %v955
      %v1166 = vsel %vm976, %v1162, 0
      %v1169 = vsel %vm980, %v1163, 0
      %v1172 = vsel %vm980, %v1164, 0
      %1174 = vmatpush.bf16.msra.mxu0 0
      %1175 = vmatpush.bf16.msra.mxu0 0
      %1176 = vmatpush.bf16.msra.mxu0 0
      %1177 = vmatpush.bf16.msra.mxu0 0
      %1178 = vmatpush.bf16.msra.mxu0 0
      %1179 = vmatpush.bf16.msra.mxu0 0
      %1180 = vmatpush.bf16.msra.mxu0 0
      %1181 = vmatpush.bf16.msra.mxu0 %v1169
      %1182 = vmatmul.bf16.gmra.mxu0 %v1166
      %v1183 = vpop.f32.mrf.mxu0
      %v1184 = vadd.f32 0.0, %v1183
      %v1185 = vpop.f32.mrf.mxu0
      %1186 = vdwg.mxu0
      %1187 = vmatpush.bf16.msra.mxu0 0
      %1188 = vmatpush.bf16.msra.mxu0 0
      %1189 = vmatpush.bf16.msra.mxu0 0
      %1190 = vmatpush.bf16.msra.mxu0 0
      %1191 = vmatpush.bf16.msra.mxu0 0
      %1192 = vmatpush.bf16.msra.mxu0 0
      %1193 = vmatpush.bf16.msra.mxu0 0
      %1194 = vmatpush.bf16.msra.mxu0 %v1172
      %1195 = vmatmul.bf16.gmra.mxu0 %v1166
      %v1196 = vpop.f32.mrf.mxu0
      %v1197 = vadd.f32 0.0, %v1196
      %v1198 = vpop.f32.mrf.mxu0
      %1199 = vdwg.mxu0
      %v1201 = vsel %vm976, %v1159, 0
      %v1204 = vsel %vm980, %v1160, 0
      %v1207 = vsel %vm980, %v1161, 0
      %1209 = vmatpush.bf16.msra.mxu0 0
      %1210 = vmatpush.bf16.msra.mxu0 0
      %1211 = vmatpush.bf16.msra.mxu0 0
      %1212 = vmatpush.bf16.msra.mxu0 0
      %1213 = vmatpush.bf16.msra.mxu0 0
      %1214 = vmatpush.bf16.msra.mxu0 0
      %1215 = vmatpush.bf16.msra.mxu0 0
      %1216 = vmatpush.bf16.msra.mxu0 %v1204
      %1217 = vmatmul.bf16.gmra.mxu0 %v1201
      %v1218 = vpop.f32.mrf.mxu0
      %v1219 = vadd.f32 %v1184, %v1218
      %v1220 = vpop.f32.mrf.mxu0
      %1221 = vdwg.mxu0
      %1222 = vmatpush.bf16.msra.mxu0 0
      %1223 = vmatpush.bf16.msra.mxu0 0
      %1224 = vmatpush.bf16.msra.mxu0 0
      %1225 = vmatpush.bf16.msra.mxu0 0
      %1226 = vmatpush.bf16.msra.mxu0 0
      %1227 = vmatpush.bf16.msra.mxu0 0
      %1228 = vmatpush.bf16.msra.mxu0 0
      %1229 = vmatpush.bf16.msra.mxu0 %v1207
      %1230 = vmatmul.bf16.gmra.mxu0 %v1201
      %v1231 = vpop.f32.mrf.mxu0
      %v1232 = vadd.f32 %v1197, %v1231
      %v1233 = vpop.f32.mrf.mxu0
      %1234 = vdwg.mxu0
      %v1235 = vld [vmem:[%s16] sm:$0xff]
      %1237 = vset.pattern.permute.xlu0 0
      %1238 = vperm.xlu0 %1237, %v1235
      %v1239 = vpop.permute.xlu0 %1238
      %v1241 = vmul.f32 %v1219, %v1239
      %v1242 = vmul.f32 %v1232, %v1239
      %v1243 = vld [vmem:[%s17] sm:$0xff]
      %1245 = vset.pattern.permute.xlu0 0
      %1246 = vperm.xlu0 %1245, %v1243
      %v1247 = vpop.permute.xlu0 %1246
      %v1249 = vadd.f32 %v1241, %v1247
      %v1250 = vadd.f32 %v1242, %v1247
      %v1251 = vmax.f32 %v1249, 0.0
      %v1252 = vmax.f32 %v1250, 0.0
      %1253 = vst [vmem:[%s760] sm:$0xff] %v1251
      %1254 = vst [vmem:[%s760 + $0x8] sm:$0xff] %v1252
      %v1255 = vadd.f32 %v956, %v963
      %v1256 = vadd.f32 %v957, %v963
      %v1257 = vpack.c.bf16 %v1255, %v1255
      %v1258 = vpack.c.bf16 %v1256, %v1256
      %s1259 = scalar_lea.vmem %s8, 8
      %v1260 = vld [vmem:[%s1259] sm:$0xf]
      %v1261 = vld [vmem:[%s1259 + $0x4] sm:$0xf]
      %v1264 = vunpack.c.l.b16 %v1260
      %v1265 = vunpack.c.l.b16 %v1261
      %v1266 = vpack.c.b16 %v1265, %v1264
      %v1268 = vsel %vm976, %v1266, 0
      %v1271 = vsel %vm980, %v1257, 0
      %v1274 = vsel %vm980, %v1258, 0
      %1276 = vmatpush.bf16.msra.mxu0 0
      %1277 = vmatpush.bf16.msra.mxu0 0
      %1278 = vmatpush.bf16.msra.mxu0 0
      %1279 = vmatpush.bf16.msra.mxu0 0
      %1280 = vmatpush.bf16.msra.mxu0 0
      %1281 = vmatpush.bf16.msra.mxu0 0
      %1282 = vmatpush.bf16.msra.mxu0 0
      %1283 = vmatpush.bf16.msra.mxu0 %v1271
      %1284 = vmatmul.bf16.gmra.mxu0 %v1268
      %v1285 = vpop.f32.mrf.mxu0
      %v1286 = vadd.f32 0.0, %v1285
      %v1287 = vpop.f32.mrf.mxu0
      %v1288 = vadd.f32 0.0, %v1287
      %1289 = vdwg.mxu0
      %1290 = vmatpush.bf16.msra.mxu0 0
      %1291 = vmatpush.bf16.msra.mxu0 0
      %1292 = vmatpush.bf16.msra.mxu0 0
      %1293 = vmatpush.bf16.msra.mxu0 0
      %1294 = vmatpush.bf16.msra.mxu0 0
      %1295 = vmatpush.bf16.msra.mxu0 0
      %1296 = vmatpush.bf16.msra.mxu0 0
      %1297 = vmatpush.bf16.msra.mxu0 %v1274
      %1298 = vmatmul.bf16.gmra.mxu0 %v1268
      %v1299 = vpop.f32.mrf.mxu0
      %v1300 = vadd.f32 0.0, %v1299
      %v1301 = vpop.f32.mrf.mxu0
      %v1302 = vadd.f32 0.0, %v1301
      %1303 = vdwg.mxu0
      %s1304 = scalar_lea.vmem %s9, 16
      %v1305 = vld [vmem:[%s1304] sm:$0xff]
      %v1306 = vld [vmem:[%s1304 + $0x8] sm:$0xff]
      %1308 = vset.pattern.permute.xlu0 0
      %1309 = vperm.xlu0 %1308, %v1305
      %v1310 = vpop.permute.xlu0 %1309
      %1313 = vset.pattern.permute.xlu0 0
      %1314 = vperm.xlu0 %1313, %v1306
      %v1315 = vpop.permute.xlu0 %1314
      %v1317 = vmul.f32 %v1286, %v1310
      %v1318 = vmul.f32 %v1300, %v1310
      %v1319 = vmul.f32 %v1288, %v1315
      %v1320 = vmul.f32 %v1302, %v1315
      %s1321 = scalar_lea.vmem %s10, 16
      %v1322 = vld [vmem:[%s1321] sm:$0xff]
      %v1323 = vld [vmem:[%s1321 + $0x8] sm:$0xff]
      %1325 = vset.pattern.permute.xlu0 0
      %1326 = vperm.xlu0 %1325, %v1322
      %v1327 = vpop.permute.xlu0 %1326
      %1330 = vset.pattern.permute.xlu0 0
      %1331 = vperm.xlu0 %1330, %v1323
      %v1332 = vpop.permute.xlu0 %1331
      %v1334 = vadd.f32 %v1317, %v1327
      %v1335 = vadd.f32 %v1318, %v1327
      %v1336 = vadd.f32 %v1319, %v1332
      %v1337 = vadd.f32 %v1320, %v1332
      %v1338 = vmax.f32 %v1334, 0.0
      %v1339 = vmax.f32 %v1335, 0.0
      %v1340 = vmax.f32 %v1336, 0.0
      %v1341 = vmax.f32 %v1337, 0.0
      %v1342 = vpack.c.bf16 %v1340, %v1338
      %v1343 = vpack.c.bf16 %v1341, %v1339
      %s1344 = scalar_lea.vmem %s11, 8
      %v1345 = vld [vmem:[%s1344] sm:$0xf]
      %v1346 = vld [vmem:[%s1344 + $0x4] sm:$0xf]
      %v1349 = vunpack.c.l.b16 %v1345
      %v1350 = vunpack.c.l.b16 %v1346
      %v1351 = vpack.c.b16 %v1350, %v1349
      %v1353 = vsel %vm1060, %v1351, 0
      %1355 = vmatpush.bf16.msra.mxu0 0
      %1356 = vmatpush.bf16.msra.mxu0 0
      %1357 = vmatpush.bf16.msra.mxu0 0
      %1358 = vmatpush.bf16.msra.mxu0 0
      %1359 = vmatpush.bf16.msra.mxu0 0
      %1360 = vmatpush.bf16.msra.mxu0 0
      %1361 = vmatpush.bf16.msra.mxu0 0
      %1362 = vmatpush.bf16.msra.mxu0 %v1342
      %1363 = vmatmul.bf16.gmra.mxu0 %v1353
      %v1364 = vpop.f32.mrf.mxu0
      %v1365 = vadd.f32 0.0, %v1364
      %v1366 = vpop.f32.mrf.mxu0
      %v1367 = vadd.f32 0.0, %v1366
      %1368 = vdwg.mxu0
      %1369 = vmatpush.bf16.msra.mxu0 0
      %1370 = vmatpush.bf16.msra.mxu0 0
      %1371 = vmatpush.bf16.msra.mxu0 0
      %1372 = vmatpush.bf16.msra.mxu0 0
      %1373 = vmatpush.bf16.msra.mxu0 0
      %1374 = vmatpush.bf16.msra.mxu0 0
      %1375 = vmatpush.bf16.msra.mxu0 0
      %1376 = vmatpush.bf16.msra.mxu0 %v1343
      %1377 = vmatmul.bf16.gmra.mxu0 %v1353
      %v1378 = vpop.f32.mrf.mxu0
      %v1379 = vadd.f32 0.0, %v1378
      %v1380 = vpop.f32.mrf.mxu0
      %v1381 = vadd.f32 0.0, %v1380
      %1382 = vdwg.mxu0
      %s1383 = scalar_lea.vmem %s12, 16
      %v1384 = vld [vmem:[%s1383] sm:$0xff]
      %v1385 = vld [vmem:[%s1383 + $0x8] sm:$0xff]
      %1387 = vset.pattern.permute.xlu0 0
      %1388 = vperm.xlu0 %1387, %v1384
      %v1389 = vpop.permute.xlu0 %1388
      %1392 = vset.pattern.permute.xlu0 0
      %1393 = vperm.xlu0 %1392, %v1385
      %v1394 = vpop.permute.xlu0 %1393
      %v1396 = vmul.f32 %v1365, %v1389
      %v1397 = vmul.f32 %v1379, %v1389
      %v1398 = vmul.f32 %v1367, %v1394
      %v1399 = vmul.f32 %v1381, %v1394
      %s1400 = scalar_lea.vmem %s13, 16
      %v1401 = vld [vmem:[%s1400] sm:$0xff]
      %v1402 = vld [vmem:[%s1400 + $0x8] sm:$0xff]
      %1404 = vset.pattern.permute.xlu0 0
      %1405 = vperm.xlu0 %1404, %v1401
      %v1406 = vpop.permute.xlu0 %1405
      %1409 = vset.pattern.permute.xlu0 0
      %1410 = vperm.xlu0 %1409, %v1402
      %v1411 = vpop.permute.xlu0 %1410
      %v1413 = vadd.f32 %v1396, %v1406
      %v1414 = vadd.f32 %v1397, %v1406
      %v1415 = vadd.f32 %v1398, %v1411
      %v1416 = vadd.f32 %v1399, %v1411
      %v1417 = vmax.f32 %v1413, 0.0
      %v1418 = vmax.f32 %v1414, 0.0
      %v1419 = vmax.f32 %v1415, 0.0
      %v1420 = vmax.f32 %v1416, 0.0
      %v1421 = vpack.c.bf16 %v1419, %v1417
      %v1422 = vpack.c.bf16 %v1420, %v1418
      %1423 = vmatpush.bf16.msra.mxu0 0
      %1424 = vmatpush.bf16.msra.mxu0 0
      %1425 = vmatpush.bf16.msra.mxu0 0
      %1426 = vmatpush.bf16.msra.mxu0 0
      %1427 = vmatpush.bf16.msra.mxu0 0
      %1428 = vmatpush.bf16.msra.mxu0 0
      %1429 = vmatpush.bf16.msra.mxu0 0
      %1430 = vmatpush.bf16.msra.mxu0 %v1421
      %1431 = vmatmul.bf16.gmra.mxu0 %v1131
      %v1432 = vpop.f32.mrf.mxu0
      %v1433 = vadd.f32 0.0, %v1432
      %v1434 = vpop.f32.mrf.mxu0
      %1435 = vdwg.mxu0
      %1436 = vmatpush.bf16.msra.mxu0 0
      %1437 = vmatpush.bf16.msra.mxu0 0
      %1438 = vmatpush.bf16.msra.mxu0 0
      %1439 = vmatpush.bf16.msra.mxu0 0
      %1440 = vmatpush.bf16.msra.mxu0 0
      %1441 = vmatpush.bf16.msra.mxu0 0
      %1442 = vmatpush.bf16.msra.mxu0 0
      %1443 = vmatpush.bf16.msra.mxu0 %v1422
      %1444 = vmatmul.bf16.gmra.mxu0 %v1131
      %v1445 = vpop.f32.mrf.mxu0
      %v1446 = vadd.f32 0.0, %v1445
      %v1447 = vpop.f32.mrf.mxu0
      %1448 = vdwg.mxu0
      %s1449 = scalar_lea.vmem %s14, 4
      %v1450 = vld [vmem:[%s1449] sm:$0xf]
      %v1451 = vpack.c.bf16 %v1433, %v1433
      %v1452 = vpack.c.bf16 %v1446, %v1446
      %s1453 = scalar_lea.vmem %s15, 4
      %v1454 = vld [vmem:[%s1453] sm:$0xf]
      %v1455 = vpack.c.bf16 %v956, %v956
      %v1456 = vpack.c.bf16 %v957, %v957
      %v1458 = vsel %vm976, %v1454, 0
      %v1461 = vsel %vm980, %v1455, 0
      %v1464 = vsel %vm980, %v1456, 0
      %1466 = vmatpush.bf16.msra.mxu0 0
      %1467 = vmatpush.bf16.msra.mxu0 0
      %1468 = vmatpush.bf16.msra.mxu0 0
      %1469 = vmatpush.bf16.msra.mxu0 0
      %1470 = vmatpush.bf16.msra.mxu0 0
      %1471 = vmatpush.bf16.msra.mxu0 0
      %1472 = vmatpush.bf16.msra.mxu0 0
      %1473 = vmatpush.bf16.msra.mxu0 %v1461
      %1474 = vmatmul.bf16.gmra.mxu0 %v1458
      %v1475 = vpop.f32.mrf.mxu0
      %v1476 = vadd.f32 0.0, %v1475
      %v1477 = vpop.f32.mrf.mxu0
      %1478 = vdwg.mxu0
      %1479 = vmatpush.bf16.msra.mxu0 0
      %1480 = vmatpush.bf16.msra.mxu0 0
      %1481 = vmatpush.bf16.msra.mxu0 0
      %1482 = vmatpush.bf16.msra.mxu0 0
      %1483 = vmatpush.bf16.msra.mxu0 0
      %1484 = vmatpush.bf16.msra.mxu0 0
      %1485 = vmatpush.bf16.msra.mxu0 0
      %1486 = vmatpush.bf16.msra.mxu0 %v1464
      %1487 = vmatmul.bf16.gmra.mxu0 %v1458
      %v1488 = vpop.f32.mrf.mxu0
      %v1489 = vadd.f32 0.0, %v1488
      %v1490 = vpop.f32.mrf.mxu0
      %1491 = vdwg.mxu0
      %v1493 = vsel %vm976, %v1450, 0
      %v1496 = vsel %vm980, %v1451, 0
      %v1499 = vsel %vm980, %v1452, 0
      %1501 = vmatpush.bf16.msra.mxu0 0
      %1502 = vmatpush.bf16.msra.mxu0 0
      %1503 = vmatpush.bf16.msra.mxu0 0
      %1504 = vmatpush.bf16.msra.mxu0 0
      %1505 = vmatpush.bf16.msra.mxu0 0
      %1506 = vmatpush.bf16.msra.mxu0 0
      %1507 = vmatpush.bf16.msra.mxu0 0
      %1508 = vmatpush.bf16.msra.mxu0 %v1496
      %1509 = vmatmul.bf16.gmra.mxu0 %v1493
      %v1510 = vpop.f32.mrf.mxu0
      %v1511 = vadd.f32 %v1476, %v1510
      %v1512 = vpop.f32.mrf.mxu0
      %1513 = vdwg.mxu0
      %1514 = vmatpush.bf16.msra.mxu0 0
      %1515 = vmatpush.bf16.msra.mxu0 0
      %1516 = vmatpush.bf16.msra.mxu0 0
      %1517 = vmatpush.bf16.msra.mxu0 0
      %1518 = vmatpush.bf16.msra.mxu0 0
      %1519 = vmatpush.bf16.msra.mxu0 0
      %1520 = vmatpush.bf16.msra.mxu0 0
      %1521 = vmatpush.bf16.msra.mxu0 %v1499
      %1522 = vmatmul.bf16.gmra.mxu0 %v1493
      %v1523 = vpop.f32.mrf.mxu0
      %v1524 = vadd.f32 %v1489, %v1523
      %v1525 = vpop.f32.mrf.mxu0
      %1526 = vdwg.mxu0
      %s1527 = scalar_lea.vmem %s16, 8
      %v1528 = vld [vmem:[%s1527] sm:$0xff]
      %1530 = vset.pattern.permute.xlu0 0
      %1531 = vperm.xlu0 %1530, %v1528
      %v1532 = vpop.permute.xlu0 %1531
      %v1534 = vmul.f32 %v1511, %v1532
      %v1535 = vmul.f32 %v1524, %v1532
      %s1536 = scalar_lea.vmem %s17, 8
      %v1537 = vld [vmem:[%s1536] sm:$0xff]
      %1539 = vset.pattern.permute.xlu0 0
      %1540 = vperm.xlu0 %1539, %v1537
      %v1541 = vpop.permute.xlu0 %1540
      %v1543 = vadd.f32 %v1534, %v1541
      %v1544 = vadd.f32 %v1535, %v1541
      %v1545 = vmax.f32 %v1543, 0.0
      %v1546 = vmax.f32 %v1544, 0.0
      %1547 = vst [vmem:[%s770] sm:$0xff] %v1545
      %1548 = vst [vmem:[%s770 + $0x8] sm:$0xff] %v1546
      %s1549 = smul.u32 2, %s36
      %p1550 = scmp.lt.s32.totalorder %s35, 1
      %s1551 = scalar_select %p1550, %s35, 1
      %p1552 = scmp.lt.s32.totalorder %s1549, 1
      %s1553 = scalar_select %p1552, %s1549, 1
      %s1554 = smul.addr %s1551, 2
      %s1555 = sadd.s32 %s1553, %s1554
      %s1556 = smul.addr %s1555, 8
      %s1557 = scalar_lea.vmem %s18, %s1556
      %s1558 = smul.u32 2, %s36
      %p1559 = scmp.lt.s32.totalorder %s35, 1
      %s1560 = scalar_select %p1559, %s35, 1
      %p1561 = scmp.lt.s32.totalorder %s1558, 1
      %s1562 = scalar_select %p1561, %s1558, 1
      %s1563 = smul.addr %s1560, 2
      %s1564 = sadd.s32 %s1562, %s1563
      %s1565 = smul.addr %s1564, 8
      %s1566 = scalar_lea.vmem %s19, %s1565
      // Predicated region
      $region93: #{multi_hgd_forward.3} parent=91 // pred_check
        %p1567 = pneg %p472
      $region94: #{multi_hgd_forward.3} parent=91 // pred_check_branch
        %1569 = sbr.rel (%p1567) target = $region96
      $region95: #{multi_hgd_forward.3} parent=91 // pred_region
        %s1570 = smul.u32 2, %s36
      $region96: #{multi_hgd_forward.3} parent=91 // pred_fallthru
        _
      // Predicated region
      $region97: #{multi_hgd_forward.3} parent=91 // pred_check
        %p1571 = pneg %p500
      $region98: #{multi_hgd_forward.3} parent=91 // pred_check_branch
        %1573 = sbr.rel (%p1571) target = $region100
      $region99: #{multi_hgd_forward.3} parent=91 // pred_region
        %s1574 = smul.u32 2, %s36
      $region100: #{multi_hgd_forward.3} parent=91 // pred_fallthru
        _
    $region92: #{multi_hgd_forward.3} parent=5 // pred_fallthru
      _
    %p1575 = scmp.le.s32.totalorder 2, %s26
    // Predicated region
    $region101: #{multi_hgd_forward.3} parent=5 // pred_check
      %p1576 = pneg %p1575
    $region102: #{multi_hgd_forward.3} parent=5 // pred_check_branch
      %1578 = sbr.rel (%p1576) target = $region104
    $region103: #{multi_hgd_forward.3} parent=5 // pred_region
      %s1579 = ssub.s32 %s26, 2
      // Predicated region
      $region105: #{multi_hgd_forward.3} parent=103 // pred_check
        %p1580 = pneg %p478
      $region106: #{multi_hgd_forward.3} parent=103 // pred_check_branch
        %1582 = sbr.rel (%p1580) target = $region108
      $region107: #{multi_hgd_forward.3} parent=103 // pred_region
        %s1583 = smul.u32 2, %s38
        %p1584 = scmp.lt.s32.totalorder %s37, 1
        %s1585 = scalar_select %p1584, %s37, 1
        %p1586 = scmp.lt.s32.totalorder %s1583, 1
        %s1587 = scalar_select %p1586, %s1583, 1
        %s1588 = smul.addr %s1585, 2
        %s1589 = sadd.s32 %s1587, %s1588
        %s1590 = smul.addr %s1589, 8
        %s1591 = scalar_lea.vmem %s18, %s1590
      $region108: #{multi_hgd_forward.3} parent=103 // pred_fallthru
        _
      // Predicated region
      $region109: #{multi_hgd_forward.3} parent=103 // pred_check
        %p1592 = pneg %p506
      $region110: #{multi_hgd_forward.3} parent=103 // pred_check_branch
        %1594 = sbr.rel (%p1592) target = $region112
      $region111: #{multi_hgd_forward.3} parent=103 // pred_region
        %s1595 = smul.u32 2, %s38
        %p1596 = scmp.lt.s32.totalorder %s37, 1
        %s1597 = scalar_select %p1596, %s37, 1
        %p1598 = scmp.lt.s32.totalorder %s1595, 1
        %s1599 = scalar_select %p1598, %s1595, 1
        %s1600 = smul.addr %s1597, 2
        %s1601 = sadd.s32 %s1599, %s1600
        %s1602 = smul.addr %s1601, 8
        %s1603 = scalar_lea.vmem %s19, %s1602
      $region112: #{multi_hgd_forward.3} parent=103 // pred_fallthru
        _
    $region104: #{multi_hgd_forward.3} parent=5 // pred_fallthru
      _
  $region6: #{multi_hgd_forward.3} parent=0 // loop_footer
    %s30 = sadd.s32 1, %s26
  $region7: #{multi_hgd_forward.3} parent=0 // loop_footer_branch
    %25 = sbr.rel target = $region3
  $region8: #{multi_hgd_forward.3} parent=0 // loop_exit
    _

</llo_original>
